<compile_context>
chip_gen: v7x
topology: tpu7x:2x2x1
jax: 0.10.0
libtpu: 0.0.40
codegen_flags: <defaults>
</compile_context>

<pallas_src>
import functools

import jax
import jax.numpy as jnp
from jax.experimental import pallas as pl
from jax.experimental.pallas import tpu as pltpu


def ffn_kernel(x_ref, w1_ref, b1_ref, w2_ref, b2_ref, o_ref):
    # x_ref: (tm, C) bf16, w1_ref: (C, H) bf16, b1_ref: (1, H) f32,
    # w2_ref: (H, C) bf16, b2_ref: (1, C) f32, o_ref: (tm, C) f32.
    h = jnp.dot(x_ref[...], w1_ref[...], preferred_element_type=jnp.float32)
    h = jnp.maximum(h + b1_ref[...], 0.0)                      # bias + ReLU in f32
    y = jnp.dot(h.astype(w2_ref.dtype), w2_ref[...],
                preferred_element_type=jnp.float32)
    o_ref[...] = (y + b2_ref[...]).astype(o_ref.dtype)         # dropout = identity (eval)


@functools.partial(jax.jit, static_argnames=("tm",))
def feed_forward(x, w1, b1, w2, b2, *, tm=512):
    """x: (B, T, C).  w1: (C, 4C), b1: (4C,), w2: (4C, C), b2: (C,).

    tm is the row-tile size (tokens per grid step).  512 targets v6e/v7x;
    256 is enough to saturate the v5e MXU.
    """
    B, T, C = x.shape
    H = w1.shape[1]
    M = B * T

    # --- row-tile size: big enough to keep the MXU busy, sublane aligned ---
    SUB = 16  # bf16 sublane packing (also a multiple of f32's 8)
    tm_eff = min(tm, M)
    if tm_eff < M:
        tm_eff = max(SUB, (tm_eff // SUB) * SUB)
    # v7x has 2 TensorCores per chip: avoid collapsing the grid to length 1
    # for small batches so the row axis can shard across both cores.
    if pl.cdiv(M, tm_eff) == 1 and M >= 2 * SUB:
        tm_eff = max(SUB, -(-(M // 2) // SUB) * SUB)
    grid = (pl.cdiv(M, tm_eff),)

    # --- bf16 compute inputs (f32 accumulation inside the kernel) ---
    compute_dtype = jnp.bfloat16
    x2 = x.reshape(M, C).astype(compute_dtype)
    w1c = w1.astype(compute_dtype)
    w2c = w2.astype(compute_dtype)
    b1_2 = b1.reshape(1, H).astype(jnp.float32)
    b2_2 = b2.reshape(1, C).astype(jnp.float32)
    cbytes = jnp.dtype(compute_dtype).itemsize

    # --- VMEM budget: single-buffered weights + double-buffered row tiles ---
    weight_bytes = 2 * C * H * cbytes                   # W1 + W2 (one buffer each)
    io_bytes = 2 * tm_eff * C * (cbytes + 4)            # x (bf16) + out (f32), 2 buffers
    inter_bytes = tm_eff * H * 4                        # f32 hidden activation
    vmem_needed = weight_bytes + io_bytes + inter_bytes + (H + C) * 4
    # Headroom, but stay safely below v7x's 64 MiB physical VMEM.
    vmem_limit = min(int(1.5 * vmem_needed) + (24 << 20), 56 << 20)

    cost = pl.CostEstimate(
        flops=4 * M * C * H,                            # two matmuls, 2*M*C*H flops each
        transcendentals=0,
        bytes_accessed=(M * C * cbytes                  # x in (bf16)
                        + 2 * C * H * cbytes            # W1 + W2
                        + (H + C) * 4                   # biases
                        + M * C * 4),                   # out (f32)
    )

    resident = dict(pipeline_mode=pl.Buffered(1))       # constant index_map -> 1 buffer
    out = pl.pallas_call(
        ffn_kernel,
        out_shape=jax.ShapeDtypeStruct((M, C), x.dtype),
        grid_spec=pltpu.PrefetchScalarGridSpec(
            num_scalar_prefetch=0,
            grid=grid,
            in_specs=[
                pl.BlockSpec((tm_eff, C), lambda i: (i, 0)),          # x row tile
                pl.BlockSpec((C, H), lambda i: (0, 0), **resident),   # W1 (resident)
                pl.BlockSpec((1, H), lambda i: (0, 0), **resident),   # b1
                pl.BlockSpec((H, C), lambda i: (0, 0), **resident),   # W2 (resident)
                pl.BlockSpec((1, C), lambda i: (0, 0), **resident),   # b2
            ],
            out_specs=pl.BlockSpec((tm_eff, C), lambda i: (i, 0)),
        ),
        compiler_params=pltpu.CompilerParams(
            dimension_semantics=("parallel",),
            vmem_limit_bytes=vmem_limit,
        ),
        cost_estimate=cost,
    )(x2, w1c, b1_2, w2c, b2_2)
    return out.reshape(B, T, C)


def feed_forward_ref(x, w1, b1, w2, b2):
    """Reference with the same bf16-input / f32-accumulate numerics as the kernel."""
    B, T, C = x.shape
    xb = x.reshape(-1, C).astype(jnp.bfloat16)
    h = jnp.dot(xb, w1.astype(jnp.bfloat16), preferred_element_type=jnp.float32) + b1
    h = jnp.maximum(h, 0.0)
    y = jnp.dot(h.astype(jnp.bfloat16), w2.astype(jnp.bfloat16),
                preferred_element_type=jnp.float32) + b2
    return y.reshape(B, T, C).astype(x.dtype)


if __name__ == "__main__":
    # Small shapes consistent with the module: n_embd=384, hidden=4*n_embd=1536.
    B, T, C = 4, 8, 384
    H = 4 * C

    key = jax.random.PRNGKey(0)
    kx, k1, k2, k3, k4 = jax.random.split(key, 5)

    x = jax.random.normal(kx, (B, T, C), dtype=jnp.float32)
    # Deterministic "PyTorch-like" init (uniform in +-1/sqrt(fan_in)),
    # stored already transposed to (in, out) layout for the kernel.
    w1 = jax.random.uniform(k1, (C, H), jnp.float32, -1.0, 1.0) / jnp.sqrt(C)
    b1 = jax.random.uniform(k2, (H,), jnp.float32, -1.0, 1.0) / jnp.sqrt(C)
    w2 = jax.random.uniform(k3, (H, C), jnp.float32, -1.0, 1.0) / jnp.sqrt(H)
    b2 = jax.random.uniform(k4, (C,), jnp.float32, -1.0, 1.0) / jnp.sqrt(H)

    out = feed_forward(x, w1, b1, w2, b2)
    jax.block_until_ready(out)

    ref = feed_forward_ref(x, w1, b1, w2, b2)
    assert out.shape == (B, T, C)
    assert jnp.allclose(out, ref, atol=2e-2, rtol=2e-2), float(jnp.max(jnp.abs(out - ref)))

    print("KERNEL_OK")
</pallas_src>

<mosaic_0001>
module attributes {stable_mosaic.version = 11 : i64} {
  func.func @ffn_kernel(%arg0: i32, %arg1: memref<16x384xbf16, #tpu.memory_space<vmem>>, %arg2: memref<384x1536xbf16, #tpu.memory_space<vmem>>, %arg3: memref<1x1536xf32, #tpu.memory_space<vmem>>, %arg4: memref<1536x384xbf16, #tpu.memory_space<vmem>>, %arg5: memref<1x384xf32, #tpu.memory_space<vmem>>, %arg6: memref<16x384xf32, #tpu.memory_space<vmem>>) attributes {dimension_semantics = [#tpu.dimension_semantics<parallel>], iteration_bounds = array<i64: 2>, scalar_prefetch = 0 : i64, scratch_operands = 0 : i64, tpu.core_type = #tpu.core_type<tc>, window_params = [{transform_indices = @transform_0, window_bounds = array<i64: 16, 384>}, {pipeline_mode = #tpu.pipeline_mode<synchronous>, transform_indices = @transform_1, window_bounds = array<i64: 384, 1536>}, {pipeline_mode = #tpu.pipeline_mode<synchronous>, transform_indices = @transform_2, window_bounds = array<i64: 1, 1536>}, {pipeline_mode = #tpu.pipeline_mode<synchronous>, transform_indices = @transform_3, window_bounds = array<i64: 1536, 384>}, {pipeline_mode = #tpu.pipeline_mode<synchronous>, transform_indices = @transform_4, window_bounds = array<i64: 1, 384>}, {transform_indices = @transform_5, window_bounds = array<i64: 16, 384>}]} {
    %c0 = arith.constant 0 : index
    %c0_0 = arith.constant 0 : index
    %0 = vector.load %arg1[%c0, %c0_0] : memref<16x384xbf16, #tpu.memory_space<vmem>>, vector<16x384xbf16>
    %c0_1 = arith.constant 0 : index
    %c0_2 = arith.constant 0 : index
    %1 = vector.load %arg2[%c0_1, %c0_2] : memref<384x1536xbf16, #tpu.memory_space<vmem>>, vector<384x1536xbf16>
    %cst = arith.constant dense<0.000000e+00> : vector<16x1536xf32>
    %2 = tpu.matmul %0, %1, %cst {dimension_numbers = #tpu.dot_dimension_numbers<[1], [0], [0], [1], [0, 0, 1, 1], [], []>} : vector<16x384xbf16>, vector<384x1536xbf16>, vector<16x1536xf32> -> vector<16x1536xf32>
    %c0_3 = arith.constant 0 : index
    %c0_4 = arith.constant 0 : index
    %3 = vector.load %arg3[%c0_3, %c0_4] : memref<1x1536xf32, #tpu.memory_space<vmem>>, vector<1x1536xf32>
    %4 = vector.broadcast %3 : vector<1x1536xf32> to vector<16x1536xf32>
    %5 = arith.addf %2, %4 : vector<16x1536xf32>
    %cst_5 = arith.constant 0.000000e+00 : f32
    %6 = vector.broadcast %cst_5 : f32 to vector<16x1536xf32>
    %7 = arith.maximumf %5, %6 : vector<16x1536xf32>
    %8 = arith.truncf %7 : vector<16x1536xf32> to vector<16x1536xbf16>
    %c0_6 = arith.constant 0 : index
    %c0_7 = arith.constant 0 : index
    %9 = vector.load %arg4[%c0_6, %c0_7] : memref<1536x384xbf16, #tpu.memory_space<vmem>>, vector<1536x384xbf16>
    %cst_8 = arith.constant dense<0.000000e+00> : vector<16x384xf32>
    %10 = tpu.matmul %8, %9, %cst_8 {dimension_numbers = #tpu.dot_dimension_numbers<[1], [0], [0], [1], [0, 0, 1, 1], [], []>} : vector<16x1536xbf16>, vector<1536x384xbf16>, vector<16x384xf32> -> vector<16x384xf32>
    %c0_9 = arith.constant 0 : index
    %c0_10 = arith.constant 0 : index
    %11 = vector.load %arg5[%c0_9, %c0_10] : memref<1x384xf32, #tpu.memory_space<vmem>>, vector<1x384xf32>
    %12 = vector.broadcast %11 : vector<1x384xf32> to vector<16x384xf32>
    %13 = arith.addf %10, %12 : vector<16x384xf32>
    %c0_11 = arith.constant 0 : index
    %c0_12 = arith.constant 0 : index
    %14 = vector.load %arg6[%c0_11, %c0_12] : memref<16x384xf32, #tpu.memory_space<vmem>>, vector<16x384xf32>
    tpu.vector_store %arg6[%c0_11, %c0_12], %13 {strides = array<i32>} : memref<16x384xf32, #tpu.memory_space<vmem>>, vector<16x384xf32>,
    return
  }
  func.func @transform_0(%arg0: i32) -> (i32, i32) {
    %c0_i32 = arith.constant 0 : i32
    %c0_i32_0 = arith.constant 0 : i32
    return %arg0, %c0_i32 : i32, i32
  }
  func.func @transform_1(%arg0: i32) -> (i32, i32) {
    %c0_i32 = arith.constant 0 : i32
    %c0_i32_0 = arith.constant 0 : i32
    %c0_i32_1 = arith.constant 0 : i32
    return %c0_i32, %c0_i32_0 : i32, i32
  }
  func.func @transform_2(%arg0: i32) -> (i32, i32) {
    %c0_i32 = arith.constant 0 : i32
    %c0_i32_0 = arith.constant 0 : i32
    %c0_i32_1 = arith.constant 0 : i32
    return %c0_i32, %c0_i32_0 : i32, i32
  }
  func.func @transform_3(%arg0: i32) -> (i32, i32) {
    %c0_i32 = arith.constant 0 : i32
    %c0_i32_0 = arith.constant 0 : i32
    %c0_i32_1 = arith.constant 0 : i32
    return %c0_i32, %c0_i32_0 : i32, i32
  }
  func.func @transform_4(%arg0: i32) -> (i32, i32) {
    %c0_i32 = arith.constant 0 : i32
    %c0_i32_0 = arith.constant 0 : i32
    %c0_i32_1 = arith.constant 0 : i32
    return %c0_i32, %c0_i32_0 : i32, i32
  }
  func.func @transform_5(%arg0: i32) -> (i32, i32) {
    %c0_i32 = arith.constant 0 : i32
    %c0_i32_0 = arith.constant 0 : i32
    return %arg0, %c0_i32 : i32, i32
  }
}

</mosaic_0001>

<llo_original>
// kernel: feed_forward.1
$region0: #{feed_forward.1}
  #allocation0 [shape = 'u32[]', space=smem, size = 0x4, offset = 0x4, fixed_abs, tag = 'smem constant byte address 0x4 - core index']
  #allocation1 [shape = 'u32[144,128]{1,0:T(1,128)}', space=vmem, size = 0x12000, scoped, tag = 'internal scratch']
  %s0 = inlined_call_operand.vmem [shape: bf16[32,384], index: 0, kind: input, shape index: {}]
  %s1 = inlined_call_operand.vmem [shape: bf16[384,1536], index: 1, kind: input, shape index: {}]
  %s2 = inlined_call_operand.vmem [shape: f32[1,1536], index: 2, kind: input, shape index: {}]
  %s3 = inlined_call_operand.vmem [shape: bf16[1536,384], index: 3, kind: input, shape index: {}]
  %s4 = inlined_call_operand.vmem [shape: f32[1,384], index: 4, kind: input, shape index: {}]
  %s5 = inlined_call_operand.hbm [shape: f32[32,384], index: 5, kind: output, shape index: {}]
  %s6 = sld [smem:[#allocation0]]
  $region53: #{feed_forward.1} parent=0
    _
  %s8 = ssub.s32 1, %s6
  %s9 = scalar_select 0, %s8, %s6
  $region1: #{feed_forward.1} parent=0
    #allocation2 [shape = 'u8[49152]{0}', space=vmem, size = 0xc000, scoped, tag = 'output window, operand 0']
    #allocation3 [shape = 's32[2]{0}', space=sflag, size = 0x8, scoped, tag = 'scoped memory for feed_forward.1']
    %10 = vsyncpa [#allocation3], 0
    %s11 = scalar_lea.sflag [#allocation3], 1
    %12 = vsyncpa %s11, 0
    loop: start=0, step=1, limit=4
    $region2: #{feed_forward.1} parent=1 // loop_pre_header
      _
    $region3: #{feed_forward.1} parent=1 // loop_header
      %s14 = sphi 0, %s18
      %p15 = scmp.ge.s32.totalorder %s14, 4
      %s24 = sphi 0, %s26
      %s27 = sphi 0, %s24
      %s28 = sphi 0, %s27
      %s44 = sphi 0, %s28
      %s48 = sphi 0, %s48
      %s50 = sphi 0, %s48
      %s51 = sphi 0, %s50
      %s65 = sphi 0, %s51
      %s69 = sphi 0, %s69
      %s71 = sphi 0, %s69
      %s72 = sphi 0, %s71
      %s86 = sphi 0, %s72
      %s90 = sphi 0, %s90
      %s92 = sphi 0, %s90
      %s93 = sphi 0, %s92
      %s107 = sphi 0, %s93
      %s111 = sphi 0, %s111
      %s113 = sphi 0, %s111
      %s114 = sphi 0, %s113
      %s128 = sphi 0, %s114
      %s134 = sphi 0, %s136
      %s137 = sphi 0, %s134
      %s138 = sphi 0, %s137
      %s154 = sphi 0, %s138
    $region4: #{feed_forward.1} parent=1 // loop_header_branch
      %17 = sbr.rel (%p15) target = $region8
    $region5: #{feed_forward.1} parent=1 // loop_body
      %s19 = ssub.s32 %s14, 1
      %s20 = ssub.s32 %s14, 2
      %s21 = sadd.s32 %s14, 1
      %s22 = ssub.s32 %s14, %s21
      %p23 = scmp.eq.s32.totalorder %s22, 0
      %s25 = sadd.s32 %s24, 1
      %s26 = scalar_select %p23, %s24, %s25
      %p29 = pneg %p23
      %p30 = scmp.eq.s32.totalorder %s14, 1
      %p31 = por %p29, %p30
      %p32 = scmp.ne.s32.totalorder %s24, %s27
      %p33 = scmp.eq.s32.totalorder %s14, 0
      %p34 = por %p32, %p33
      %p35 = scmp.ne.s32.totalorder %s24, %s27
      %p36 = scmp.eq.s32.totalorder %s19, 1
      %p37 = por %p35, %p36
      %p38 = scmp.ne.s32.totalorder %s27, %s28
      %p39 = scmp.eq.s32.totalorder %s19, 0
      %p40 = por %p38, %p39
      %p41 = scmp.ne.s32.totalorder %s27, %s28
      %p42 = scmp.eq.s32.totalorder %s20, 1
      %p43 = por %p41, %p42
      %p45 = scmp.ne.s32.totalorder %s28, %s44
      %p46 = scmp.eq.s32.totalorder %s20, 0
      %p47 = por %p45, %p46
      %s49 = sadd.s32 %s48, 1
      %p52 = scmp.eq.s32.totalorder %s14, 1
      %p53 = scmp.ne.s32.totalorder %s48, %s50
      %p54 = scmp.eq.s32.totalorder %s14, 0
      %p55 = por %p53, %p54
      %p56 = scmp.ne.s32.totalorder %s48, %s50
      %p57 = scmp.eq.s32.totalorder %s19, 1
      %p58 = por %p56, %p57
      %p59 = scmp.ne.s32.totalorder %s50, %s51
      %p60 = scmp.eq.s32.totalorder %s19, 0
      %p61 = por %p59, %p60
      %p62 = scmp.ne.s32.totalorder %s50, %s51
      %p63 = scmp.eq.s32.totalorder %s20, 1
      %p64 = por %p62, %p63
      %p66 = scmp.ne.s32.totalorder %s51, %s65
      %p67 = scmp.eq.s32.totalorder %s20, 0
      %p68 = por %p66, %p67
      %s70 = sadd.s32 %s69, 1
      %p73 = scmp.eq.s32.totalorder %s14, 1
      %p74 = scmp.ne.s32.totalorder %s69, %s71
      %p75 = scmp.eq.s32.totalorder %s14, 0
      %p76 = por %p74, %p75
      %p77 = scmp.ne.s32.totalorder %s69, %s71
      %p78 = scmp.eq.s32.totalorder %s19, 1
      %p79 = por %p77, %p78
      %p80 = scmp.ne.s32.totalorder %s71, %s72
      %p81 = scmp.eq.s32.totalorder %s19, 0
      %p82 = por %p80, %p81
      %p83 = scmp.ne.s32.totalorder %s71, %s72
      %p84 = scmp.eq.s32.totalorder %s20, 1
      %p85 = por %p83, %p84
      %p87 = scmp.ne.s32.totalorder %s72, %s86
      %p88 = scmp.eq.s32.totalorder %s20, 0
      %p89 = por %p87, %p88
      %s91 = sadd.s32 %s90, 1
      %p94 = scmp.eq.s32.totalorder %s14, 1
      %p95 = scmp.ne.s32.totalorder %s90, %s92
      %p96 = scmp.eq.s32.totalorder %s14, 0
      %p97 = por %p95, %p96
      %p98 = scmp.ne.s32.totalorder %s90, %s92
      %p99 = scmp.eq.s32.totalorder %s19, 1
      %p100 = por %p98, %p99
      %p101 = scmp.ne.s32.totalorder %s92, %s93
      %p102 = scmp.eq.s32.totalorder %s19, 0
      %p103 = por %p101, %p102
      %p104 = scmp.ne.s32.totalorder %s92, %s93
      %p105 = scmp.eq.s32.totalorder %s20, 1
      %p106 = por %p104, %p105
      %p108 = scmp.ne.s32.totalorder %s93, %s107
      %p109 = scmp.eq.s32.totalorder %s20, 0
      %p110 = por %p108, %p109
      %s112 = sadd.s32 %s111, 1
      %p115 = scmp.eq.s32.totalorder %s14, 1
      %p116 = scmp.ne.s32.totalorder %s111, %s113
      %p117 = scmp.eq.s32.totalorder %s14, 0
      %p118 = por %p116, %p117
      %p119 = scmp.ne.s32.totalorder %s111, %s113
      %p120 = scmp.eq.s32.totalorder %s19, 1
      %p121 = por %p119, %p120
      %p122 = scmp.ne.s32.totalorder %s113, %s114
      %p123 = scmp.eq.s32.totalorder %s19, 0
      %p124 = por %p122, %p123
      %p125 = scmp.ne.s32.totalorder %s113, %s114
      %p126 = scmp.eq.s32.totalorder %s20, 1
      %p127 = por %p125, %p126
      %p129 = scmp.ne.s32.totalorder %s114, %s128
      %p130 = scmp.eq.s32.totalorder %s20, 0
      %p131 = por %p129, %p130
      %s132 = ssub.s32 %s14, %s21
      %p133 = scmp.eq.s32.totalorder %s132, 0
      %s135 = sadd.s32 %s134, 1
      %s136 = scalar_select %p133, %s134, %s135
      %p139 = pneg %p133
      %p140 = scmp.eq.s32.totalorder %s14, 1
      %p141 = por %p139, %p140
      %p142 = scmp.ne.s32.totalorder %s134, %s137
      %p143 = scmp.eq.s32.totalorder %s14, 0
      %p144 = por %p142, %p143
      %p145 = scmp.ne.s32.totalorder %s134, %s137
      %p146 = scmp.eq.s32.totalorder %s19, 1
      %p147 = por %p145, %p146
      %p148 = scmp.ne.s32.totalorder %s137, %s138
      %p149 = scmp.eq.s32.totalorder %s19, 0
      %p150 = por %p148, %p149
      %p151 = scmp.ne.s32.totalorder %s137, %s138
      %p152 = scmp.eq.s32.totalorder %s20, 1
      %p153 = por %p151, %p152
      %p155 = scmp.ne.s32.totalorder %s138, %s154
      %p156 = scmp.eq.s32.totalorder %s20, 0
      %p157 = por %p155, %p156
      %p158 = scmp.le.s32.totalorder 1, %s14
      %p159 = scmp.lt.s32.totalorder %s14, 3
      %p160 = pnand %p158, %p159
      %p161 = pneg %p160
      // Predicated region
      $region9: #{feed_forward.1} parent=5 // pred_check
        _
      $region10: #{feed_forward.1} parent=5 // pred_check_branch
        %163 = sbr.rel (%p160) target = $region12
      $region11: #{feed_forward.1} parent=5 // pred_region
        %s164 = ssub.s32 %s14, 1
        // Predicated region
        $region13: #{feed_forward.1} parent=11 // pred_check
          %p165 = pneg %p61
        $region14: #{feed_forward.1} parent=11 // pred_check_branch
          %167 = sbr.rel (%p165) target = $region16
        $region15: #{feed_forward.1} parent=11 // pred_region
          _
        $region16: #{feed_forward.1} parent=11 // pred_fallthru
          _
        // Predicated region
        $region17: #{feed_forward.1} parent=11 // pred_check
          %p168 = pneg %p82
        $region18: #{feed_forward.1} parent=11 // pred_check_branch
          %170 = sbr.rel (%p168) target = $region20
        $region19: #{feed_forward.1} parent=11 // pred_region
          _
        $region20: #{feed_forward.1} parent=11 // pred_fallthru
          _
        // Predicated region
        $region21: #{feed_forward.1} parent=11 // pred_check
          %p171 = pneg %p103
        $region22: #{feed_forward.1} parent=11 // pred_check_branch
          %173 = sbr.rel (%p171) target = $region24
        $region23: #{feed_forward.1} parent=11 // pred_region
          _
        $region24: #{feed_forward.1} parent=11 // pred_fallthru
          _
        // Predicated region
        $region25: #{feed_forward.1} parent=11 // pred_check
          %p174 = pneg %p124
        $region26: #{feed_forward.1} parent=11 // pred_check_branch
          %176 = sbr.rel (%p174) target = $region28
        $region27: #{feed_forward.1} parent=11 // pred_region
          _
        $region28: #{feed_forward.1} parent=11 // pred_fallthru
          _
      $region12: #{feed_forward.1} parent=5 // pred_fallthru
        _
      %p177 = scmp.lt.s32.totalorder %s14, 2
      // Predicated region
      $region29: #{feed_forward.1} parent=5 // pred_check
        %p178 = pneg %p177
      $region30: #{feed_forward.1} parent=5 // pred_check_branch
        %180 = sbr.rel (%p178) target = $region32
      $region31: #{feed_forward.1} parent=5 // pred_region
        // Predicated region
        $region33: #{feed_forward.1} parent=31 // pred_check
          %p181 = pneg %p34
        $region34: #{feed_forward.1} parent=31 // pred_check_branch
          %183 = sbr.rel (%p181) target = $region36
        $region35: #{feed_forward.1} parent=31 // pred_region
          %s184 = smul.u32 2, %s14
          %p185 = scmp.lt.s32.totalorder %s184, 3
          %s186 = scalar_select %p185, %s184, 3
          %s187 = smul.addr %s186, 3
          %s188 = smul.addr %s187, 4
          %s189 = scalar_lea.vmem %s0, %s188
          %s190 = smul.u32 2, %s14
        $region36: #{feed_forward.1} parent=31 // pred_fallthru
          _
      $region32: #{feed_forward.1} parent=5 // pred_fallthru
        _
      %p191 = scmp.le.s32.totalorder 1, %s14
      %p192 = scmp.lt.s32.totalorder %s14, 3
      %p193 = pnand %p191, %p192
      %p194 = pneg %p193
      // Predicated region
      $region37: #{feed_forward.1} parent=5 // pred_check
        _
      $region38: #{feed_forward.1} parent=5 // pred_check_branch
        %196 = sbr.rel (%p193) target = $region40
      $region39: #{feed_forward.1} parent=5 // pred_region
        %s197 = ssub.s32 %s14, 1
        %s198 = smul.u32 2, %s19
        %p199 = scmp.lt.s32.totalorder %s198, 3
        %s200 = scalar_select %p199, %s198, 3
        %s201 = smul.addr %s200, 3
        %s202 = smul.addr %s201, 4
        %s203 = scalar_lea.vmem %s0, %s202
        %p204 = pneg %p40
        %p205 = pneg %p37
        %p206 = pneg %p61
        %p207 = pneg %p58
        %p208 = pneg %p82
        %p209 = pneg %p79
        %p210 = pneg %p103
        %p211 = pneg %p100
        %p212 = pneg %p124
        %p213 = pneg %p121
        %p214 = pneg %p150
        %p215 = pneg %p147
        %s216 = sand.u32 %s137, 1
        %s217 = scalar_lea.sflag [#allocation3], %s216
        %s218 = sand.u32 %s137, 1
        %s219 = smul.addr %s218, 48
        %s220 = scalar_lea.vmem [#allocation2], %s219
        %s221 = smul.u32 2, %s19
        %p222 = scmp.lt.s32.totalorder %s221, 3
        %s223 = scalar_select %p222, %s221, 3
        %s224 = smul.addr %s223, 3
        %s225 = smul.addr %s224, 4
        %s226 = scalar_lea.vmem %s0, %s225
        %s227 = smul.u32 2, %s19
        %s228 = smul.u32 2, %s19
        %v230 = vld [vmem:[%s226] sm:$0xff]
        %v231 = vld [vmem:[%s226 + $0x8] sm:$0xf]
        %v232 = vld [vmem:[%s226 + $0xc] sm:$0xff]
        %v233 = vld [vmem:[%s226 + $0x14] sm:$0xf]
        %v234 = vld [vmem:[%s1] sm:$0xff]
        %v235 = vld [vmem:[%s1 + $0x8] sm:$0xff]
        %v236 = vld [vmem:[%s1 + $0x10] sm:$0xff]
        %v237 = vld [vmem:[%s1 + $0x18] sm:$0xff]
        %v238 = vld [vmem:[%s1 + $0x20] sm:$0xff]
        %v239 = vld [vmem:[%s1 + $0x28] sm:$0xff]
        %v240 = vld [vmem:[%s1 + $0x30] sm:$0xff]
        %v241 = vld [vmem:[%s1 + $0x38] sm:$0xff]
        %v242 = vld [vmem:[%s1 + $0x40] sm:$0xff]
        %v243 = vld [vmem:[%s1 + $0x48] sm:$0xff]
        %v244 = vld [vmem:[%s1 + $0x50] sm:$0xff]
        %v245 = vld [vmem:[%s1 + $0x58] sm:$0xff]
        %v246 = vld [vmem:[%s1 + $0x60] sm:$0xff]
        %v247 = vld [vmem:[%s1 + $0x68] sm:$0xff]
        %v248 = vld [vmem:[%s1 + $0x70] sm:$0xff]
        %v249 = vld [vmem:[%s1 + $0x78] sm:$0xff]
        %v250 = vld [vmem:[%s1 + $0x80] sm:$0xff]
        %v251 = vld [vmem:[%s1 + $0x88] sm:$0xff]
        %v252 = vld [vmem:[%s1 + $0x90] sm:$0xff]
        %v253 = vld [vmem:[%s1 + $0x98] sm:$0xff]
        %v254 = vld [vmem:[%s1 + $0xa0] sm:$0xff]
        %v255 = vld [vmem:[%s1 + $0xa8] sm:$0xff]
        %v256 = vld [vmem:[%s1 + $0xb0] sm:$0xff]
        %v257 = vld [vmem:[%s1 + $0xb8] sm:$0xff]
        %v258 = vld [vmem:[%s1 + $0xc0] sm:$0xff]
        %v259 = vld [vmem:[%s1 + $0xc8] sm:$0xff]
        %v260 = vld [vmem:[%s1 + $0xd0] sm:$0xff]
        %v261 = vld [vmem:[%s1 + $0xd8] sm:$0xff]
        %v262 = vld [vmem:[%s1 + $0xe0] sm:$0xff]
        %v263 = vld [vmem:[%s1 + $0xe8] sm:$0xff]
        %v264 = vld [vmem:[%s1 + $0xf0] sm:$0xff]
        %v265 = vld [vmem:[%s1 + $0xf8] sm:$0xff]
        %v266 = vld [vmem:[%s1 + $0x100] sm:$0xff]
        %v267 = vld [vmem:[%s1 + $0x108] sm:$0xff]
        %v268 = vld [vmem:[%s1 + $0x110] sm:$0xff]
        %v269 = vld [vmem:[%s1 + $0x118] sm:$0xff]
        %v270 = vld [vmem:[%s1 + $0x120] sm:$0xff]
        %v271 = vld [vmem:[%s1 + $0x128] sm:$0xff]
        %v272 = vld [vmem:[%s1 + $0x130] sm:$0xff]
        %v273 = vld [vmem:[%s1 + $0x138] sm:$0xff]
        %v274 = vld [vmem:[%s1 + $0x140] sm:$0xff]
        %v275 = vld [vmem:[%s1 + $0x148] sm:$0xff]
        %v276 = vld [vmem:[%s1 + $0x150] sm:$0xff]
        %v277 = vld [vmem:[%s1 + $0x158] sm:$0xff]
        %v278 = vld [vmem:[%s1 + $0x160] sm:$0xff]
        %v279 = vld [vmem:[%s1 + $0x168] sm:$0xff]
        %v280 = vld [vmem:[%s1 + $0x170] sm:$0xff]
        %v281 = vld [vmem:[%s1 + $0x178] sm:$0xff]
        %v282 = vld [vmem:[%s1 + $0x180] sm:$0xff]
        %v283 = vld [vmem:[%s1 + $0x188] sm:$0xff]
        %v284 = vld [vmem:[%s1 + $0x190] sm:$0xff]
        %v285 = vld [vmem:[%s1 + $0x198] sm:$0xff]
        %v286 = vld [vmem:[%s1 + $0x1a0] sm:$0xff]
        %v287 = vld [vmem:[%s1 + $0x1a8] sm:$0xff]
        %v288 = vld [vmem:[%s1 + $0x1b0] sm:$0xff]
        %v289 = vld [vmem:[%s1 + $0x1b8] sm:$0xff]
        %v290 = vld [vmem:[%s1 + $0x1c0] sm:$0xff]
        %v291 = vld [vmem:[%s1 + $0x1c8] sm:$0xff]
        %v292 = vld [vmem:[%s1 + $0x1d0] sm:$0xff]
        %v293 = vld [vmem:[%s1 + $0x1d8] sm:$0xff]
        %v294 = vld [vmem:[%s1 + $0x1e0] sm:$0xff]
        %v295 = vld [vmem:[%s1 + $0x1e8] sm:$0xff]
        %v296 = vld [vmem:[%s1 + $0x1f0] sm:$0xff]
        %v297 = vld [vmem:[%s1 + $0x1f8] sm:$0xff]
        %v298 = vld [vmem:[%s1 + $0x200] sm:$0xff]
        %v299 = vld [vmem:[%s1 + $0x208] sm:$0xff]
        %v300 = vld [vmem:[%s1 + $0x210] sm:$0xff]
        %v301 = vld [vmem:[%s1 + $0x218] sm:$0xff]
        %v302 = vld [vmem:[%s1 + $0x220] sm:$0xff]
        %v303 = vld [vmem:[%s1 + $0x228] sm:$0xff]
        %v304 = vld [vmem:[%s1 + $0x230] sm:$0xff]
        %v305 = vld [vmem:[%s1 + $0x238] sm:$0xff]
        %v306 = vld [vmem:[%s1 + $0x240] sm:$0xff]
        %v307 = vld [vmem:[%s1 + $0x248] sm:$0xff]
        %v308 = vld [vmem:[%s1 + $0x250] sm:$0xff]
        %v309 = vld [vmem:[%s1 + $0x258] sm:$0xff]
        %v310 = vld [vmem:[%s1 + $0x260] sm:$0xff]
        %v311 = vld [vmem:[%s1 + $0x268] sm:$0xff]
        %v312 = vld [vmem:[%s1 + $0x270] sm:$0xff]
        %v313 = vld [vmem:[%s1 + $0x278] sm:$0xff]
        %v314 = vld [vmem:[%s1 + $0x280] sm:$0xff]
        %v315 = vld [vmem:[%s1 + $0x288] sm:$0xff]
        %v316 = vld [vmem:[%s1 + $0x290] sm:$0xff]
        %v317 = vld [vmem:[%s1 + $0x298] sm:$0xff]
        %v318 = vld [vmem:[%s1 + $0x2a0] sm:$0xff]
        %v319 = vld [vmem:[%s1 + $0x2a8] sm:$0xff]
        %v320 = vld [vmem:[%s1 + $0x2b0] sm:$0xff]
        %v321 = vld [vmem:[%s1 + $0x2b8] sm:$0xff]
        %v322 = vld [vmem:[%s1 + $0x2c0] sm:$0xff]
        %v323 = vld [vmem:[%s1 + $0x2c8] sm:$0xff]
        %v324 = vld [vmem:[%s1 + $0x2d0] sm:$0xff]
        %v325 = vld [vmem:[%s1 + $0x2d8] sm:$0xff]
        %v326 = vld [vmem:[%s1 + $0x2e0] sm:$0xff]
        %v327 = vld [vmem:[%s1 + $0x2e8] sm:$0xff]
        %v328 = vld [vmem:[%s1 + $0x2f0] sm:$0xff]
        %v329 = vld [vmem:[%s1 + $0x2f8] sm:$0xff]
        %v330 = vld [vmem:[%s1 + $0x300] sm:$0xff]
        %v331 = vld [vmem:[%s1 + $0x308] sm:$0xff]
        %v332 = vld [vmem:[%s1 + $0x310] sm:$0xff]
        %v333 = vld [vmem:[%s1 + $0x318] sm:$0xff]
        %v334 = vld [vmem:[%s1 + $0x320] sm:$0xff]
        %v335 = vld [vmem:[%s1 + $0x328] sm:$0xff]
        %v336 = vld [vmem:[%s1 + $0x330] sm:$0xff]
        %v337 = vld [vmem:[%s1 + $0x338] sm:$0xff]
        %v338 = vld [vmem:[%s1 + $0x340] sm:$0xff]
        %v339 = vld [vmem:[%s1 + $0x348] sm:$0xff]
        %v340 = vld [vmem:[%s1 + $0x350] sm:$0xff]
        %v341 = vld [vmem:[%s1 + $0x358] sm:$0xff]
        %v342 = vld [vmem:[%s1 + $0x360] sm:$0xff]
        %v343 = vld [vmem:[%s1 + $0x368] sm:$0xff]
        %v344 = vld [vmem:[%s1 + $0x370] sm:$0xff]
        %v345 = vld [vmem:[%s1 + $0x378] sm:$0xff]
        %v346 = vld [vmem:[%s1 + $0x380] sm:$0xff]
        %v347 = vld [vmem:[%s1 + $0x388] sm:$0xff]
        %v348 = vld [vmem:[%s1 + $0x390] sm:$0xff]
        %v349 = vld [vmem:[%s1 + $0x398] sm:$0xff]
        %v350 = vld [vmem:[%s1 + $0x3a0] sm:$0xff]
        %v351 = vld [vmem:[%s1 + $0x3a8] sm:$0xff]
        %v352 = vld [vmem:[%s1 + $0x3b0] sm:$0xff]
        %v353 = vld [vmem:[%s1 + $0x3b8] sm:$0xff]
        %v354 = vld [vmem:[%s1 + $0x3c0] sm:$0xff]
        %v355 = vld [vmem:[%s1 + $0x3c8] sm:$0xff]
        %v356 = vld [vmem:[%s1 + $0x3d0] sm:$0xff]
        %v357 = vld [vmem:[%s1 + $0x3d8] sm:$0xff]
        %v358 = vld [vmem:[%s1 + $0x3e0] sm:$0xff]
        %v359 = vld [vmem:[%s1 + $0x3e8] sm:$0xff]
        %v360 = vld [vmem:[%s1 + $0x3f0] sm:$0xff]
        %v361 = vld [vmem:[%s1 + $0x3f8] sm:$0xff]
        %v362 = vld [vmem:[%s1 + $0x400] sm:$0xff]
        %v363 = vld [vmem:[%s1 + $0x408] sm:$0xff]
        %v364 = vld [vmem:[%s1 + $0x410] sm:$0xff]
        %v365 = vld [vmem:[%s1 + $0x418] sm:$0xff]
        %v366 = vld [vmem:[%s1 + $0x420] sm:$0xff]
        %v367 = vld [vmem:[%s1 + $0x428] sm:$0xff]
        %v368 = vld [vmem:[%s1 + $0x430] sm:$0xff]
        %v369 = vld [vmem:[%s1 + $0x438] sm:$0xff]
        %v370 = vld [vmem:[%s1 + $0x440] sm:$0xff]
        %v371 = vld [vmem:[%s1 + $0x448] sm:$0xff]
        %v372 = vld [vmem:[%s1 + $0x450] sm:$0xff]
        %v373 = vld [vmem:[%s1 + $0x458] sm:$0xff]
        %v374 = vld [vmem:[%s1 + $0x460] sm:$0xff]
        %v375 = vld [vmem:[%s1 + $0x468] sm:$0xff]
        %v376 = vld [vmem:[%s1 + $0x470] sm:$0xff]
        %v377 = vld [vmem:[%s1 + $0x478] sm:$0xff]
        %v378 = vld [vmem:[%s1 + $0x480] sm:$0xff]
        %v379 = vld [vmem:[%s1 + $0x488] sm:$0xff]
        %v380 = vld [vmem:[%s1 + $0x490] sm:$0xff]
        %v381 = vld [vmem:[%s1 + $0x498] sm:$0xff]
        %v382 = vld [vmem:[%s1 + $0x4a0] sm:$0xff]
        %v383 = vld [vmem:[%s1 + $0x4a8] sm:$0xff]
        %v384 = vld [vmem:[%s1 + $0x4b0] sm:$0xff]
        %v385 = vld [vmem:[%s1 + $0x4b8] sm:$0xff]
        %v386 = vld [vmem:[%s1 + $0x4c0] sm:$0xff]
        %v387 = vld [vmem:[%s1 + $0x4c8] sm:$0xff]
        %v388 = vld [vmem:[%s1 + $0x4d0] sm:$0xff]
        %v389 = vld [vmem:[%s1 + $0x4d8] sm:$0xff]
        %v390 = vld [vmem:[%s1 + $0x4e0] sm:$0xff]
        %v391 = vld [vmem:[%s1 + $0x4e8] sm:$0xff]
        %v392 = vld [vmem:[%s1 + $0x4f0] sm:$0xff]
        %v393 = vld [vmem:[%s1 + $0x4f8] sm:$0xff]
        %v394 = vld [vmem:[%s1 + $0x500] sm:$0xff]
        %v395 = vld [vmem:[%s1 + $0x508] sm:$0xff]
        %v396 = vld [vmem:[%s1 + $0x510] sm:$0xff]
        %v397 = vld [vmem:[%s1 + $0x518] sm:$0xff]
        %v398 = vld [vmem:[%s1 + $0x520] sm:$0xff]
        %v399 = vld [vmem:[%s1 + $0x528] sm:$0xff]
        %v400 = vld [vmem:[%s1 + $0x530] sm:$0xff]
        %v401 = vld [vmem:[%s1 + $0x538] sm:$0xff]
        %v402 = vld [vmem:[%s1 + $0x540] sm:$0xff]
        %v403 = vld [vmem:[%s1 + $0x548] sm:$0xff]
        %v404 = vld [vmem:[%s1 + $0x550] sm:$0xff]
        %v405 = vld [vmem:[%s1 + $0x558] sm:$0xff]
        %v406 = vld [vmem:[%s1 + $0x560] sm:$0xff]
        %v407 = vld [vmem:[%s1 + $0x568] sm:$0xff]
        %v408 = vld [vmem:[%s1 + $0x570] sm:$0xff]
        %v409 = vld [vmem:[%s1 + $0x578] sm:$0xff]
        %v410 = vld [vmem:[%s1 + $0x580] sm:$0xff]
        %v411 = vld [vmem:[%s1 + $0x588] sm:$0xff]
        %v412 = vld [vmem:[%s1 + $0x590] sm:$0xff]
        %v413 = vld [vmem:[%s1 + $0x598] sm:$0xff]
        %v414 = vld [vmem:[%s1 + $0x5a0] sm:$0xff]
        %v415 = vld [vmem:[%s1 + $0x5a8] sm:$0xff]
        %v416 = vld [vmem:[%s1 + $0x5b0] sm:$0xff]
        %v417 = vld [vmem:[%s1 + $0x5b8] sm:$0xff]
        %v418 = vld [vmem:[%s1 + $0x5c0] sm:$0xff]
        %v419 = vld [vmem:[%s1 + $0x5c8] sm:$0xff]
        %v420 = vld [vmem:[%s1 + $0x5d0] sm:$0xff]
        %v421 = vld [vmem:[%s1 + $0x5d8] sm:$0xff]
        %v422 = vld [vmem:[%s1 + $0x5e0] sm:$0xff]
        %v423 = vld [vmem:[%s1 + $0x5e8] sm:$0xff]
        %v424 = vld [vmem:[%s1 + $0x5f0] sm:$0xff]
        %v425 = vld [vmem:[%s1 + $0x5f8] sm:$0xff]
        %v426 = vld [vmem:[%s1 + $0x600] sm:$0xff]
        %v427 = vld [vmem:[%s1 + $0x608] sm:$0xff]
        %v428 = vld [vmem:[%s1 + $0x610] sm:$0xff]
        %v429 = vld [vmem:[%s1 + $0x618] sm:$0xff]
        %v430 = vld [vmem:[%s1 + $0x620] sm:$0xff]
        %v431 = vld [vmem:[%s1 + $0x628] sm:$0xff]
        %v432 = vld [vmem:[%s1 + $0x630] sm:$0xff]
        %v433 = vld [vmem:[%s1 + $0x638] sm:$0xff]
        %v434 = vld [vmem:[%s1 + $0x640] sm:$0xff]
        %v435 = vld [vmem:[%s1 + $0x648] sm:$0xff]
        %v436 = vld [vmem:[%s1 + $0x650] sm:$0xff]
        %v437 = vld [vmem:[%s1 + $0x658] sm:$0xff]
        %v438 = vld [vmem:[%s1 + $0x660] sm:$0xff]
        %v439 = vld [vmem:[%s1 + $0x668] sm:$0xff]
        %v440 = vld [vmem:[%s1 + $0x670] sm:$0xff]
        %v441 = vld [vmem:[%s1 + $0x678] sm:$0xff]
        %v442 = vld [vmem:[%s1 + $0x680] sm:$0xff]
        %v443 = vld [vmem:[%s1 + $0x688] sm:$0xff]
        %v444 = vld [vmem:[%s1 + $0x690] sm:$0xff]
        %v445 = vld [vmem:[%s1 + $0x698] sm:$0xff]
        %v446 = vld [vmem:[%s1 + $0x6a0] sm:$0xff]
        %v447 = vld [vmem:[%s1 + $0x6a8] sm:$0xff]
        %v448 = vld [vmem:[%s1 + $0x6b0] sm:$0xff]
        %v449 = vld [vmem:[%s1 + $0x6b8] sm:$0xff]
        %v450 = vld [vmem:[%s1 + $0x6c0] sm:$0xff]
        %v451 = vld [vmem:[%s1 + $0x6c8] sm:$0xff]
        %v452 = vld [vmem:[%s1 + $0x6d0] sm:$0xff]
        %v453 = vld [vmem:[%s1 + $0x6d8] sm:$0xff]
        %v454 = vld [vmem:[%s1 + $0x6e0] sm:$0xff]
        %v455 = vld [vmem:[%s1 + $0x6e8] sm:$0xff]
        %v456 = vld [vmem:[%s1 + $0x6f0] sm:$0xff]
        %v457 = vld [vmem:[%s1 + $0x6f8] sm:$0xff]
        %v458 = vld [vmem:[%s1 + $0x700] sm:$0xff]
        %v459 = vld [vmem:[%s1 + $0x708] sm:$0xff]
        %v460 = vld [vmem:[%s1 + $0x710] sm:$0xff]
        %v461 = vld [vmem:[%s1 + $0x718] sm:$0xff]
        %v462 = vld [vmem:[%s1 + $0x720] sm:$0xff]
        %v463 = vld [vmem:[%s1 + $0x728] sm:$0xff]
        %v464 = vld [vmem:[%s1 + $0x730] sm:$0xff]
        %v465 = vld [vmem:[%s1 + $0x738] sm:$0xff]
        %v466 = vld [vmem:[%s1 + $0x740] sm:$0xff]
        %v467 = vld [vmem:[%s1 + $0x748] sm:$0xff]
        %v468 = vld [vmem:[%s1 + $0x750] sm:$0xff]
        %v469 = vld [vmem:[%s1 + $0x758] sm:$0xff]
        %v470 = vld [vmem:[%s1 + $0x760] sm:$0xff]
        %v471 = vld [vmem:[%s1 + $0x768] sm:$0xff]
        %v472 = vld [vmem:[%s1 + $0x770] sm:$0xff]
        %v473 = vld [vmem:[%s1 + $0x778] sm:$0xff]
        %v474 = vld [vmem:[%s1 + $0x780] sm:$0xff]
        %v475 = vld [vmem:[%s1 + $0x788] sm:$0xff]
        %v476 = vld [vmem:[%s1 + $0x790] sm:$0xff]
        %v477 = vld [vmem:[%s1 + $0x798] sm:$0xff]
        %v478 = vld [vmem:[%s1 + $0x7a0] sm:$0xff]
        %v479 = vld [vmem:[%s1 + $0x7a8] sm:$0xff]
        %v480 = vld [vmem:[%s1 + $0x7b0] sm:$0xff]
        %v481 = vld [vmem:[%s1 + $0x7b8] sm:$0xff]
        %v482 = vld [vmem:[%s1 + $0x7c0] sm:$0xff]
        %v483 = vld [vmem:[%s1 + $0x7c8] sm:$0xff]
        %v484 = vld [vmem:[%s1 + $0x7d0] sm:$0xff]
        %v485 = vld [vmem:[%s1 + $0x7d8] sm:$0xff]
        %v486 = vld [vmem:[%s1 + $0x7e0] sm:$0xff]
        %v487 = vld [vmem:[%s1 + $0x7e8] sm:$0xff]
        %v488 = vld [vmem:[%s1 + $0x7f0] sm:$0xff]
        %v489 = vld [vmem:[%s1 + $0x7f8] sm:$0xff]
        %v490 = vld [vmem:[%s1 + $0x800] sm:$0xff]
        %v491 = vld [vmem:[%s1 + $0x808] sm:$0xff]
        %v492 = vld [vmem:[%s1 + $0x810] sm:$0xff]
        %v493 = vld [vmem:[%s1 + $0x818] sm:$0xff]
        %v494 = vld [vmem:[%s1 + $0x820] sm:$0xff]
        %v495 = vld [vmem:[%s1 + $0x828] sm:$0xff]
        %v496 = vld [vmem:[%s1 + $0x830] sm:$0xff]
        %v497 = vld [vmem:[%s1 + $0x838] sm:$0xff]
        %v498 = vld [vmem:[%s1 + $0x840] sm:$0xff]
        %v499 = vld [vmem:[%s1 + $0x848] sm:$0xff]
        %v500 = vld [vmem:[%s1 + $0x850] sm:$0xff]
        %v501 = vld [vmem:[%s1 + $0x858] sm:$0xff]
        %v502 = vld [vmem:[%s1 + $0x860] sm:$0xff]
        %v503 = vld [vmem:[%s1 + $0x868] sm:$0xff]
        %v504 = vld [vmem:[%s1 + $0x870] sm:$0xff]
        %v505 = vld [vmem:[%s1 + $0x878] sm:$0xff]
        %v506 = vld [vmem:[%s1 + $0x880] sm:$0xff]
        %v507 = vld [vmem:[%s1 + $0x888] sm:$0xff]
        %v508 = vld [vmem:[%s1 + $0x890] sm:$0xff]
        %v509 = vld [vmem:[%s1 + $0x898] sm:$0xff]
        %v510 = vld [vmem:[%s1 + $0x8a0] sm:$0xff]
        %v511 = vld [vmem:[%s1 + $0x8a8] sm:$0xff]
        %v512 = vld [vmem:[%s1 + $0x8b0] sm:$0xff]
        %v513 = vld [vmem:[%s1 + $0x8b8] sm:$0xff]
        %v514 = vld [vmem:[%s1 + $0x8c0] sm:$0xff]
        %v515 = vld [vmem:[%s1 + $0x8c8] sm:$0xff]
        %v516 = vld [vmem:[%s1 + $0x8d0] sm:$0xff]
        %v517 = vld [vmem:[%s1 + $0x8d8] sm:$0xff]
        %v518 = vld [vmem:[%s1 + $0x8e0] sm:$0xff]
        %v519 = vld [vmem:[%s1 + $0x8e8] sm:$0xff]
        %v520 = vld [vmem:[%s1 + $0x8f0] sm:$0xff]
        %v521 = vld [vmem:[%s1 + $0x8f8] sm:$0xff]
        %v522 = vld [vmem:[%s2] sm:$0xff]
        %v523 = vld [vmem:[%s2 + $0x8] sm:$0xf]
        %v526 = vlaneseq
        %v527 = vshrl.u32 %v526, 7
        %v528 = vsub.s32 0, %v527
        %v529 = vrot.slane %v522, %v528
        %v530 = vlaneseq
        %v531 = vshrl.u32 %v530, 7
        %v532 = vsub.s32 1, %v531
        %v533 = vrot.slane %v522, %v532
        %v534 = vlaneseq
        %v535 = vshrl.u32 %v534, 7
        %v536 = vsub.s32 2, %v535
        %v537 = vrot.slane %v522, %v536
        %v538 = vlaneseq
        %v539 = vshrl.u32 %v538, 7
        %v540 = vsub.s32 3, %v539
        %v541 = vrot.slane %v522, %v540
        %v542 = vlaneseq
        %v543 = vshrl.u32 %v542, 7
        %v544 = vsub.s32 4, %v543
        %v545 = vrot.slane %v522, %v544
        %v546 = vlaneseq
        %v547 = vshrl.u32 %v546, 7
        %v548 = vsub.s32 5, %v547
        %v549 = vrot.slane %v522, %v548
        %v550 = vlaneseq
        %v551 = vshrl.u32 %v550, 7
        %v552 = vsub.s32 6, %v551
        %v553 = vrot.slane %v522, %v552
        %v554 = vlaneseq
        %v555 = vshrl.u32 %v554, 7
        %v556 = vsub.s32 7, %v555
        %v557 = vrot.slane %v522, %v556
        %v558 = vlaneseq
        %v559 = vshrl.u32 %v558, 7
        %v560 = vsub.s32 0, %v559
        %v561 = vrot.slane %v523, %v560
        %v562 = vlaneseq
        %v563 = vshrl.u32 %v562, 7
        %v564 = vsub.s32 1, %v563
        %v565 = vrot.slane %v523, %v564
        %v566 = vlaneseq
        %v567 = vshrl.u32 %v566, 7
        %v568 = vsub.s32 2, %v567
        %v569 = vrot.slane %v523, %v568
        %v570 = vlaneseq
        %v571 = vshrl.u32 %v570, 7
        %v572 = vsub.s32 3, %v571
        %v573 = vrot.slane %v523, %v572
        %v590 = vunpack.c.l.b16 %v230
        %v591 = vunpack.c.h.b16 %v230
        %v592 = vunpack.c.l.b16 %v231
        %v593 = vunpack.c.l.b16 %v232
        %v594 = vunpack.c.h.b16 %v232
        %v595 = vunpack.c.l.b16 %v233
        %v596 = vpack.c.b16 %v593, %v590
        %v597 = vpack.c.b16 %v594, %v591
        %v598 = vpack.c.b16 %v595, %v592
        %v890 = vunpack.c.l.b16 %v234
        %v891 = vunpack.c.h.b16 %v234
        %v892 = vunpack.c.l.b16 %v235
        %v893 = vunpack.c.h.b16 %v235
        %v894 = vunpack.c.l.b16 %v236
        %v895 = vunpack.c.h.b16 %v236
        %v896 = vunpack.c.l.b16 %v237
        %v897 = vunpack.c.h.b16 %v237
        %v898 = vunpack.c.l.b16 %v238
        %v899 = vunpack.c.h.b16 %v238
        %v900 = vunpack.c.l.b16 %v239
        %v901 = vunpack.c.h.b16 %v239
        %v902 = vunpack.c.l.b16 %v240
        %v903 = vunpack.c.h.b16 %v240
        %v904 = vunpack.c.l.b16 %v241
        %v905 = vunpack.c.h.b16 %v241
        %v906 = vunpack.c.l.b16 %v242
        %v907 = vunpack.c.h.b16 %v242
        %v908 = vunpack.c.l.b16 %v243
        %v909 = vunpack.c.h.b16 %v243
        %v910 = vunpack.c.l.b16 %v244
        %v911 = vunpack.c.h.b16 %v244
        %v912 = vunpack.c.l.b16 %v245
        %v913 = vunpack.c.h.b16 %v245
        %v914 = vunpack.c.l.b16 %v246
        %v915 = vunpack.c.h.b16 %v246
        %v916 = vunpack.c.l.b16 %v247
        %v917 = vunpack.c.h.b16 %v247
        %v918 = vunpack.c.l.b16 %v248
        %v919 = vunpack.c.h.b16 %v248
        %v920 = vunpack.c.l.b16 %v249
        %v921 = vunpack.c.h.b16 %v249
        %v922 = vunpack.c.l.b16 %v250
        %v923 = vunpack.c.h.b16 %v250
        %v924 = vunpack.c.l.b16 %v251
        %v925 = vunpack.c.h.b16 %v251
        %v926 = vunpack.c.l.b16 %v252
        %v927 = vunpack.c.h.b16 %v252
        %v928 = vunpack.c.l.b16 %v253
        %v929 = vunpack.c.h.b16 %v253
        %v930 = vunpack.c.l.b16 %v254
        %v931 = vunpack.c.h.b16 %v254
        %v932 = vunpack.c.l.b16 %v255
        %v933 = vunpack.c.h.b16 %v255
        %v934 = vunpack.c.l.b16 %v256
        %v935 = vunpack.c.h.b16 %v256
        %v936 = vunpack.c.l.b16 %v257
        %v937 = vunpack.c.h.b16 %v257
        %v938 = vunpack.c.l.b16 %v258
        %v939 = vunpack.c.h.b16 %v258
        %v940 = vunpack.c.l.b16 %v259
        %v941 = vunpack.c.h.b16 %v259
        %v942 = vunpack.c.l.b16 %v260
        %v943 = vunpack.c.h.b16 %v260
        %v944 = vunpack.c.l.b16 %v261
        %v945 = vunpack.c.h.b16 %v261
        %v946 = vunpack.c.l.b16 %v262
        %v947 = vunpack.c.h.b16 %v262
        %v948 = vunpack.c.l.b16 %v263
        %v949 = vunpack.c.h.b16 %v263
        %v950 = vunpack.c.l.b16 %v264
        %v951 = vunpack.c.h.b16 %v264
        %v952 = vunpack.c.l.b16 %v265
        %v953 = vunpack.c.h.b16 %v265
        %v954 = vunpack.c.l.b16 %v266
        %v955 = vunpack.c.h.b16 %v266
        %v956 = vunpack.c.l.b16 %v267
        %v957 = vunpack.c.h.b16 %v267
        %v958 = vunpack.c.l.b16 %v268
        %v959 = vunpack.c.h.b16 %v268
        %v960 = vunpack.c.l.b16 %v269
        %v961 = vunpack.c.h.b16 %v269
        %v962 = vunpack.c.l.b16 %v270
        %v963 = vunpack.c.h.b16 %v270
        %v964 = vunpack.c.l.b16 %v271
        %v965 = vunpack.c.h.b16 %v271
        %v966 = vunpack.c.l.b16 %v272
        %v967 = vunpack.c.h.b16 %v272
        %v968 = vunpack.c.l.b16 %v273
        %v969 = vunpack.c.h.b16 %v273
        %v970 = vunpack.c.l.b16 %v274
        %v971 = vunpack.c.h.b16 %v274
        %v972 = vunpack.c.l.b16 %v275
        %v973 = vunpack.c.h.b16 %v275
        %v974 = vunpack.c.l.b16 %v276
        %v975 = vunpack.c.h.b16 %v276
        %v976 = vunpack.c.l.b16 %v277
        %v977 = vunpack.c.h.b16 %v277
        %v978 = vunpack.c.l.b16 %v278
        %v979 = vunpack.c.h.b16 %v278
        %v980 = vunpack.c.l.b16 %v279
        %v981 = vunpack.c.h.b16 %v279
        %v982 = vunpack.c.l.b16 %v280
        %v983 = vunpack.c.h.b16 %v280
        %v984 = vunpack.c.l.b16 %v281
        %v985 = vunpack.c.h.b16 %v281
        %v986 = vunpack.c.l.b16 %v282
        %v987 = vunpack.c.h.b16 %v282
        %v988 = vunpack.c.l.b16 %v283
        %v989 = vunpack.c.h.b16 %v283
        %v990 = vunpack.c.l.b16 %v284
        %v991 = vunpack.c.h.b16 %v284
        %v992 = vunpack.c.l.b16 %v285
        %v993 = vunpack.c.h.b16 %v285
        %v994 = vunpack.c.l.b16 %v286
        %v995 = vunpack.c.h.b16 %v286
        %v996 = vunpack.c.l.b16 %v287
        %v997 = vunpack.c.h.b16 %v287
        %v998 = vunpack.c.l.b16 %v288
        %v999 = vunpack.c.h.b16 %v288
        %v1000 = vunpack.c.l.b16 %v289
        %v1001 = vunpack.c.h.b16 %v289
        %v1002 = vunpack.c.l.b16 %v290
        %v1003 = vunpack.c.h.b16 %v290
        %v1004 = vunpack.c.l.b16 %v291
        %v1005 = vunpack.c.h.b16 %v291
        %v1006 = vunpack.c.l.b16 %v292
        %v1007 = vunpack.c.h.b16 %v292
        %v1008 = vunpack.c.l.b16 %v293
        %v1009 = vunpack.c.h.b16 %v293
        %v1010 = vunpack.c.l.b16 %v294
        %v1011 = vunpack.c.h.b16 %v294
        %v1012 = vunpack.c.l.b16 %v295
        %v1013 = vunpack.c.h.b16 %v295
        %v1014 = vunpack.c.l.b16 %v296
        %v1015 = vunpack.c.h.b16 %v296
        %v1016 = vunpack.c.l.b16 %v297
        %v1017 = vunpack.c.h.b16 %v297
        %v1018 = vunpack.c.l.b16 %v298
        %v1019 = vunpack.c.h.b16 %v298
        %v1020 = vunpack.c.l.b16 %v299
        %v1021 = vunpack.c.h.b16 %v299
        %v1022 = vunpack.c.l.b16 %v300
        %v1023 = vunpack.c.h.b16 %v300
        %v1024 = vunpack.c.l.b16 %v301
        %v1025 = vunpack.c.h.b16 %v301
        %v1026 = vunpack.c.l.b16 %v302
        %v1027 = vunpack.c.h.b16 %v302
        %v1028 = vunpack.c.l.b16 %v303
        %v1029 = vunpack.c.h.b16 %v303
        %v1030 = vunpack.c.l.b16 %v304
        %v1031 = vunpack.c.h.b16 %v304
        %v1032 = vunpack.c.l.b16 %v305
        %v1033 = vunpack.c.h.b16 %v305
        %v1034 = vunpack.c.l.b16 %v306
        %v1035 = vunpack.c.h.b16 %v306
        %v1036 = vunpack.c.l.b16 %v307
        %v1037 = vunpack.c.h.b16 %v307
        %v1038 = vunpack.c.l.b16 %v308
        %v1039 = vunpack.c.h.b16 %v308
        %v1040 = vunpack.c.l.b16 %v309
        %v1041 = vunpack.c.h.b16 %v309
        %v1042 = vunpack.c.l.b16 %v310
        %v1043 = vunpack.c.h.b16 %v310
        %v1044 = vunpack.c.l.b16 %v311
        %v1045 = vunpack.c.h.b16 %v311
        %v1046 = vunpack.c.l.b16 %v312
        %v1047 = vunpack.c.h.b16 %v312
        %v1048 = vunpack.c.l.b16 %v313
        %v1049 = vunpack.c.h.b16 %v313
        %v1050 = vunpack.c.l.b16 %v314
        %v1051 = vunpack.c.h.b16 %v314
        %v1052 = vunpack.c.l.b16 %v315
        %v1053 = vunpack.c.h.b16 %v315
        %v1054 = vunpack.c.l.b16 %v316
        %v1055 = vunpack.c.h.b16 %v316
        %v1056 = vunpack.c.l.b16 %v317
        %v1057 = vunpack.c.h.b16 %v317
        %v1058 = vunpack.c.l.b16 %v318
        %v1059 = vunpack.c.h.b16 %v318
        %v1060 = vunpack.c.l.b16 %v319
        %v1061 = vunpack.c.h.b16 %v319
        %v1062 = vunpack.c.l.b16 %v320
        %v1063 = vunpack.c.h.b16 %v320
        %v1064 = vunpack.c.l.b16 %v321
        %v1065 = vunpack.c.h.b16 %v321
        %v1066 = vunpack.c.l.b16 %v322
        %v1067 = vunpack.c.h.b16 %v322
        %v1068 = vunpack.c.l.b16 %v323
        %v1069 = vunpack.c.h.b16 %v323
        %v1070 = vunpack.c.l.b16 %v324
        %v1071 = vunpack.c.h.b16 %v324
        %v1072 = vunpack.c.l.b16 %v325
        %v1073 = vunpack.c.h.b16 %v325
        %v1074 = vunpack.c.l.b16 %v326
        %v1075 = vunpack.c.h.b16 %v326
        %v1076 = vunpack.c.l.b16 %v327
        %v1077 = vunpack.c.h.b16 %v327
        %v1078 = vunpack.c.l.b16 %v328
        %v1079 = vunpack.c.h.b16 %v328
        %v1080 = vunpack.c.l.b16 %v329
        %v1081 = vunpack.c.h.b16 %v329
        %v1082 = vunpack.c.l.b16 %v330
        %v1083 = vunpack.c.h.b16 %v330
        %v1084 = vunpack.c.l.b16 %v331
        %v1085 = vunpack.c.h.b16 %v331
        %v1086 = vunpack.c.l.b16 %v332
        %v1087 = vunpack.c.h.b16 %v332
        %v1088 = vunpack.c.l.b16 %v333
        %v1089 = vunpack.c.h.b16 %v333
        %v1090 = vunpack.c.l.b16 %v334
        %v1091 = vunpack.c.h.b16 %v334
        %v1092 = vunpack.c.l.b16 %v335
        %v1093 = vunpack.c.h.b16 %v335
        %v1094 = vunpack.c.l.b16 %v336
        %v1095 = vunpack.c.h.b16 %v336
        %v1096 = vunpack.c.l.b16 %v337
        %v1097 = vunpack.c.h.b16 %v337
        %v1098 = vunpack.c.l.b16 %v338
        %v1099 = vunpack.c.h.b16 %v338
        %v1100 = vunpack.c.l.b16 %v339
        %v1101 = vunpack.c.h.b16 %v339
        %v1102 = vunpack.c.l.b16 %v340
        %v1103 = vunpack.c.h.b16 %v340
        %v1104 = vunpack.c.l.b16 %v341
        %v1105 = vunpack.c.h.b16 %v341
        %v1106 = vunpack.c.l.b16 %v342
        %v1107 = vunpack.c.h.b16 %v342
        %v1108 = vunpack.c.l.b16 %v343
        %v1109 = vunpack.c.h.b16 %v343
        %v1110 = vunpack.c.l.b16 %v344
        %v1111 = vunpack.c.h.b16 %v344
        %v1112 = vunpack.c.l.b16 %v345
        %v1113 = vunpack.c.h.b16 %v345
        %v1114 = vunpack.c.l.b16 %v346
        %v1115 = vunpack.c.h.b16 %v346
        %v1116 = vunpack.c.l.b16 %v347
        %v1117 = vunpack.c.h.b16 %v347
        %v1118 = vunpack.c.l.b16 %v348
        %v1119 = vunpack.c.h.b16 %v348
        %v1120 = vunpack.c.l.b16 %v349
        %v1121 = vunpack.c.h.b16 %v349
        %v1122 = vunpack.c.l.b16 %v350
        %v1123 = vunpack.c.h.b16 %v350
        %v1124 = vunpack.c.l.b16 %v351
        %v1125 = vunpack.c.h.b16 %v351
        %v1126 = vunpack.c.l.b16 %v352
        %v1127 = vunpack.c.h.b16 %v352
        %v1128 = vunpack.c.l.b16 %v353
        %v1129 = vunpack.c.h.b16 %v353
        %v1130 = vunpack.c.l.b16 %v354
        %v1131 = vunpack.c.h.b16 %v354
        %v1132 = vunpack.c.l.b16 %v355
        %v1133 = vunpack.c.h.b16 %v355
        %v1134 = vunpack.c.l.b16 %v356
        %v1135 = vunpack.c.h.b16 %v356
        %v1136 = vunpack.c.l.b16 %v357
        %v1137 = vunpack.c.h.b16 %v357
        %v1138 = vunpack.c.l.b16 %v358
        %v1139 = vunpack.c.h.b16 %v358
        %v1140 = vunpack.c.l.b16 %v359
        %v1141 = vunpack.c.h.b16 %v359
        %v1142 = vunpack.c.l.b16 %v360
        %v1143 = vunpack.c.h.b16 %v360
        %v1144 = vunpack.c.l.b16 %v361
        %v1145 = vunpack.c.h.b16 %v361
        %v1146 = vunpack.c.l.b16 %v362
        %v1147 = vunpack.c.h.b16 %v362
        %v1148 = vunpack.c.l.b16 %v363
        %v1149 = vunpack.c.h.b16 %v363
        %v1150 = vunpack.c.l.b16 %v364
        %v1151 = vunpack.c.h.b16 %v364
        %v1152 = vunpack.c.l.b16 %v365
        %v1153 = vunpack.c.h.b16 %v365
        %v1154 = vunpack.c.l.b16 %v366
        %v1155 = vunpack.c.h.b16 %v366
        %v1156 = vunpack.c.l.b16 %v367
        %v1157 = vunpack.c.h.b16 %v367
        %v1158 = vunpack.c.l.b16 %v368
        %v1159 = vunpack.c.h.b16 %v368
        %v1160 = vunpack.c.l.b16 %v369
        %v1161 = vunpack.c.h.b16 %v369
        %v1162 = vunpack.c.l.b16 %v370
        %v1163 = vunpack.c.h.b16 %v370
        %v1164 = vunpack.c.l.b16 %v371
        %v1165 = vunpack.c.h.b16 %v371
        %v1166 = vunpack.c.l.b16 %v372
        %v1167 = vunpack.c.h.b16 %v372
        %v1168 = vunpack.c.l.b16 %v373
        %v1169 = vunpack.c.h.b16 %v373
        %v1170 = vunpack.c.l.b16 %v374
        %v1171 = vunpack.c.h.b16 %v374
        %v1172 = vunpack.c.l.b16 %v375
        %v1173 = vunpack.c.h.b16 %v375
        %v1174 = vunpack.c.l.b16 %v376
        %v1175 = vunpack.c.h.b16 %v376
        %v1176 = vunpack.c.l.b16 %v377
        %v1177 = vunpack.c.h.b16 %v377
        %v1178 = vunpack.c.l.b16 %v378
        %v1179 = vunpack.c.h.b16 %v378
        %v1180 = vunpack.c.l.b16 %v379
        %v1181 = vunpack.c.h.b16 %v379
        %v1182 = vunpack.c.l.b16 %v380
        %v1183 = vunpack.c.h.b16 %v380
        %v1184 = vunpack.c.l.b16 %v381
        %v1185 = vunpack.c.h.b16 %v381
        %v1186 = vunpack.c.l.b16 %v382
        %v1187 = vunpack.c.h.b16 %v382
        %v1188 = vunpack.c.l.b16 %v383
        %v1189 = vunpack.c.h.b16 %v383
        %v1190 = vunpack.c.l.b16 %v384
        %v1191 = vunpack.c.h.b16 %v384
        %v1192 = vunpack.c.l.b16 %v385
        %v1193 = vunpack.c.h.b16 %v385
        %v1194 = vunpack.c.l.b16 %v386
        %v1195 = vunpack.c.h.b16 %v386
        %v1196 = vunpack.c.l.b16 %v387
        %v1197 = vunpack.c.h.b16 %v387
        %v1198 = vunpack.c.l.b16 %v388
        %v1199 = vunpack.c.h.b16 %v388
        %v1200 = vunpack.c.l.b16 %v389
        %v1201 = vunpack.c.h.b16 %v389
        %v1202 = vunpack.c.l.b16 %v390
        %v1203 = vunpack.c.h.b16 %v390
        %v1204 = vunpack.c.l.b16 %v391
        %v1205 = vunpack.c.h.b16 %v391
        %v1206 = vunpack.c.l.b16 %v392
        %v1207 = vunpack.c.h.b16 %v392
        %v1208 = vunpack.c.l.b16 %v393
        %v1209 = vunpack.c.h.b16 %v393
        %v1210 = vunpack.c.l.b16 %v394
        %v1211 = vunpack.c.h.b16 %v394
        %v1212 = vunpack.c.l.b16 %v395
        %v1213 = vunpack.c.h.b16 %v395
        %v1214 = vunpack.c.l.b16 %v396
        %v1215 = vunpack.c.h.b16 %v396
        %v1216 = vunpack.c.l.b16 %v397
        %v1217 = vunpack.c.h.b16 %v397
        %v1218 = vunpack.c.l.b16 %v398
        %v1219 = vunpack.c.h.b16 %v398
        %v1220 = vunpack.c.l.b16 %v399
        %v1221 = vunpack.c.h.b16 %v399
        %v1222 = vunpack.c.l.b16 %v400
        %v1223 = vunpack.c.h.b16 %v400
        %v1224 = vunpack.c.l.b16 %v401
        %v1225 = vunpack.c.h.b16 %v401
        %v1226 = vunpack.c.l.b16 %v402
        %v1227 = vunpack.c.h.b16 %v402
        %v1228 = vunpack.c.l.b16 %v403
        %v1229 = vunpack.c.h.b16 %v403
        %v1230 = vunpack.c.l.b16 %v404
        %v1231 = vunpack.c.h.b16 %v404
        %v1232 = vunpack.c.l.b16 %v405
        %v1233 = vunpack.c.h.b16 %v405
        %v1234 = vunpack.c.l.b16 %v406
        %v1235 = vunpack.c.h.b16 %v406
        %v1236 = vunpack.c.l.b16 %v407
        %v1237 = vunpack.c.h.b16 %v407
        %v1238 = vunpack.c.l.b16 %v408
        %v1239 = vunpack.c.h.b16 %v408
        %v1240 = vunpack.c.l.b16 %v409
        %v1241 = vunpack.c.h.b16 %v409
        %v1242 = vunpack.c.l.b16 %v410
        %v1243 = vunpack.c.h.b16 %v410
        %v1244 = vunpack.c.l.b16 %v411
        %v1245 = vunpack.c.h.b16 %v411
        %v1246 = vunpack.c.l.b16 %v412
        %v1247 = vunpack.c.h.b16 %v412
        %v1248 = vunpack.c.l.b16 %v413
        %v1249 = vunpack.c.h.b16 %v413
        %v1250 = vunpack.c.l.b16 %v414
        %v1251 = vunpack.c.h.b16 %v414
        %v1252 = vunpack.c.l.b16 %v415
        %v1253 = vunpack.c.h.b16 %v415
        %v1254 = vunpack.c.l.b16 %v416
        %v1255 = vunpack.c.h.b16 %v416
        %v1256 = vunpack.c.l.b16 %v417
        %v1257 = vunpack.c.h.b16 %v417
        %v1258 = vunpack.c.l.b16 %v418
        %v1259 = vunpack.c.h.b16 %v418
        %v1260 = vunpack.c.l.b16 %v419
        %v1261 = vunpack.c.h.b16 %v419
        %v1262 = vunpack.c.l.b16 %v420
        %v1263 = vunpack.c.h.b16 %v420
        %v1264 = vunpack.c.l.b16 %v421
        %v1265 = vunpack.c.h.b16 %v421
        %v1266 = vunpack.c.l.b16 %v422
        %v1267 = vunpack.c.h.b16 %v422
        %v1268 = vunpack.c.l.b16 %v423
        %v1269 = vunpack.c.h.b16 %v423
        %v1270 = vunpack.c.l.b16 %v424
        %v1271 = vunpack.c.h.b16 %v424
        %v1272 = vunpack.c.l.b16 %v425
        %v1273 = vunpack.c.h.b16 %v425
        %v1274 = vunpack.c.l.b16 %v426
        %v1275 = vunpack.c.h.b16 %v426
        %v1276 = vunpack.c.l.b16 %v427
        %v1277 = vunpack.c.h.b16 %v427
        %v1278 = vunpack.c.l.b16 %v428
        %v1279 = vunpack.c.h.b16 %v428
        %v1280 = vunpack.c.l.b16 %v429
        %v1281 = vunpack.c.h.b16 %v429
        %v1282 = vunpack.c.l.b16 %v430
        %v1283 = vunpack.c.h.b16 %v430
        %v1284 = vunpack.c.l.b16 %v431
        %v1285 = vunpack.c.h.b16 %v431
        %v1286 = vunpack.c.l.b16 %v432
        %v1287 = vunpack.c.h.b16 %v432
        %v1288 = vunpack.c.l.b16 %v433
        %v1289 = vunpack.c.h.b16 %v433
        %v1290 = vunpack.c.l.b16 %v434
        %v1291 = vunpack.c.h.b16 %v434
        %v1292 = vunpack.c.l.b16 %v435
        %v1293 = vunpack.c.h.b16 %v435
        %v1294 = vunpack.c.l.b16 %v436
        %v1295 = vunpack.c.h.b16 %v436
        %v1296 = vunpack.c.l.b16 %v437
        %v1297 = vunpack.c.h.b16 %v437
        %v1298 = vunpack.c.l.b16 %v438
        %v1299 = vunpack.c.h.b16 %v438
        %v1300 = vunpack.c.l.b16 %v439
        %v1301 = vunpack.c.h.b16 %v439
        %v1302 = vunpack.c.l.b16 %v440
        %v1303 = vunpack.c.h.b16 %v440
        %v1304 = vunpack.c.l.b16 %v441
        %v1305 = vunpack.c.h.b16 %v441
        %v1306 = vunpack.c.l.b16 %v442
        %v1307 = vunpack.c.h.b16 %v442
        %v1308 = vunpack.c.l.b16 %v443
        %v1309 = vunpack.c.h.b16 %v443
        %v1310 = vunpack.c.l.b16 %v444
        %v1311 = vunpack.c.h.b16 %v444
        %v1312 = vunpack.c.l.b16 %v445
        %v1313 = vunpack.c.h.b16 %v445
        %v1314 = vunpack.c.l.b16 %v446
        %v1315 = vunpack.c.h.b16 %v446
        %v1316 = vunpack.c.l.b16 %v447
        %v1317 = vunpack.c.h.b16 %v447
        %v1318 = vunpack.c.l.b16 %v448
        %v1319 = vunpack.c.h.b16 %v448
        %v1320 = vunpack.c.l.b16 %v449
        %v1321 = vunpack.c.h.b16 %v449
        %v1322 = vunpack.c.l.b16 %v450
        %v1323 = vunpack.c.h.b16 %v450
        %v1324 = vunpack.c.l.b16 %v451
        %v1325 = vunpack.c.h.b16 %v451
        %v1326 = vunpack.c.l.b16 %v452
        %v1327 = vunpack.c.h.b16 %v452
        %v1328 = vunpack.c.l.b16 %v453
        %v1329 = vunpack.c.h.b16 %v453
        %v1330 = vunpack.c.l.b16 %v454
        %v1331 = vunpack.c.h.b16 %v454
        %v1332 = vunpack.c.l.b16 %v455
        %v1333 = vunpack.c.h.b16 %v455
        %v1334 = vunpack.c.l.b16 %v456
        %v1335 = vunpack.c.h.b16 %v456
        %v1336 = vunpack.c.l.b16 %v457
        %v1337 = vunpack.c.h.b16 %v457
        %v1338 = vunpack.c.l.b16 %v458
        %v1339 = vunpack.c.h.b16 %v458
        %v1340 = vunpack.c.l.b16 %v459
        %v1341 = vunpack.c.h.b16 %v459
        %v1342 = vunpack.c.l.b16 %v460
        %v1343 = vunpack.c.h.b16 %v460
        %v1344 = vunpack.c.l.b16 %v461
        %v1345 = vunpack.c.h.b16 %v461
        %v1346 = vunpack.c.l.b16 %v462
        %v1347 = vunpack.c.h.b16 %v462
        %v1348 = vunpack.c.l.b16 %v463
        %v1349 = vunpack.c.h.b16 %v463
        %v1350 = vunpack.c.l.b16 %v464
        %v1351 = vunpack.c.h.b16 %v464
        %v1352 = vunpack.c.l.b16 %v465
        %v1353 = vunpack.c.h.b16 %v465
        %v1354 = vunpack.c.l.b16 %v466
        %v1355 = vunpack.c.h.b16 %v466
        %v1356 = vunpack.c.l.b16 %v467
        %v1357 = vunpack.c.h.b16 %v467
        %v1358 = vunpack.c.l.b16 %v468
        %v1359 = vunpack.c.h.b16 %v468
        %v1360 = vunpack.c.l.b16 %v469
        %v1361 = vunpack.c.h.b16 %v469
        %v1362 = vunpack.c.l.b16 %v470
        %v1363 = vunpack.c.h.b16 %v470
        %v1364 = vunpack.c.l.b16 %v471
        %v1365 = vunpack.c.h.b16 %v471
        %v1366 = vunpack.c.l.b16 %v472
        %v1367 = vunpack.c.h.b16 %v472
        %v1368 = vunpack.c.l.b16 %v473
        %v1369 = vunpack.c.h.b16 %v473
        %v1370 = vunpack.c.l.b16 %v474
        %v1371 = vunpack.c.h.b16 %v474
        %v1372 = vunpack.c.l.b16 %v475
        %v1373 = vunpack.c.h.b16 %v475
        %v1374 = vunpack.c.l.b16 %v476
        %v1375 = vunpack.c.h.b16 %v476
        %v1376 = vunpack.c.l.b16 %v477
        %v1377 = vunpack.c.h.b16 %v477
        %v1378 = vunpack.c.l.b16 %v478
        %v1379 = vunpack.c.h.b16 %v478
        %v1380 = vunpack.c.l.b16 %v479
        %v1381 = vunpack.c.h.b16 %v479
        %v1382 = vunpack.c.l.b16 %v480
        %v1383 = vunpack.c.h.b16 %v480
        %v1384 = vunpack.c.l.b16 %v481
        %v1385 = vunpack.c.h.b16 %v481
        %v1386 = vunpack.c.l.b16 %v482
        %v1387 = vunpack.c.h.b16 %v482
        %v1388 = vunpack.c.l.b16 %v483
        %v1389 = vunpack.c.h.b16 %v483
        %v1390 = vunpack.c.l.b16 %v484
        %v1391 = vunpack.c.h.b16 %v484
        %v1392 = vunpack.c.l.b16 %v485
        %v1393 = vunpack.c.h.b16 %v485
        %v1394 = vunpack.c.l.b16 %v486
        %v1395 = vunpack.c.h.b16 %v486
        %v1396 = vunpack.c.l.b16 %v487
        %v1397 = vunpack.c.h.b16 %v487
        %v1398 = vunpack.c.l.b16 %v488
        %v1399 = vunpack.c.h.b16 %v488
        %v1400 = vunpack.c.l.b16 %v489
        %v1401 = vunpack.c.h.b16 %v489
        %v1402 = vunpack.c.l.b16 %v490
        %v1403 = vunpack.c.h.b16 %v490
        %v1404 = vunpack.c.l.b16 %v491
        %v1405 = vunpack.c.h.b16 %v491
        %v1406 = vunpack.c.l.b16 %v492
        %v1407 = vunpack.c.h.b16 %v492
        %v1408 = vunpack.c.l.b16 %v493
        %v1409 = vunpack.c.h.b16 %v493
        %v1410 = vunpack.c.l.b16 %v494
        %v1411 = vunpack.c.h.b16 %v494
        %v1412 = vunpack.c.l.b16 %v495
        %v1413 = vunpack.c.h.b16 %v495
        %v1414 = vunpack.c.l.b16 %v496
        %v1415 = vunpack.c.h.b16 %v496
        %v1416 = vunpack.c.l.b16 %v497
        %v1417 = vunpack.c.h.b16 %v497
        %v1418 = vunpack.c.l.b16 %v498
        %v1419 = vunpack.c.h.b16 %v498
        %v1420 = vunpack.c.l.b16 %v499
        %v1421 = vunpack.c.h.b16 %v499
        %v1422 = vunpack.c.l.b16 %v500
        %v1423 = vunpack.c.h.b16 %v500
        %v1424 = vunpack.c.l.b16 %v501
        %v1425 = vunpack.c.h.b16 %v501
        %v1426 = vunpack.c.l.b16 %v502
        %v1427 = vunpack.c.h.b16 %v502
        %v1428 = vunpack.c.l.b16 %v503
        %v1429 = vunpack.c.h.b16 %v503
        %v1430 = vunpack.c.l.b16 %v504
        %v1431 = vunpack.c.h.b16 %v504
        %v1432 = vunpack.c.l.b16 %v505
        %v1433 = vunpack.c.h.b16 %v505
        %v1434 = vunpack.c.l.b16 %v506
        %v1435 = vunpack.c.h.b16 %v506
        %v1436 = vunpack.c.l.b16 %v507
        %v1437 = vunpack.c.h.b16 %v507
        %v1438 = vunpack.c.l.b16 %v508
        %v1439 = vunpack.c.h.b16 %v508
        %v1440 = vunpack.c.l.b16 %v509
        %v1441 = vunpack.c.h.b16 %v509
        %v1442 = vunpack.c.l.b16 %v510
        %v1443 = vunpack.c.h.b16 %v510
        %v1444 = vunpack.c.l.b16 %v511
        %v1445 = vunpack.c.h.b16 %v511
        %v1446 = vunpack.c.l.b16 %v512
        %v1447 = vunpack.c.h.b16 %v512
        %v1448 = vunpack.c.l.b16 %v513
        %v1449 = vunpack.c.h.b16 %v513
        %v1450 = vunpack.c.l.b16 %v514
        %v1451 = vunpack.c.h.b16 %v514
        %v1452 = vunpack.c.l.b16 %v515
        %v1453 = vunpack.c.h.b16 %v515
        %v1454 = vunpack.c.l.b16 %v516
        %v1455 = vunpack.c.h.b16 %v516
        %v1456 = vunpack.c.l.b16 %v517
        %v1457 = vunpack.c.h.b16 %v517
        %v1458 = vunpack.c.l.b16 %v518
        %v1459 = vunpack.c.h.b16 %v518
        %v1460 = vunpack.c.l.b16 %v519
        %v1461 = vunpack.c.h.b16 %v519
        %v1462 = vunpack.c.l.b16 %v520
        %v1463 = vunpack.c.h.b16 %v520
        %v1464 = vunpack.c.l.b16 %v521
        %v1465 = vunpack.c.h.b16 %v521
        %v1466 = vpack.c.b16 %v902, %v890
        %v1467 = vpack.c.b16 %v903, %v891
        %v1468 = vpack.c.b16 %v904, %v892
        %v1469 = vpack.c.b16 %v905, %v893
        %v1470 = vpack.c.b16 %v906, %v894
        %v1471 = vpack.c.b16 %v907, %v895
        %v1472 = vpack.c.b16 %v908, %v896
        %v1473 = vpack.c.b16 %v909, %v897
        %v1474 = vpack.c.b16 %v910, %v898
        %v1475 = vpack.c.b16 %v911, %v899
        %v1476 = vpack.c.b16 %v912, %v900
        %v1477 = vpack.c.b16 %v913, %v901
        %v1478 = vpack.c.b16 %v926, %v914
        %v1479 = vpack.c.b16 %v927, %v915
        %v1480 = vpack.c.b16 %v928, %v916
        %v1481 = vpack.c.b16 %v929, %v917
        %v1482 = vpack.c.b16 %v930, %v918
        %v1483 = vpack.c.b16 %v931, %v919
        %v1484 = vpack.c.b16 %v932, %v920
        %v1485 = vpack.c.b16 %v933, %v921
        %v1486 = vpack.c.b16 %v934, %v922
        %v1487 = vpack.c.b16 %v935, %v923
        %v1488 = vpack.c.b16 %v936, %v924
        %v1489 = vpack.c.b16 %v937, %v925
        %v1490 = vpack.c.b16 %v950, %v938
        %v1491 = vpack.c.b16 %v951, %v939
        %v1492 = vpack.c.b16 %v952, %v940
        %v1493 = vpack.c.b16 %v953, %v941
        %v1494 = vpack.c.b16 %v954, %v942
        %v1495 = vpack.c.b16 %v955, %v943
        %v1496 = vpack.c.b16 %v956, %v944
        %v1497 = vpack.c.b16 %v957, %v945
        %v1498 = vpack.c.b16 %v958, %v946
        %v1499 = vpack.c.b16 %v959, %v947
        %v1500 = vpack.c.b16 %v960, %v948
        %v1501 = vpack.c.b16 %v961, %v949
        %v1502 = vpack.c.b16 %v974, %v962
        %v1503 = vpack.c.b16 %v975, %v963
        %v1504 = vpack.c.b16 %v976, %v964
        %v1505 = vpack.c.b16 %v977, %v965
        %v1506 = vpack.c.b16 %v978, %v966
        %v1507 = vpack.c.b16 %v979, %v967
        %v1508 = vpack.c.b16 %v980, %v968
        %v1509 = vpack.c.b16 %v981, %v969
        %v1510 = vpack.c.b16 %v982, %v970
        %v1511 = vpack.c.b16 %v983, %v971
        %v1512 = vpack.c.b16 %v984, %v972
        %v1513 = vpack.c.b16 %v985, %v973
        %v1514 = vpack.c.b16 %v998, %v986
        %v1515 = vpack.c.b16 %v999, %v987
        %v1516 = vpack.c.b16 %v1000, %v988
        %v1517 = vpack.c.b16 %v1001, %v989
        %v1518 = vpack.c.b16 %v1002, %v990
        %v1519 = vpack.c.b16 %v1003, %v991
        %v1520 = vpack.c.b16 %v1004, %v992
        %v1521 = vpack.c.b16 %v1005, %v993
        %v1522 = vpack.c.b16 %v1006, %v994
        %v1523 = vpack.c.b16 %v1007, %v995
        %v1524 = vpack.c.b16 %v1008, %v996
        %v1525 = vpack.c.b16 %v1009, %v997
        %v1526 = vpack.c.b16 %v1022, %v1010
        %v1527 = vpack.c.b16 %v1023, %v1011
        %v1528 = vpack.c.b16 %v1024, %v1012
        %v1529 = vpack.c.b16 %v1025, %v1013
        %v1530 = vpack.c.b16 %v1026, %v1014
        %v1531 = vpack.c.b16 %v1027, %v1015
        %v1532 = vpack.c.b16 %v1028, %v1016
        %v1533 = vpack.c.b16 %v1029, %v1017
        %v1534 = vpack.c.b16 %v1030, %v1018
        %v1535 = vpack.c.b16 %v1031, %v1019
        %v1536 = vpack.c.b16 %v1032, %v1020
        %v1537 = vpack.c.b16 %v1033, %v1021
        %v1538 = vpack.c.b16 %v1046, %v1034
        %v1539 = vpack.c.b16 %v1047, %v1035
        %v1540 = vpack.c.b16 %v1048, %v1036
        %v1541 = vpack.c.b16 %v1049, %v1037
        %v1542 = vpack.c.b16 %v1050, %v1038
        %v1543 = vpack.c.b16 %v1051, %v1039
        %v1544 = vpack.c.b16 %v1052, %v1040
        %v1545 = vpack.c.b16 %v1053, %v1041
        %v1546 = vpack.c.b16 %v1054, %v1042
        %v1547 = vpack.c.b16 %v1055, %v1043
        %v1548 = vpack.c.b16 %v1056, %v1044
        %v1549 = vpack.c.b16 %v1057, %v1045
        %v1550 = vpack.c.b16 %v1070, %v1058
        %v1551 = vpack.c.b16 %v1071, %v1059
        %v1552 = vpack.c.b16 %v1072, %v1060
        %v1553 = vpack.c.b16 %v1073, %v1061
        %v1554 = vpack.c.b16 %v1074, %v1062
        %v1555 = vpack.c.b16 %v1075, %v1063
        %v1556 = vpack.c.b16 %v1076, %v1064
        %v1557 = vpack.c.b16 %v1077, %v1065
        %v1558 = vpack.c.b16 %v1078, %v1066
        %v1559 = vpack.c.b16 %v1079, %v1067
        %v1560 = vpack.c.b16 %v1080, %v1068
        %v1561 = vpack.c.b16 %v1081, %v1069
        %v1562 = vpack.c.b16 %v1094, %v1082
        %v1563 = vpack.c.b16 %v1095, %v1083
        %v1564 = vpack.c.b16 %v1096, %v1084
        %v1565 = vpack.c.b16 %v1097, %v1085
        %v1566 = vpack.c.b16 %v1098, %v1086
        %v1567 = vpack.c.b16 %v1099, %v1087
        %v1568 = vpack.c.b16 %v1100, %v1088
        %v1569 = vpack.c.b16 %v1101, %v1089
        %v1570 = vpack.c.b16 %v1102, %v1090
        %v1571 = vpack.c.b16 %v1103, %v1091
        %v1572 = vpack.c.b16 %v1104, %v1092
        %v1573 = vpack.c.b16 %v1105, %v1093
        %v1574 = vpack.c.b16 %v1118, %v1106
        %v1575 = vpack.c.b16 %v1119, %v1107
        %v1576 = vpack.c.b16 %v1120, %v1108
        %v1577 = vpack.c.b16 %v1121, %v1109
        %v1578 = vpack.c.b16 %v1122, %v1110
        %v1579 = vpack.c.b16 %v1123, %v1111
        %v1580 = vpack.c.b16 %v1124, %v1112
        %v1581 = vpack.c.b16 %v1125, %v1113
        %v1582 = vpack.c.b16 %v1126, %v1114
        %v1583 = vpack.c.b16 %v1127, %v1115
        %v1584 = vpack.c.b16 %v1128, %v1116
        %v1585 = vpack.c.b16 %v1129, %v1117
        %v1586 = vpack.c.b16 %v1142, %v1130
        %v1587 = vpack.c.b16 %v1143, %v1131
        %v1588 = vpack.c.b16 %v1144, %v1132
        %v1589 = vpack.c.b16 %v1145, %v1133
        %v1590 = vpack.c.b16 %v1146, %v1134
        %v1591 = vpack.c.b16 %v1147, %v1135
        %v1592 = vpack.c.b16 %v1148, %v1136
        %v1593 = vpack.c.b16 %v1149, %v1137
        %v1594 = vpack.c.b16 %v1150, %v1138
        %v1595 = vpack.c.b16 %v1151, %v1139
        %v1596 = vpack.c.b16 %v1152, %v1140
        %v1597 = vpack.c.b16 %v1153, %v1141
        %v1598 = vpack.c.b16 %v1166, %v1154
        %v1599 = vpack.c.b16 %v1167, %v1155
        %v1600 = vpack.c.b16 %v1168, %v1156
        %v1601 = vpack.c.b16 %v1169, %v1157
        %v1602 = vpack.c.b16 %v1170, %v1158
        %v1603 = vpack.c.b16 %v1171, %v1159
        %v1604 = vpack.c.b16 %v1172, %v1160
        %v1605 = vpack.c.b16 %v1173, %v1161
        %v1606 = vpack.c.b16 %v1174, %v1162
        %v1607 = vpack.c.b16 %v1175, %v1163
        %v1608 = vpack.c.b16 %v1176, %v1164
        %v1609 = vpack.c.b16 %v1177, %v1165
        %v1610 = vpack.c.b16 %v1190, %v1178
        %v1611 = vpack.c.b16 %v1191, %v1179
        %v1612 = vpack.c.b16 %v1192, %v1180
        %v1613 = vpack.c.b16 %v1193, %v1181
        %v1614 = vpack.c.b16 %v1194, %v1182
        %v1615 = vpack.c.b16 %v1195, %v1183
        %v1616 = vpack.c.b16 %v1196, %v1184
        %v1617 = vpack.c.b16 %v1197, %v1185
        %v1618 = vpack.c.b16 %v1198, %v1186
        %v1619 = vpack.c.b16 %v1199, %v1187
        %v1620 = vpack.c.b16 %v1200, %v1188
        %v1621 = vpack.c.b16 %v1201, %v1189
        %v1622 = vpack.c.b16 %v1214, %v1202
        %v1623 = vpack.c.b16 %v1215, %v1203
        %v1624 = vpack.c.b16 %v1216, %v1204
        %v1625 = vpack.c.b16 %v1217, %v1205
        %v1626 = vpack.c.b16 %v1218, %v1206
        %v1627 = vpack.c.b16 %v1219, %v1207
        %v1628 = vpack.c.b16 %v1220, %v1208
        %v1629 = vpack.c.b16 %v1221, %v1209
        %v1630 = vpack.c.b16 %v1222, %v1210
        %v1631 = vpack.c.b16 %v1223, %v1211
        %v1632 = vpack.c.b16 %v1224, %v1212
        %v1633 = vpack.c.b16 %v1225, %v1213
        %v1634 = vpack.c.b16 %v1238, %v1226
        %v1635 = vpack.c.b16 %v1239, %v1227
        %v1636 = vpack.c.b16 %v1240, %v1228
        %v1637 = vpack.c.b16 %v1241, %v1229
        %v1638 = vpack.c.b16 %v1242, %v1230
        %v1639 = vpack.c.b16 %v1243, %v1231
        %v1640 = vpack.c.b16 %v1244, %v1232
        %v1641 = vpack.c.b16 %v1245, %v1233
        %v1642 = vpack.c.b16 %v1246, %v1234
        %v1643 = vpack.c.b16 %v1247, %v1235
        %v1644 = vpack.c.b16 %v1248, %v1236
        %v1645 = vpack.c.b16 %v1249, %v1237
        %v1646 = vpack.c.b16 %v1262, %v1250
        %v1647 = vpack.c.b16 %v1263, %v1251
        %v1648 = vpack.c.b16 %v1264, %v1252
        %v1649 = vpack.c.b16 %v1265, %v1253
        %v1650 = vpack.c.b16 %v1266, %v1254
        %v1651 = vpack.c.b16 %v1267, %v1255
        %v1652 = vpack.c.b16 %v1268, %v1256
        %v1653 = vpack.c.b16 %v1269, %v1257
        %v1654 = vpack.c.b16 %v1270, %v1258
        %v1655 = vpack.c.b16 %v1271, %v1259
        %v1656 = vpack.c.b16 %v1272, %v1260
        %v1657 = vpack.c.b16 %v1273, %v1261
        %v1658 = vpack.c.b16 %v1286, %v1274
        %v1659 = vpack.c.b16 %v1287, %v1275
        %v1660 = vpack.c.b16 %v1288, %v1276
        %v1661 = vpack.c.b16 %v1289, %v1277
        %v1662 = vpack.c.b16 %v1290, %v1278
        %v1663 = vpack.c.b16 %v1291, %v1279
        %v1664 = vpack.c.b16 %v1292, %v1280
        %v1665 = vpack.c.b16 %v1293, %v1281
        %v1666 = vpack.c.b16 %v1294, %v1282
        %v1667 = vpack.c.b16 %v1295, %v1283
        %v1668 = vpack.c.b16 %v1296, %v1284
        %v1669 = vpack.c.b16 %v1297, %v1285
        %v1670 = vpack.c.b16 %v1310, %v1298
        %v1671 = vpack.c.b16 %v1311, %v1299
        %v1672 = vpack.c.b16 %v1312, %v1300
        %v1673 = vpack.c.b16 %v1313, %v1301
        %v1674 = vpack.c.b16 %v1314, %v1302
        %v1675 = vpack.c.b16 %v1315, %v1303
        %v1676 = vpack.c.b16 %v1316, %v1304
        %v1677 = vpack.c.b16 %v1317, %v1305
        %v1678 = vpack.c.b16 %v1318, %v1306
        %v1679 = vpack.c.b16 %v1319, %v1307
        %v1680 = vpack.c.b16 %v1320, %v1308
        %v1681 = vpack.c.b16 %v1321, %v1309
        %v1682 = vpack.c.b16 %v1334, %v1322
        %v1683 = vpack.c.b16 %v1335, %v1323
        %v1684 = vpack.c.b16 %v1336, %v1324
        %v1685 = vpack.c.b16 %v1337, %v1325
        %v1686 = vpack.c.b16 %v1338, %v1326
        %v1687 = vpack.c.b16 %v1339, %v1327
        %v1688 = vpack.c.b16 %v1340, %v1328
        %v1689 = vpack.c.b16 %v1341, %v1329
        %v1690 = vpack.c.b16 %v1342, %v1330
        %v1691 = vpack.c.b16 %v1343, %v1331
        %v1692 = vpack.c.b16 %v1344, %v1332
        %v1693 = vpack.c.b16 %v1345, %v1333
        %v1694 = vpack.c.b16 %v1358, %v1346
        %v1695 = vpack.c.b16 %v1359, %v1347
        %v1696 = vpack.c.b16 %v1360, %v1348
        %v1697 = vpack.c.b16 %v1361, %v1349
        %v1698 = vpack.c.b16 %v1362, %v1350
        %v1699 = vpack.c.b16 %v1363, %v1351
        %v1700 = vpack.c.b16 %v1364, %v1352
        %v1701 = vpack.c.b16 %v1365, %v1353
        %v1702 = vpack.c.b16 %v1366, %v1354
        %v1703 = vpack.c.b16 %v1367, %v1355
        %v1704 = vpack.c.b16 %v1368, %v1356
        %v1705 = vpack.c.b16 %v1369, %v1357
        %v1706 = vpack.c.b16 %v1382, %v1370
        %v1707 = vpack.c.b16 %v1383, %v1371
        %v1708 = vpack.c.b16 %v1384, %v1372
        %v1709 = vpack.c.b16 %v1385, %v1373
        %v1710 = vpack.c.b16 %v1386, %v1374
        %v1711 = vpack.c.b16 %v1387, %v1375
        %v1712 = vpack.c.b16 %v1388, %v1376
        %v1713 = vpack.c.b16 %v1389, %v1377
        %v1714 = vpack.c.b16 %v1390, %v1378
        %v1715 = vpack.c.b16 %v1391, %v1379
        %v1716 = vpack.c.b16 %v1392, %v1380
        %v1717 = vpack.c.b16 %v1393, %v1381
        %v1718 = vpack.c.b16 %v1406, %v1394
        %v1719 = vpack.c.b16 %v1407, %v1395
        %v1720 = vpack.c.b16 %v1408, %v1396
        %v1721 = vpack.c.b16 %v1409, %v1397
        %v1722 = vpack.c.b16 %v1410, %v1398
        %v1723 = vpack.c.b16 %v1411, %v1399
        %v1724 = vpack.c.b16 %v1412, %v1400
        %v1725 = vpack.c.b16 %v1413, %v1401
        %v1726 = vpack.c.b16 %v1414, %v1402
        %v1727 = vpack.c.b16 %v1415, %v1403
        %v1728 = vpack.c.b16 %v1416, %v1404
        %v1729 = vpack.c.b16 %v1417, %v1405
        %v1730 = vpack.c.b16 %v1430, %v1418
        %v1731 = vpack.c.b16 %v1431, %v1419
        %v1732 = vpack.c.b16 %v1432, %v1420
        %v1733 = vpack.c.b16 %v1433, %v1421
        %v1734 = vpack.c.b16 %v1434, %v1422
        %v1735 = vpack.c.b16 %v1435, %v1423
        %v1736 = vpack.c.b16 %v1436, %v1424
        %v1737 = vpack.c.b16 %v1437, %v1425
        %v1738 = vpack.c.b16 %v1438, %v1426
        %v1739 = vpack.c.b16 %v1439, %v1427
        %v1740 = vpack.c.b16 %v1440, %v1428
        %v1741 = vpack.c.b16 %v1441, %v1429
        %v1742 = vpack.c.b16 %v1454, %v1442
        %v1743 = vpack.c.b16 %v1455, %v1443
        %v1744 = vpack.c.b16 %v1456, %v1444
        %v1745 = vpack.c.b16 %v1457, %v1445
        %v1746 = vpack.c.b16 %v1458, %v1446
        %v1747 = vpack.c.b16 %v1459, %v1447
        %v1748 = vpack.c.b16 %v1460, %v1448
        %v1749 = vpack.c.b16 %v1461, %v1449
        %v1750 = vpack.c.b16 %v1462, %v1450
        %v1751 = vpack.c.b16 %v1463, %v1451
        %v1752 = vpack.c.b16 %v1464, %v1452
        %v1753 = vpack.c.b16 %v1465, %v1453
        %2042 = vmatprep.subr.bf16.mxu0 %v1467
        %2043 = vmatpush1.bf16.msra.mxu0 %v1466
        %2044 = vmatprep.subr.bf16.mxu0 %v1479
        %2045 = vmatpush1.bf16.msra.mxu0 %v1478
        %2046 = vmatprep.subr.bf16.mxu0 %v1491
        %2047 = vmatpush1.bf16.msra.mxu0 %v1490
        %2048 = vmatprep.subr.bf16.mxu0 %v1503
        %2049 = vmatpush1.bf16.msra.mxu0 %v1502
        %2050 = vmatprep.subr.bf16.mxu0 %v1515
        %2051 = vmatpush1.bf16.msra.mxu0 %v1514
        %2052 = vmatprep.subr.bf16.mxu0 %v1527
        %2053 = vmatpush1.bf16.msra.mxu0 %v1526
        %2054 = vmatprep.subr.bf16.mxu0 %v1539
        %2055 = vmatpush1.bf16.msra.mxu0 %v1538
        %2056 = vmatprep.subr.bf16.mxu0 %v1551
        %2057 = vmatpush1.bf16.msra.mxu0 %v1550
        %2058 = vmatprep.subr.bf16.mxu0 %v1563
        %2059 = vmatpush1.bf16.msra.mxu0 %v1562
        %2060 = vmatprep.subr.bf16.mxu0 %v1575
        %2061 = vmatpush1.bf16.msra.mxu0 %v1574
        %2062 = vmatprep.subr.bf16.mxu0 %v1587
        %2063 = vmatpush1.bf16.msra.mxu0 %v1586
        %2064 = vmatprep.subr.bf16.mxu0 %v1599
        %2065 = vmatpush1.bf16.msra.mxu0 %v1598
        %2066 = vmatprep.subr.bf16.mxu0 %v1611
        %2067 = vmatpush1.bf16.msra.mxu0 %v1610
        %2068 = vmatprep.subr.bf16.mxu0 %v1623
        %2069 = vmatpush1.bf16.msra.mxu0 %v1622
        %2070 = vmatprep.subr.bf16.mxu0 %v1635
        %2071 = vmatpush1.bf16.msra.mxu0 %v1634
        %2072 = vmatprep.subr.bf16.mxu0 %v1647
        %2073 = vmatpush1.bf16.msra.mxu0 %v1646
        %2074 = vmatprep.mubr.bf16.mxu0 %v597
        %2075 = vmatmul.mubr.bf16.gmra.mrb[0].mxu0 %v596
        %v2076 = vpop.f32.mrb[0].mxu0
        %v2077 = vadd.f32 %v529, %v2076
        %v2078 = vpop.f32.mrb[0].mxu0
        %v2079 = vadd.f32 %v533, %v2078
        %v2080 = vpop.f32.mrb[0].mxu0
        %v2081 = vadd.f32 %v529, %v2080
        %v2082 = vpop.f32.mrb[0].mxu0
        %v2083 = vadd.f32 %v533, %v2082
        %2084 = vdwg.mxu0
        %2085 = vmatprep.subr.bf16.mxu0 %v1659
        %2086 = vmatpush1.bf16.msra.mxu0 %v1658
        %2087 = vmatprep.subr.bf16.mxu0 %v1671
        %2088 = vmatpush1.bf16.msra.mxu0 %v1670
        %2089 = vmatprep.subr.bf16.mxu0 %v1683
        %2090 = vmatpush1.bf16.msra.mxu0 %v1682
        %2091 = vmatprep.subr.bf16.mxu0 %v1695
        %2092 = vmatpush1.bf16.msra.mxu0 %v1694
        %2093 = vmatprep.subr.bf16.mxu0 %v1707
        %2094 = vmatpush1.bf16.msra.mxu0 %v1706
        %2095 = vmatprep.subr.bf16.mxu0 %v1719
        %2096 = vmatpush1.bf16.msra.mxu0 %v1718
        %2097 = vmatprep.subr.bf16.mxu0 %v1731
        %2098 = vmatpush1.bf16.msra.mxu0 %v1730
        %2099 = vmatprep.subr.bf16.mxu0 %v1743
        %2100 = vmatpush1.bf16.msra.mxu0 %v1742
        %2101 = vmatprep.subr.bf16.mxu0 0
        %2102 = vmatpush1.bf16.msra.mxu0 0
        %2103 = vmatprep.subr.bf16.mxu0 0
        %2104 = vmatpush1.bf16.msra.mxu0 0
        %2105 = vmatprep.subr.bf16.mxu0 0
        %2106 = vmatpush1.bf16.msra.mxu0 0
        %2107 = vmatprep.subr.bf16.mxu0 0
        %2108 = vmatpush1.bf16.msra.mxu0 0
        %2109 = vmatprep.subr.bf16.mxu0 0
        %2110 = vmatpush1.bf16.msra.mxu0 0
        %2111 = vmatprep.subr.bf16.mxu0 0
        %2112 = vmatpush1.bf16.msra.mxu0 0
        %2113 = vmatprep.subr.bf16.mxu0 0
        %2114 = vmatpush1.bf16.msra.mxu0 0
        %2115 = vmatprep.subr.bf16.mxu0 0
        %2116 = vmatpush1.bf16.msra.mxu0 0
        %2117 = vmatprep.mubr.bf16.mxu0 0
        %2118 = vmatmul.mubr.bf16.gmra.mrb[0].mxu0 %v598
        %v2119 = vpop.f32.mrb[0].mxu0
        %v2120 = vadd.f32 %v2077, %v2119
        %v2121 = vpop.f32.mrb[0].mxu0
        %v2122 = vadd.f32 %v2079, %v2121
        %v2123 = vpop.f32.mrb[0].mxu0
        %v2124 = vadd.f32 %v2081, %v2123
        %v2125 = vpop.f32.mrb[0].mxu0
        %v2126 = vadd.f32 %v2083, %v2125
        %2127 = vdwg.mxu0
        %2128 = vmatprep.subr.bf16.mxu0 %v1469
        %2129 = vmatpush1.bf16.msra.mxu0 %v1468
        %2130 = vmatprep.subr.bf16.mxu0 %v1481
        %2131 = vmatpush1.bf16.msra.mxu0 %v1480
        %2132 = vmatprep.subr.bf16.mxu0 %v1493
        %2133 = vmatpush1.bf16.msra.mxu0 %v1492
        %2134 = vmatprep.subr.bf16.mxu0 %v1505
        %2135 = vmatpush1.bf16.msra.mxu0 %v1504
        %2136 = vmatprep.subr.bf16.mxu0 %v1517
        %2137 = vmatpush1.bf16.msra.mxu0 %v1516
        %2138 = vmatprep.subr.bf16.mxu0 %v1529
        %2139 = vmatpush1.bf16.msra.mxu0 %v1528
        %2140 = vmatprep.subr.bf16.mxu0 %v1541
        %2141 = vmatpush1.bf16.msra.mxu0 %v1540
        %2142 = vmatprep.subr.bf16.mxu0 %v1553
        %2143 = vmatpush1.bf16.msra.mxu0 %v1552
        %2144 = vmatprep.subr.bf16.mxu0 %v1565
        %2145 = vmatpush1.bf16.msra.mxu0 %v1564
        %2146 = vmatprep.subr.bf16.mxu0 %v1577
        %2147 = vmatpush1.bf16.msra.mxu0 %v1576
        %2148 = vmatprep.subr.bf16.mxu0 %v1589
        %2149 = vmatpush1.bf16.msra.mxu0 %v1588
        %2150 = vmatprep.subr.bf16.mxu0 %v1601
        %2151 = vmatpush1.bf16.msra.mxu0 %v1600
        %2152 = vmatprep.subr.bf16.mxu0 %v1613
        %2153 = vmatpush1.bf16.msra.mxu0 %v1612
        %2154 = vmatprep.subr.bf16.mxu0 %v1625
        %2155 = vmatpush1.bf16.msra.mxu0 %v1624
        %2156 = vmatprep.subr.bf16.mxu0 %v1637
        %2157 = vmatpush1.bf16.msra.mxu0 %v1636
        %2158 = vmatprep.subr.bf16.mxu0 %v1649
        %2159 = vmatpush1.bf16.msra.mxu0 %v1648
        %2160 = vmatprep.mubr.bf16.mxu0 %v597
        %2161 = vmatmul.mubr.bf16.gmra.mrb[0].mxu0 %v596
        %v2162 = vpop.f32.mrb[0].mxu0
        %v2163 = vadd.f32 %v537, %v2162
        %v2164 = vpop.f32.mrb[0].mxu0
        %v2165 = vadd.f32 %v541, %v2164
        %v2166 = vpop.f32.mrb[0].mxu0
        %v2167 = vadd.f32 %v537, %v2166
        %v2168 = vpop.f32.mrb[0].mxu0
        %v2169 = vadd.f32 %v541, %v2168
        %2170 = vdwg.mxu0
        %2171 = vmatprep.subr.bf16.mxu0 %v1661
        %2172 = vmatpush1.bf16.msra.mxu0 %v1660
        %2173 = vmatprep.subr.bf16.mxu0 %v1673
        %2174 = vmatpush1.bf16.msra.mxu0 %v1672
        %2175 = vmatprep.subr.bf16.mxu0 %v1685
        %2176 = vmatpush1.bf16.msra.mxu0 %v1684
        %2177 = vmatprep.subr.bf16.mxu0 %v1697
        %2178 = vmatpush1.bf16.msra.mxu0 %v1696
        %2179 = vmatprep.subr.bf16.mxu0 %v1709
        %2180 = vmatpush1.bf16.msra.mxu0 %v1708
        %2181 = vmatprep.subr.bf16.mxu0 %v1721
        %2182 = vmatpush1.bf16.msra.mxu0 %v1720
        %2183 = vmatprep.subr.bf16.mxu0 %v1733
        %2184 = vmatpush1.bf16.msra.mxu0 %v1732
        %2185 = vmatprep.subr.bf16.mxu0 %v1745
        %2186 = vmatpush1.bf16.msra.mxu0 %v1744
        %2187 = vmatprep.subr.bf16.mxu0 0
        %2188 = vmatpush1.bf16.msra.mxu0 0
        %2189 = vmatprep.subr.bf16.mxu0 0
        %2190 = vmatpush1.bf16.msra.mxu0 0
        %2191 = vmatprep.subr.bf16.mxu0 0
        %2192 = vmatpush1.bf16.msra.mxu0 0
        %2193 = vmatprep.subr.bf16.mxu0 0
        %2194 = vmatpush1.bf16.msra.mxu0 0
        %2195 = vmatprep.subr.bf16.mxu0 0
        %2196 = vmatpush1.bf16.msra.mxu0 0
        %2197 = vmatprep.subr.bf16.mxu0 0
        %2198 = vmatpush1.bf16.msra.mxu0 0
        %2199 = vmatprep.subr.bf16.mxu0 0
        %2200 = vmatpush1.bf16.msra.mxu0 0
        %2201 = vmatprep.subr.bf16.mxu0 0
        %2202 = vmatpush1.bf16.msra.mxu0 0
        %2203 = vmatprep.mubr.bf16.mxu0 0
        %2204 = vmatmul.mubr.bf16.gmra.mrb[0].mxu0 %v598
        %v2205 = vpop.f32.mrb[0].mxu0
        %v2206 = vadd.f32 %v2163, %v2205
        %v2207 = vpop.f32.mrb[0].mxu0
        %v2208 = vadd.f32 %v2165, %v2207
        %v2209 = vpop.f32.mrb[0].mxu0
        %v2210 = vadd.f32 %v2167, %v2209
        %v2211 = vpop.f32.mrb[0].mxu0
        %v2212 = vadd.f32 %v2169, %v2211
        %2213 = vdwg.mxu0
        %2214 = vmatprep.subr.bf16.mxu0 %v1471
        %2215 = vmatpush1.bf16.msra.mxu0 %v1470
        %2216 = vmatprep.subr.bf16.mxu0 %v1483
        %2217 = vmatpush1.bf16.msra.mxu0 %v1482
        %2218 = vmatprep.subr.bf16.mxu0 %v1495
        %2219 = vmatpush1.bf16.msra.mxu0 %v1494
        %2220 = vmatprep.subr.bf16.mxu0 %v1507
        %2221 = vmatpush1.bf16.msra.mxu0 %v1506
        %2222 = vmatprep.subr.bf16.mxu0 %v1519
        %2223 = vmatpush1.bf16.msra.mxu0 %v1518
        %2224 = vmatprep.subr.bf16.mxu0 %v1531
        %2225 = vmatpush1.bf16.msra.mxu0 %v1530
        %2226 = vmatprep.subr.bf16.mxu0 %v1543
        %2227 = vmatpush1.bf16.msra.mxu0 %v1542
        %2228 = vmatprep.subr.bf16.mxu0 %v1555
        %2229 = vmatpush1.bf16.msra.mxu0 %v1554
        %2230 = vmatprep.subr.bf16.mxu0 %v1567
        %2231 = vmatpush1.bf16.msra.mxu0 %v1566
        %2232 = vmatprep.subr.bf16.mxu0 %v1579
        %2233 = vmatpush1.bf16.msra.mxu0 %v1578
        %2234 = vmatprep.subr.bf16.mxu0 %v1591
        %2235 = vmatpush1.bf16.msra.mxu0 %v1590
        %2236 = vmatprep.subr.bf16.mxu0 %v1603
        %2237 = vmatpush1.bf16.msra.mxu0 %v1602
        %2238 = vmatprep.subr.bf16.mxu0 %v1615
        %2239 = vmatpush1.bf16.msra.mxu0 %v1614
        %2240 = vmatprep.subr.bf16.mxu0 %v1627
        %2241 = vmatpush1.bf16.msra.mxu0 %v1626
        %2242 = vmatprep.subr.bf16.mxu0 %v1639
        %2243 = vmatpush1.bf16.msra.mxu0 %v1638
        %2244 = vmatprep.subr.bf16.mxu0 %v1651
        %2245 = vmatpush1.bf16.msra.mxu0 %v1650
        %2246 = vmatprep.mubr.bf16.mxu0 %v597
        %2247 = vmatmul.mubr.bf16.gmra.mrb[0].mxu0 %v596
        %v2248 = vpop.f32.mrb[0].mxu0
        %v2249 = vadd.f32 %v545, %v2248
        %v2250 = vpop.f32.mrb[0].mxu0
        %v2251 = vadd.f32 %v549, %v2250
        %v2252 = vpop.f32.mrb[0].mxu0
        %v2253 = vadd.f32 %v545, %v2252
        %v2254 = vpop.f32.mrb[0].mxu0
        %v2255 = vadd.f32 %v549, %v2254
        %2256 = vdwg.mxu0
        %2257 = vmatprep.subr.bf16.mxu0 %v1663
        %2258 = vmatpush1.bf16.msra.mxu0 %v1662
        %2259 = vmatprep.subr.bf16.mxu0 %v1675
        %2260 = vmatpush1.bf16.msra.mxu0 %v1674
        %2261 = vmatprep.subr.bf16.mxu0 %v1687
        %2262 = vmatpush1.bf16.msra.mxu0 %v1686
        %2263 = vmatprep.subr.bf16.mxu0 %v1699
        %2264 = vmatpush1.bf16.msra.mxu0 %v1698
        %2265 = vmatprep.subr.bf16.mxu0 %v1711
        %2266 = vmatpush1.bf16.msra.mxu0 %v1710
        %2267 = vmatprep.subr.bf16.mxu0 %v1723
        %2268 = vmatpush1.bf16.msra.mxu0 %v1722
        %2269 = vmatprep.subr.bf16.mxu0 %v1735
        %2270 = vmatpush1.bf16.msra.mxu0 %v1734
        %2271 = vmatprep.subr.bf16.mxu0 %v1747
        %2272 = vmatpush1.bf16.msra.mxu0 %v1746
        %2273 = vmatprep.subr.bf16.mxu0 0
        %2274 = vmatpush1.bf16.msra.mxu0 0
        %2275 = vmatprep.subr.bf16.mxu0 0
        %2276 = vmatpush1.bf16.msra.mxu0 0
        %2277 = vmatprep.subr.bf16.mxu0 0
        %2278 = vmatpush1.bf16.msra.mxu0 0
        %2279 = vmatprep.subr.bf16.mxu0 0
        %2280 = vmatpush1.bf16.msra.mxu0 0
        %2281 = vmatprep.subr.bf16.mxu0 0
        %2282 = vmatpush1.bf16.msra.mxu0 0
        %2283 = vmatprep.subr.bf16.mxu0 0
        %2284 = vmatpush1.bf16.msra.mxu0 0
        %2285 = vmatprep.subr.bf16.mxu0 0
        %2286 = vmatpush1.bf16.msra.mxu0 0
        %2287 = vmatprep.subr.bf16.mxu0 0
        %2288 = vmatpush1.bf16.msra.mxu0 0
        %2289 = vmatprep.mubr.bf16.mxu0 0
        %2290 = vmatmul.mubr.bf16.gmra.mrb[0].mxu0 %v598
        %v2291 = vpop.f32.mrb[0].mxu0
        %v2292 = vadd.f32 %v2249, %v2291
        %v2293 = vpop.f32.mrb[0].mxu0
        %v2294 = vadd.f32 %v2251, %v2293
        %v2295 = vpop.f32.mrb[0].mxu0
        %v2296 = vadd.f32 %v2253, %v2295
        %v2297 = vpop.f32.mrb[0].mxu0
        %v2298 = vadd.f32 %v2255, %v2297
        %2299 = vdwg.mxu0
        %2300 = vmatprep.subr.bf16.mxu0 %v1473
        %2301 = vmatpush1.bf16.msra.mxu0 %v1472
        %2302 = vmatprep.subr.bf16.mxu0 %v1485
        %2303 = vmatpush1.bf16.msra.mxu0 %v1484
        %2304 = vmatprep.subr.bf16.mxu0 %v1497
        %2305 = vmatpush1.bf16.msra.mxu0 %v1496
        %2306 = vmatprep.subr.bf16.mxu0 %v1509
        %2307 = vmatpush1.bf16.msra.mxu0 %v1508
        %2308 = vmatprep.subr.bf16.mxu0 %v1521
        %2309 = vmatpush1.bf16.msra.mxu0 %v1520
        %2310 = vmatprep.subr.bf16.mxu0 %v1533
        %2311 = vmatpush1.bf16.msra.mxu0 %v1532
        %2312 = vmatprep.subr.bf16.mxu0 %v1545
        %2313 = vmatpush1.bf16.msra.mxu0 %v1544
        %2314 = vmatprep.subr.bf16.mxu0 %v1557
        %2315 = vmatpush1.bf16.msra.mxu0 %v1556
        %2316 = vmatprep.subr.bf16.mxu0 %v1569
        %2317 = vmatpush1.bf16.msra.mxu0 %v1568
        %2318 = vmatprep.subr.bf16.mxu0 %v1581
        %2319 = vmatpush1.bf16.msra.mxu0 %v1580
        %2320 = vmatprep.subr.bf16.mxu0 %v1593
        %2321 = vmatpush1.bf16.msra.mxu0 %v1592
        %2322 = vmatprep.subr.bf16.mxu0 %v1605
        %2323 = vmatpush1.bf16.msra.mxu0 %v1604
        %2324 = vmatprep.subr.bf16.mxu0 %v1617
        %2325 = vmatpush1.bf16.msra.mxu0 %v1616
        %2326 = vmatprep.subr.bf16.mxu0 %v1629
        %2327 = vmatpush1.bf16.msra.mxu0 %v1628
        %2328 = vmatprep.subr.bf16.mxu0 %v1641
        %2329 = vmatpush1.bf16.msra.mxu0 %v1640
        %2330 = vmatprep.subr.bf16.mxu0 %v1653
        %2331 = vmatpush1.bf16.msra.mxu0 %v1652
        %2332 = vmatprep.mubr.bf16.mxu0 %v597
        %2333 = vmatmul.mubr.bf16.gmra.mrb[0].mxu0 %v596
        %v2334 = vpop.f32.mrb[0].mxu0
        %v2335 = vadd.f32 %v553, %v2334
        %v2336 = vpop.f32.mrb[0].mxu0
        %v2337 = vadd.f32 %v557, %v2336
        %v2338 = vpop.f32.mrb[0].mxu0
        %v2339 = vadd.f32 %v553, %v2338
        %v2340 = vpop.f32.mrb[0].mxu0
        %v2341 = vadd.f32 %v557, %v2340
        %2342 = vdwg.mxu0
        %2343 = vmatprep.subr.bf16.mxu0 %v1665
        %2344 = vmatpush1.bf16.msra.mxu0 %v1664
        %2345 = vmatprep.subr.bf16.mxu0 %v1677
        %2346 = vmatpush1.bf16.msra.mxu0 %v1676
        %2347 = vmatprep.subr.bf16.mxu0 %v1689
        %2348 = vmatpush1.bf16.msra.mxu0 %v1688
        %2349 = vmatprep.subr.bf16.mxu0 %v1701
        %2350 = vmatpush1.bf16.msra.mxu0 %v1700
        %2351 = vmatprep.subr.bf16.mxu0 %v1713
        %2352 = vmatpush1.bf16.msra.mxu0 %v1712
        %2353 = vmatprep.subr.bf16.mxu0 %v1725
        %2354 = vmatpush1.bf16.msra.mxu0 %v1724
        %2355 = vmatprep.subr.bf16.mxu0 %v1737
        %2356 = vmatpush1.bf16.msra.mxu0 %v1736
        %2357 = vmatprep.subr.bf16.mxu0 %v1749
        %2358 = vmatpush1.bf16.msra.mxu0 %v1748
        %2359 = vmatprep.subr.bf16.mxu0 0
        %2360 = vmatpush1.bf16.msra.mxu0 0
        %2361 = vmatprep.subr.bf16.mxu0 0
        %2362 = vmatpush1.bf16.msra.mxu0 0
        %2363 = vmatprep.subr.bf16.mxu0 0
        %2364 = vmatpush1.bf16.msra.mxu0 0
        %2365 = vmatprep.subr.bf16.mxu0 0
        %2366 = vmatpush1.bf16.msra.mxu0 0
        %2367 = vmatprep.subr.bf16.mxu0 0
        %2368 = vmatpush1.bf16.msra.mxu0 0
        %2369 = vmatprep.subr.bf16.mxu0 0
        %2370 = vmatpush1.bf16.msra.mxu0 0
        %2371 = vmatprep.subr.bf16.mxu0 0
        %2372 = vmatpush1.bf16.msra.mxu0 0
        %2373 = vmatprep.subr.bf16.mxu0 0
        %2374 = vmatpush1.bf16.msra.mxu0 0
        %2375 = vmatprep.mubr.bf16.mxu0 0
        %2376 = vmatmul.mubr.bf16.gmra.mrb[0].mxu0 %v598
        %v2377 = vpop.f32.mrb[0].mxu0
        %v2378 = vadd.f32 %v2335, %v2377
        %v2379 = vpop.f32.mrb[0].mxu0
        %v2380 = vadd.f32 %v2337, %v2379
        %v2381 = vpop.f32.mrb[0].mxu0
        %v2382 = vadd.f32 %v2339, %v2381
        %v2383 = vpop.f32.mrb[0].mxu0
        %v2384 = vadd.f32 %v2341, %v2383
        %2385 = vdwg.mxu0
        %2386 = vmatprep.subr.bf16.mxu0 %v1475
        %2387 = vmatpush1.bf16.msra.mxu0 %v1474
        %2388 = vmatprep.subr.bf16.mxu0 %v1487
        %2389 = vmatpush1.bf16.msra.mxu0 %v1486
        %2390 = vmatprep.subr.bf16.mxu0 %v1499
        %2391 = vmatpush1.bf16.msra.mxu0 %v1498
        %2392 = vmatprep.subr.bf16.mxu0 %v1511
        %2393 = vmatpush1.bf16.msra.mxu0 %v1510
        %2394 = vmatprep.subr.bf16.mxu0 %v1523
        %2395 = vmatpush1.bf16.msra.mxu0 %v1522
        %2396 = vmatprep.subr.bf16.mxu0 %v1535
        %2397 = vmatpush1.bf16.msra.mxu0 %v1534
        %2398 = vmatprep.subr.bf16.mxu0 %v1547
        %2399 = vmatpush1.bf16.msra.mxu0 %v1546
        %2400 = vmatprep.subr.bf16.mxu0 %v1559
        %2401 = vmatpush1.bf16.msra.mxu0 %v1558
        %2402 = vmatprep.subr.bf16.mxu0 %v1571
        %2403 = vmatpush1.bf16.msra.mxu0 %v1570
        %2404 = vmatprep.subr.bf16.mxu0 %v1583
        %2405 = vmatpush1.bf16.msra.mxu0 %v1582
        %2406 = vmatprep.subr.bf16.mxu0 %v1595
        %2407 = vmatpush1.bf16.msra.mxu0 %v1594
        %2408 = vmatprep.subr.bf16.mxu0 %v1607
        %2409 = vmatpush1.bf16.msra.mxu0 %v1606
        %2410 = vmatprep.subr.bf16.mxu0 %v1619
        %2411 = vmatpush1.bf16.msra.mxu0 %v1618
        %2412 = vmatprep.subr.bf16.mxu0 %v1631
        %2413 = vmatpush1.bf16.msra.mxu0 %v1630
        %2414 = vmatprep.subr.bf16.mxu0 %v1643
        %2415 = vmatpush1.bf16.msra.mxu0 %v1642
        %2416 = vmatprep.subr.bf16.mxu0 %v1655
        %2417 = vmatpush1.bf16.msra.mxu0 %v1654
        %2418 = vmatprep.mubr.bf16.mxu0 %v597
        %2419 = vmatmul.mubr.bf16.gmra.mrb[0].mxu0 %v596
        %v2420 = vpop.f32.mrb[0].mxu0
        %v2421 = vadd.f32 %v561, %v2420
        %v2422 = vpop.f32.mrb[0].mxu0
        %v2423 = vadd.f32 %v565, %v2422
        %v2424 = vpop.f32.mrb[0].mxu0
        %v2425 = vadd.f32 %v561, %v2424
        %v2426 = vpop.f32.mrb[0].mxu0
        %v2427 = vadd.f32 %v565, %v2426
        %2428 = vdwg.mxu0
        %2429 = vmatprep.subr.bf16.mxu0 %v1667
        %2430 = vmatpush1.bf16.msra.mxu0 %v1666
        %2431 = vmatprep.subr.bf16.mxu0 %v1679
        %2432 = vmatpush1.bf16.msra.mxu0 %v1678
        %2433 = vmatprep.subr.bf16.mxu0 %v1691
        %2434 = vmatpush1.bf16.msra.mxu0 %v1690
        %2435 = vmatprep.subr.bf16.mxu0 %v1703
        %2436 = vmatpush1.bf16.msra.mxu0 %v1702
        %2437 = vmatprep.subr.bf16.mxu0 %v1715
        %2438 = vmatpush1.bf16.msra.mxu0 %v1714
        %2439 = vmatprep.subr.bf16.mxu0 %v1727
        %2440 = vmatpush1.bf16.msra.mxu0 %v1726
        %2441 = vmatprep.subr.bf16.mxu0 %v1739
        %2442 = vmatpush1.bf16.msra.mxu0 %v1738
        %2443 = vmatprep.subr.bf16.mxu0 %v1751
        %2444 = vmatpush1.bf16.msra.mxu0 %v1750
        %2445 = vmatprep.subr.bf16.mxu0 0
        %2446 = vmatpush1.bf16.msra.mxu0 0
        %2447 = vmatprep.subr.bf16.mxu0 0
        %2448 = vmatpush1.bf16.msra.mxu0 0
        %2449 = vmatprep.subr.bf16.mxu0 0
        %2450 = vmatpush1.bf16.msra.mxu0 0
        %2451 = vmatprep.subr.bf16.mxu0 0
        %2452 = vmatpush1.bf16.msra.mxu0 0
        %2453 = vmatprep.subr.bf16.mxu0 0
        %2454 = vmatpush1.bf16.msra.mxu0 0
        %2455 = vmatprep.subr.bf16.mxu0 0
        %2456 = vmatpush1.bf16.msra.mxu0 0
        %2457 = vmatprep.subr.bf16.mxu0 0
        %2458 = vmatpush1.bf16.msra.mxu0 0
        %2459 = vmatprep.subr.bf16.mxu0 0
        %2460 = vmatpush1.bf16.msra.mxu0 0
        %2461 = vmatprep.mubr.bf16.mxu0 0
        %2462 = vmatmul.mubr.bf16.gmra.mrb[0].mxu0 %v598
        %v2463 = vpop.f32.mrb[0].mxu0
        %v2464 = vadd.f32 %v2421, %v2463
        %v2465 = vpop.f32.mrb[0].mxu0
        %v2466 = vadd.f32 %v2423, %v2465
        %v2467 = vpop.f32.mrb[0].mxu0
        %v2468 = vadd.f32 %v2425, %v2467
        %v2469 = vpop.f32.mrb[0].mxu0
        %v2470 = vadd.f32 %v2427, %v2469
        %2471 = vdwg.mxu0
        %2472 = vmatprep.subr.bf16.mxu0 %v1477
        %2473 = vmatpush1.bf16.msra.mxu0 %v1476
        %2474 = vmatprep.subr.bf16.mxu0 %v1489
        %2475 = vmatpush1.bf16.msra.mxu0 %v1488
        %2476 = vmatprep.subr.bf16.mxu0 %v1501
        %2477 = vmatpush1.bf16.msra.mxu0 %v1500
        %2478 = vmatprep.subr.bf16.mxu0 %v1513
        %2479 = vmatpush1.bf16.msra.mxu0 %v1512
        %2480 = vmatprep.subr.bf16.mxu0 %v1525
        %2481 = vmatpush1.bf16.msra.mxu0 %v1524
        %2482 = vmatprep.subr.bf16.mxu0 %v1537
        %2483 = vmatpush1.bf16.msra.mxu0 %v1536
        %2484 = vmatprep.subr.bf16.mxu0 %v1549
        %2485 = vmatpush1.bf16.msra.mxu0 %v1548
        %2486 = vmatprep.subr.bf16.mxu0 %v1561
        %2487 = vmatpush1.bf16.msra.mxu0 %v1560
        %2488 = vmatprep.subr.bf16.mxu0 %v1573
        %2489 = vmatpush1.bf16.msra.mxu0 %v1572
        %2490 = vmatprep.subr.bf16.mxu0 %v1585
        %2491 = vmatpush1.bf16.msra.mxu0 %v1584
        %2492 = vmatprep.subr.bf16.mxu0 %v1597
        %2493 = vmatpush1.bf16.msra.mxu0 %v1596
        %2494 = vmatprep.subr.bf16.mxu0 %v1609
        %2495 = vmatpush1.bf16.msra.mxu0 %v1608
        %2496 = vmatprep.subr.bf16.mxu0 %v1621
        %2497 = vmatpush1.bf16.msra.mxu0 %v1620
        %2498 = vmatprep.subr.bf16.mxu0 %v1633
        %2499 = vmatpush1.bf16.msra.mxu0 %v1632
        %2500 = vmatprep.subr.bf16.mxu0 %v1645
        %2501 = vmatpush1.bf16.msra.mxu0 %v1644
        %2502 = vmatprep.subr.bf16.mxu0 %v1657
        %2503 = vmatpush1.bf16.msra.mxu0 %v1656
        %2504 = vmatprep.mubr.bf16.mxu0 %v597
        %2505 = vmatmul.mubr.bf16.gmra.mrb[0].mxu0 %v596
        %v2506 = vpop.f32.mrb[0].mxu0
        %v2507 = vadd.f32 %v569, %v2506
        %v2508 = vpop.f32.mrb[0].mxu0
        %v2509 = vadd.f32 %v573, %v2508
        %v2510 = vpop.f32.mrb[0].mxu0
        %v2511 = vadd.f32 %v569, %v2510
        %v2512 = vpop.f32.mrb[0].mxu0
        %v2513 = vadd.f32 %v573, %v2512
        %2514 = vdwg.mxu0
        %2515 = vmatprep.subr.bf16.mxu0 %v1669
        %2516 = vmatpush1.bf16.msra.mxu0 %v1668
        %2517 = vmatprep.subr.bf16.mxu0 %v1681
        %2518 = vmatpush1.bf16.msra.mxu0 %v1680
        %2519 = vmatprep.subr.bf16.mxu0 %v1693
        %2520 = vmatpush1.bf16.msra.mxu0 %v1692
        %2521 = vmatprep.subr.bf16.mxu0 %v1705
        %2522 = vmatpush1.bf16.msra.mxu0 %v1704
        %2523 = vmatprep.subr.bf16.mxu0 %v1717
        %2524 = vmatpush1.bf16.msra.mxu0 %v1716
        %2525 = vmatprep.subr.bf16.mxu0 %v1729
        %2526 = vmatpush1.bf16.msra.mxu0 %v1728
        %2527 = vmatprep.subr.bf16.mxu0 %v1741
        %2528 = vmatpush1.bf16.msra.mxu0 %v1740
        %2529 = vmatprep.subr.bf16.mxu0 %v1753
        %2530 = vmatpush1.bf16.msra.mxu0 %v1752
        %2531 = vmatprep.subr.bf16.mxu0 0
        %2532 = vmatpush1.bf16.msra.mxu0 0
        %2533 = vmatprep.subr.bf16.mxu0 0
        %2534 = vmatpush1.bf16.msra.mxu0 0
        %2535 = vmatprep.subr.bf16.mxu0 0
        %2536 = vmatpush1.bf16.msra.mxu0 0
        %2537 = vmatprep.subr.bf16.mxu0 0
        %2538 = vmatpush1.bf16.msra.mxu0 0
        %2539 = vmatprep.subr.bf16.mxu0 0
        %2540 = vmatpush1.bf16.msra.mxu0 0
        %2541 = vmatprep.subr.bf16.mxu0 0
        %2542 = vmatpush1.bf16.msra.mxu0 0
        %2543 = vmatprep.subr.bf16.mxu0 0
        %2544 = vmatpush1.bf16.msra.mxu0 0
        %2545 = vmatprep.subr.bf16.mxu0 0
        %2546 = vmatpush1.bf16.msra.mxu0 0
        %2547 = vmatprep.mubr.bf16.mxu0 0
        %2548 = vmatmul.mubr.bf16.gmra.mrb[0].mxu0 %v598
        %v2549 = vpop.f32.mrb[0].mxu0
        %v2550 = vadd.f32 %v2507, %v2549
        %v2551 = vpop.f32.mrb[0].mxu0
        %v2552 = vadd.f32 %v2509, %v2551
        %v2553 = vpop.f32.mrb[0].mxu0
        %v2554 = vadd.f32 %v2511, %v2553
        %v2555 = vpop.f32.mrb[0].mxu0
        %v2556 = vadd.f32 %v2513, %v2555
        %2557 = vdwg.mxu0
        %v2558 = vmax.f32 %v2120, 0.0
        %v2559 = vmax.f32 %v2122, 0.0
        %v2560 = vmax.f32 %v2206, 0.0
        %v2561 = vmax.f32 %v2208, 0.0
        %v2562 = vmax.f32 %v2292, 0.0
        %v2563 = vmax.f32 %v2294, 0.0
        %v2564 = vmax.f32 %v2378, 0.0
        %v2565 = vmax.f32 %v2380, 0.0
        %v2566 = vmax.f32 %v2464, 0.0
        %v2567 = vmax.f32 %v2466, 0.0
        %v2568 = vmax.f32 %v2550, 0.0
        %v2569 = vmax.f32 %v2552, 0.0
        %v2570 = vmax.f32 %v2124, 0.0
        %v2571 = vmax.f32 %v2126, 0.0
        %v2572 = vmax.f32 %v2210, 0.0
        %v2573 = vmax.f32 %v2212, 0.0
        %v2574 = vmax.f32 %v2296, 0.0
        %v2575 = vmax.f32 %v2298, 0.0
        %v2576 = vmax.f32 %v2382, 0.0
        %v2577 = vmax.f32 %v2384, 0.0
        %v2578 = vmax.f32 %v2468, 0.0
        %v2579 = vmax.f32 %v2470, 0.0
        %v2580 = vmax.f32 %v2554, 0.0
        %v2581 = vmax.f32 %v2556, 0.0
        %v2582 = vpack.c.bf16 %v2570, %v2558
        %v2583 = vpack.c.bf16 %v2571, %v2559
        %v2584 = vpack.c.bf16 %v2572, %v2560
        %v2585 = vpack.c.bf16 %v2573, %v2561
        %v2586 = vpack.c.bf16 %v2574, %v2562
        %v2587 = vpack.c.bf16 %v2575, %v2563
        %v2588 = vpack.c.bf16 %v2576, %v2564
        %v2589 = vpack.c.bf16 %v2577, %v2565
        %v2590 = vpack.c.bf16 %v2578, %v2566
        %v2591 = vpack.c.bf16 %v2579, %v2567
        %v2592 = vpack.c.bf16 %v2580, %v2568
        %v2593 = vpack.c.bf16 %v2581, %v2569
        %v2594 = vld [vmem:[%s3] sm:$0xff]
        %v2595 = vld [vmem:[%s3 + $0x8] sm:$0xf]
        %v2596 = vld [vmem:[%s3 + $0xc] sm:$0xff]
        %v2597 = vld [vmem:[%s3 + $0x14] sm:$0xf]
        %v2598 = vld [vmem:[%s3 + $0x18] sm:$0xff]
        %v2599 = vld [vmem:[%s3 + $0x20] sm:$0xf]
        %v2600 = vld [vmem:[%s3 + $0x24] sm:$0xff]
        %v2601 = vld [vmem:[%s3 + $0x2c] sm:$0xf]
        %v2602 = vld [vmem:[%s3 + $0x30] sm:$0xff]
        %v2603 = vld [vmem:[%s3 + $0x38] sm:$0xf]
        %v2604 = vld [vmem:[%s3 + $0x3c] sm:$0xff]
        %v2605 = vld [vmem:[%s3 + $0x44] sm:$0xf]
        %v2606 = vld [vmem:[%s3 + $0x48] sm:$0xff]
        %v2607 = vld [vmem:[%s3 + $0x50] sm:$0xf]
        %v2608 = vld [vmem:[%s3 + $0x54] sm:$0xff]
        %v2609 = vld [vmem:[%s3 + $0x5c] sm:$0xf]
        %v2610 = vld [vmem:[%s3 + $0x60] sm:$0xff]
        %v2611 = vld [vmem:[%s3 + $0x68] sm:$0xf]
        %v2612 = vld [vmem:[%s3 + $0x6c] sm:$0xff]
        %v2613 = vld [vmem:[%s3 + $0x74] sm:$0xf]
        %v2614 = vld [vmem:[%s3 + $0x78] sm:$0xff]
        %v2615 = vld [vmem:[%s3 + $0x80] sm:$0xf]
        %v2616 = vld [vmem:[%s3 + $0x84] sm:$0xff]
        %v2617 = vld [vmem:[%s3 + $0x8c] sm:$0xf]
        %v2618 = vld [vmem:[%s3 + $0x90] sm:$0xff]
        %v2619 = vld [vmem:[%s3 + $0x98] sm:$0xf]
        %v2620 = vld [vmem:[%s3 + $0x9c] sm:$0xff]
        %v2621 = vld [vmem:[%s3 + $0xa4] sm:$0xf]
        %v2622 = vld [vmem:[%s3 + $0xa8] sm:$0xff]
        %v2623 = vld [vmem:[%s3 + $0xb0] sm:$0xf]
        %v2624 = vld [vmem:[%s3 + $0xb4] sm:$0xff]
        %v2625 = vld [vmem:[%s3 + $0xbc] sm:$0xf]
        %v2626 = vld [vmem:[%s3 + $0xc0] sm:$0xff]
        %v2627 = vld [vmem:[%s3 + $0xc8] sm:$0xf]
        %v2628 = vld [vmem:[%s3 + $0xcc] sm:$0xff]
        %v2629 = vld [vmem:[%s3 + $0xd4] sm:$0xf]
        %v2630 = vld [vmem:[%s3 + $0xd8] sm:$0xff]
        %v2631 = vld [vmem:[%s3 + $0xe0] sm:$0xf]
        %v2632 = vld [vmem:[%s3 + $0xe4] sm:$0xff]
        %v2633 = vld [vmem:[%s3 + $0xec] sm:$0xf]
        %v2634 = vld [vmem:[%s3 + $0xf0] sm:$0xff]
        %v2635 = vld [vmem:[%s3 + $0xf8] sm:$0xf]
        %v2636 = vld [vmem:[%s3 + $0xfc] sm:$0xff]
        %v2637 = vld [vmem:[%s3 + $0x104] sm:$0xf]
        %v2638 = vld [vmem:[%s3 + $0x108] sm:$0xff]
        %v2639 = vld [vmem:[%s3 + $0x110] sm:$0xf]
        %v2640 = vld [vmem:[%s3 + $0x114] sm:$0xff]
        %v2641 = vld [vmem:[%s3 + $0x11c] sm:$0xf]
        %v2642 = vld [vmem:[%s3 + $0x120] sm:$0xff]
        %v2643 = vld [vmem:[%s3 + $0x128] sm:$0xf]
        %v2644 = vld [vmem:[%s3 + $0x12c] sm:$0xff]
        %v2645 = vld [vmem:[%s3 + $0x134] sm:$0xf]
        %v2646 = vld [vmem:[%s3 + $0x138] sm:$0xff]
        %v2647 = vld [vmem:[%s3 + $0x140] sm:$0xf]
        %v2648 = vld [vmem:[%s3 + $0x144] sm:$0xff]
        %v2649 = vld [vmem:[%s3 + $0x14c] sm:$0xf]
        %v2650 = vld [vmem:[%s3 + $0x150] sm:$0xff]
        %v2651 = vld [vmem:[%s3 + $0x158] sm:$0xf]
        %v2652 = vld [vmem:[%s3 + $0x15c] sm:$0xff]
        %v2653 = vld [vmem:[%s3 + $0x164] sm:$0xf]
        %v2654 = vld [vmem:[%s3 + $0x168] sm:$0xff]
        %v2655 = vld [vmem:[%s3 + $0x170] sm:$0xf]
        %v2656 = vld [vmem:[%s3 + $0x174] sm:$0xff]
        %v2657 = vld [vmem:[%s3 + $0x17c] sm:$0xf]
        %v2658 = vld [vmem:[%s3 + $0x180] sm:$0xff]
        %v2659 = vld [vmem:[%s3 + $0x188] sm:$0xf]
        %v2660 = vld [vmem:[%s3 + $0x18c] sm:$0xff]
        %v2661 = vld [vmem:[%s3 + $0x194] sm:$0xf]
        %v2662 = vld [vmem:[%s3 + $0x198] sm:$0xff]
        %v2663 = vld [vmem:[%s3 + $0x1a0] sm:$0xf]
        %v2664 = vld [vmem:[%s3 + $0x1a4] sm:$0xff]
        %v2665 = vld [vmem:[%s3 + $0x1ac] sm:$0xf]
        %v2666 = vld [vmem:[%s3 + $0x1b0] sm:$0xff]
        %v2667 = vld [vmem:[%s3 + $0x1b8] sm:$0xf]
        %v2668 = vld [vmem:[%s3 + $0x1bc] sm:$0xff]
        %v2669 = vld [vmem:[%s3 + $0x1c4] sm:$0xf]
        %v2670 = vld [vmem:[%s3 + $0x1c8] sm:$0xff]
        %v2671 = vld [vmem:[%s3 + $0x1d0] sm:$0xf]
        %v2672 = vld [vmem:[%s3 + $0x1d4] sm:$0xff]
        %v2673 = vld [vmem:[%s3 + $0x1dc] sm:$0xf]
        %v2674 = vld [vmem:[%s3 + $0x1e0] sm:$0xff]
        %v2675 = vld [vmem:[%s3 + $0x1e8] sm:$0xf]
        %v2676 = vld [vmem:[%s3 + $0x1ec] sm:$0xff]
        %v2677 = vld [vmem:[%s3 + $0x1f4] sm:$0xf]
        %v2678 = vld [vmem:[%s3 + $0x1f8] sm:$0xff]
        %v2679 = vld [vmem:[%s3 + $0x200] sm:$0xf]
        %v2680 = vld [vmem:[%s3 + $0x204] sm:$0xff]
        %v2681 = vld [vmem:[%s3 + $0x20c] sm:$0xf]
        %v2682 = vld [vmem:[%s3 + $0x210] sm:$0xff]
        %v2683 = vld [vmem:[%s3 + $0x218] sm:$0xf]
        %v2684 = vld [vmem:[%s3 + $0x21c] sm:$0xff]
        %v2685 = vld [vmem:[%s3 + $0x224] sm:$0xf]
        %v2686 = vld [vmem:[%s3 + $0x228] sm:$0xff]
        %v2687 = vld [vmem:[%s3 + $0x230] sm:$0xf]
        %v2688 = vld [vmem:[%s3 + $0x234] sm:$0xff]
        %v2689 = vld [vmem:[%s3 + $0x23c] sm:$0xf]
        %v2690 = vld [vmem:[%s3 + $0x240] sm:$0xff]
        %v2691 = vld [vmem:[%s3 + $0x248] sm:$0xf]
        %v2692 = vld [vmem:[%s3 + $0x24c] sm:$0xff]
        %v2693 = vld [vmem:[%s3 + $0x254] sm:$0xf]
        %v2694 = vld [vmem:[%s3 + $0x258] sm:$0xff]
        %v2695 = vld [vmem:[%s3 + $0x260] sm:$0xf]
        %v2696 = vld [vmem:[%s3 + $0x264] sm:$0xff]
        %v2697 = vld [vmem:[%s3 + $0x26c] sm:$0xf]
        %v2698 = vld [vmem:[%s3 + $0x270] sm:$0xff]
        %v2699 = vld [vmem:[%s3 + $0x278] sm:$0xf]
        %v2700 = vld [vmem:[%s3 + $0x27c] sm:$0xff]
        %v2701 = vld [vmem:[%s3 + $0x284] sm:$0xf]
        %v2702 = vld [vmem:[%s3 + $0x288] sm:$0xff]
        %v2703 = vld [vmem:[%s3 + $0x290] sm:$0xf]
        %v2704 = vld [vmem:[%s3 + $0x294] sm:$0xff]
        %v2705 = vld [vmem:[%s3 + $0x29c] sm:$0xf]
        %v2706 = vld [vmem:[%s3 + $0x2a0] sm:$0xff]
        %v2707 = vld [vmem:[%s3 + $0x2a8] sm:$0xf]
        %v2708 = vld [vmem:[%s3 + $0x2ac] sm:$0xff]
        %v2709 = vld [vmem:[%s3 + $0x2b4] sm:$0xf]
        %v2710 = vld [vmem:[%s3 + $0x2b8] sm:$0xff]
        %v2711 = vld [vmem:[%s3 + $0x2c0] sm:$0xf]
        %v2712 = vld [vmem:[%s3 + $0x2c4] sm:$0xff]
        %v2713 = vld [vmem:[%s3 + $0x2cc] sm:$0xf]
        %v2714 = vld [vmem:[%s3 + $0x2d0] sm:$0xff]
        %v2715 = vld [vmem:[%s3 + $0x2d8] sm:$0xf]
        %v2716 = vld [vmem:[%s3 + $0x2dc] sm:$0xff]
        %v2717 = vld [vmem:[%s3 + $0x2e4] sm:$0xf]
        %v2718 = vld [vmem:[%s3 + $0x2e8] sm:$0xff]
        %v2719 = vld [vmem:[%s3 + $0x2f0] sm:$0xf]
        %v2720 = vld [vmem:[%s3 + $0x2f4] sm:$0xff]
        %v2721 = vld [vmem:[%s3 + $0x2fc] sm:$0xf]
        %v2722 = vld [vmem:[%s3 + $0x300] sm:$0xff]
        %v2723 = vld [vmem:[%s3 + $0x308] sm:$0xf]
        %v2724 = vld [vmem:[%s3 + $0x30c] sm:$0xff]
        %v2725 = vld [vmem:[%s3 + $0x314] sm:$0xf]
        %v2726 = vld [vmem:[%s3 + $0x318] sm:$0xff]
        %v2727 = vld [vmem:[%s3 + $0x320] sm:$0xf]
        %v2728 = vld [vmem:[%s3 + $0x324] sm:$0xff]
        %v2729 = vld [vmem:[%s3 + $0x32c] sm:$0xf]
        %v2730 = vld [vmem:[%s3 + $0x330] sm:$0xff]
        %v2731 = vld [vmem:[%s3 + $0x338] sm:$0xf]
        %v2732 = vld [vmem:[%s3 + $0x33c] sm:$0xff]
        %v2733 = vld [vmem:[%s3 + $0x344] sm:$0xf]
        %v2734 = vld [vmem:[%s3 + $0x348] sm:$0xff]
        %v2735 = vld [vmem:[%s3 + $0x350] sm:$0xf]
        %v2736 = vld [vmem:[%s3 + $0x354] sm:$0xff]
        %v2737 = vld [vmem:[%s3 + $0x35c] sm:$0xf]
        %v2738 = vld [vmem:[%s3 + $0x360] sm:$0xff]
        %v2739 = vld [vmem:[%s3 + $0x368] sm:$0xf]
        %v2740 = vld [vmem:[%s3 + $0x36c] sm:$0xff]
        %v2741 = vld [vmem:[%s3 + $0x374] sm:$0xf]
        %v2742 = vld [vmem:[%s3 + $0x378] sm:$0xff]
        %v2743 = vld [vmem:[%s3 + $0x380] sm:$0xf]
        %v2744 = vld [vmem:[%s3 + $0x384] sm:$0xff]
        %v2745 = vld [vmem:[%s3 + $0x38c] sm:$0xf]
        %v2746 = vld [vmem:[%s3 + $0x390] sm:$0xff]
        %v2747 = vld [vmem:[%s3 + $0x398] sm:$0xf]
        %v2748 = vld [vmem:[%s3 + $0x39c] sm:$0xff]
        %v2749 = vld [vmem:[%s3 + $0x3a4] sm:$0xf]
        %v2750 = vld [vmem:[%s3 + $0x3a8] sm:$0xff]
        %v2751 = vld [vmem:[%s3 + $0x3b0] sm:$0xf]
        %v2752 = vld [vmem:[%s3 + $0x3b4] sm:$0xff]
        %v2753 = vld [vmem:[%s3 + $0x3bc] sm:$0xf]
        %v2754 = vld [vmem:[%s3 + $0x3c0] sm:$0xff]
        %v2755 = vld [vmem:[%s3 + $0x3c8] sm:$0xf]
        %v2756 = vld [vmem:[%s3 + $0x3cc] sm:$0xff]
        %v2757 = vld [vmem:[%s3 + $0x3d4] sm:$0xf]
        %v2758 = vld [vmem:[%s3 + $0x3d8] sm:$0xff]
        %v2759 = vld [vmem:[%s3 + $0x3e0] sm:$0xf]
        %v2760 = vld [vmem:[%s3 + $0x3e4] sm:$0xff]
        %v2761 = vld [vmem:[%s3 + $0x3ec] sm:$0xf]
        %v2762 = vld [vmem:[%s3 + $0x3f0] sm:$0xff]
        %v2763 = vld [vmem:[%s3 + $0x3f8] sm:$0xf]
        %v2764 = vld [vmem:[%s3 + $0x3fc] sm:$0xff]
        %v2765 = vld [vmem:[%s3 + $0x404] sm:$0xf]
        %v2766 = vld [vmem:[%s3 + $0x408] sm:$0xff]
        %v2767 = vld [vmem:[%s3 + $0x410] sm:$0xf]
        %v2768 = vld [vmem:[%s3 + $0x414] sm:$0xff]
        %v2769 = vld [vmem:[%s3 + $0x41c] sm:$0xf]
        %v2770 = vld [vmem:[%s3 + $0x420] sm:$0xff]
        %v2771 = vld [vmem:[%s3 + $0x428] sm:$0xf]
        %v2772 = vld [vmem:[%s3 + $0x42c] sm:$0xff]
        %v2773 = vld [vmem:[%s3 + $0x434] sm:$0xf]
        %v2774 = vld [vmem:[%s3 + $0x438] sm:$0xff]
        %v2775 = vld [vmem:[%s3 + $0x440] sm:$0xf]
        %v2776 = vld [vmem:[%s3 + $0x444] sm:$0xff]
        %v2777 = vld [vmem:[%s3 + $0x44c] sm:$0xf]
        %v2778 = vld [vmem:[%s3 + $0x450] sm:$0xff]
        %v2779 = vld [vmem:[%s3 + $0x458] sm:$0xf]
        %v2780 = vld [vmem:[%s3 + $0x45c] sm:$0xff]
        %v2781 = vld [vmem:[%s3 + $0x464] sm:$0xf]
        %v2782 = vld [vmem:[%s3 + $0x468] sm:$0xff]
        %v2783 = vld [vmem:[%s3 + $0x470] sm:$0xf]
        %v2784 = vld [vmem:[%s3 + $0x474] sm:$0xff]
        %v2785 = vld [vmem:[%s3 + $0x47c] sm:$0xf]
        %v2786 = vld [vmem:[%s3 + $0x480] sm:$0xff]
        %v2787 = vld [vmem:[%s3 + $0x488] sm:$0xf]
        %v2788 = vld [vmem:[%s3 + $0x48c] sm:$0xff]
        %v2789 = vld [vmem:[%s3 + $0x494] sm:$0xf]
        %v2790 = vld [vmem:[%s3 + $0x498] sm:$0xff]
        %v2791 = vld [vmem:[%s3 + $0x4a0] sm:$0xf]
        %v2792 = vld [vmem:[%s3 + $0x4a4] sm:$0xff]
        %v2793 = vld [vmem:[%s3 + $0x4ac] sm:$0xf]
        %v2794 = vld [vmem:[%s3 + $0x4b0] sm:$0xff]
        %v2795 = vld [vmem:[%s3 + $0x4b8] sm:$0xf]
        %v2796 = vld [vmem:[%s3 + $0x4bc] sm:$0xff]
        %v2797 = vld [vmem:[%s3 + $0x4c4] sm:$0xf]
        %v2798 = vld [vmem:[%s3 + $0x4c8] sm:$0xff]
        %v2799 = vld [vmem:[%s3 + $0x4d0] sm:$0xf]
        %v2800 = vld [vmem:[%s3 + $0x4d4] sm:$0xff]
        %v2801 = vld [vmem:[%s3 + $0x4dc] sm:$0xf]
        %v2802 = vld [vmem:[%s3 + $0x4e0] sm:$0xff]
        %v2803 = vld [vmem:[%s3 + $0x4e8] sm:$0xf]
        %v2804 = vld [vmem:[%s3 + $0x4ec] sm:$0xff]
        %v2805 = vld [vmem:[%s3 + $0x4f4] sm:$0xf]
        %v2806 = vld [vmem:[%s3 + $0x4f8] sm:$0xff]
        %v2807 = vld [vmem:[%s3 + $0x500] sm:$0xf]
        %v2808 = vld [vmem:[%s3 + $0x504] sm:$0xff]
        %v2809 = vld [vmem:[%s3 + $0x50c] sm:$0xf]
        %v2810 = vld [vmem:[%s3 + $0x510] sm:$0xff]
        %v2811 = vld [vmem:[%s3 + $0x518] sm:$0xf]
        %v2812 = vld [vmem:[%s3 + $0x51c] sm:$0xff]
        %v2813 = vld [vmem:[%s3 + $0x524] sm:$0xf]
        %v2814 = vld [vmem:[%s3 + $0x528] sm:$0xff]
        %v2815 = vld [vmem:[%s3 + $0x530] sm:$0xf]
        %v2816 = vld [vmem:[%s3 + $0x534] sm:$0xff]
        %v2817 = vld [vmem:[%s3 + $0x53c] sm:$0xf]
        %v2818 = vld [vmem:[%s3 + $0x540] sm:$0xff]
        %v2819 = vld [vmem:[%s3 + $0x548] sm:$0xf]
        %v2820 = vld [vmem:[%s3 + $0x54c] sm:$0xff]
        %v2821 = vld [vmem:[%s3 + $0x554] sm:$0xf]
        %v2822 = vld [vmem:[%s3 + $0x558] sm:$0xff]
        %v2823 = vld [vmem:[%s3 + $0x560] sm:$0xf]
        %v2824 = vld [vmem:[%s3 + $0x564] sm:$0xff]
        %v2825 = vld [vmem:[%s3 + $0x56c] sm:$0xf]
        %v2826 = vld [vmem:[%s3 + $0x570] sm:$0xff]
        %v2827 = vld [vmem:[%s3 + $0x578] sm:$0xf]
        %v2828 = vld [vmem:[%s3 + $0x57c] sm:$0xff]
        %v2829 = vld [vmem:[%s3 + $0x584] sm:$0xf]
        %v2830 = vld [vmem:[%s3 + $0x588] sm:$0xff]
        %v2831 = vld [vmem:[%s3 + $0x590] sm:$0xf]
        %v2832 = vld [vmem:[%s3 + $0x594] sm:$0xff]
        %v2833 = vld [vmem:[%s3 + $0x59c] sm:$0xf]
        %v2834 = vld [vmem:[%s3 + $0x5a0] sm:$0xff]
        %v2835 = vld [vmem:[%s3 + $0x5a8] sm:$0xf]
        %v2836 = vld [vmem:[%s3 + $0x5ac] sm:$0xff]
        %v2837 = vld [vmem:[%s3 + $0x5b4] sm:$0xf]
        %v2838 = vld [vmem:[%s3 + $0x5b8] sm:$0xff]
        %v2839 = vld [vmem:[%s3 + $0x5c0] sm:$0xf]
        %v2840 = vld [vmem:[%s3 + $0x5c4] sm:$0xff]
        %v2841 = vld [vmem:[%s3 + $0x5cc] sm:$0xf]
        %v2842 = vld [vmem:[%s3 + $0x5d0] sm:$0xff]
        %v2843 = vld [vmem:[%s3 + $0x5d8] sm:$0xf]
        %v2844 = vld [vmem:[%s3 + $0x5dc] sm:$0xff]
        %v2845 = vld [vmem:[%s3 + $0x5e4] sm:$0xf]
        %v2846 = vld [vmem:[%s3 + $0x5e8] sm:$0xff]
        %v2847 = vld [vmem:[%s3 + $0x5f0] sm:$0xf]
        %v2848 = vld [vmem:[%s3 + $0x5f4] sm:$0xff]
        %v2849 = vld [vmem:[%s3 + $0x5fc] sm:$0xf]
        %v2850 = vld [vmem:[%s3 + $0x600] sm:$0xff]
        %v2851 = vld [vmem:[%s3 + $0x608] sm:$0xf]
        %v2852 = vld [vmem:[%s3 + $0x60c] sm:$0xff]
        %v2853 = vld [vmem:[%s3 + $0x614] sm:$0xf]
        %v2854 = vld [vmem:[%s3 + $0x618] sm:$0xff]
        %v2855 = vld [vmem:[%s3 + $0x620] sm:$0xf]
        %v2856 = vld [vmem:[%s3 + $0x624] sm:$0xff]
        %v2857 = vld [vmem:[%s3 + $0x62c] sm:$0xf]
        %v2858 = vld [vmem:[%s3 + $0x630] sm:$0xff]
        %v2859 = vld [vmem:[%s3 + $0x638] sm:$0xf]
        %v2860 = vld [vmem:[%s3 + $0x63c] sm:$0xff]
        %v2861 = vld [vmem:[%s3 + $0x644] sm:$0xf]
        %v2862 = vld [vmem:[%s3 + $0x648] sm:$0xff]
        %v2863 = vld [vmem:[%s3 + $0x650] sm:$0xf]
        %v2864 = vld [vmem:[%s3 + $0x654] sm:$0xff]
        %v2865 = vld [vmem:[%s3 + $0x65c] sm:$0xf]
        %v2866 = vld [vmem:[%s3 + $0x660] sm:$0xff]
        %v2867 = vld [vmem:[%s3 + $0x668] sm:$0xf]
        %v2868 = vld [vmem:[%s3 + $0x66c] sm:$0xff]
        %v2869 = vld [vmem:[%s3 + $0x674] sm:$0xf]
        %v2870 = vld [vmem:[%s3 + $0x678] sm:$0xff]
        %v2871 = vld [vmem:[%s3 + $0x680] sm:$0xf]
        %v2872 = vld [vmem:[%s3 + $0x684] sm:$0xff]
        %v2873 = vld [vmem:[%s3 + $0x68c] sm:$0xf]
        %v2874 = vld [vmem:[%s3 + $0x690] sm:$0xff]
        %v2875 = vld [vmem:[%s3 + $0x698] sm:$0xf]
        %v2876 = vld [vmem:[%s3 + $0x69c] sm:$0xff]
        %v2877 = vld [vmem:[%s3 + $0x6a4] sm:$0xf]
        %v2878 = vld [vmem:[%s3 + $0x6a8] sm:$0xff]
        %v2879 = vld [vmem:[%s3 + $0x6b0] sm:$0xf]
        %v2880 = vld [vmem:[%s3 + $0x6b4] sm:$0xff]
        %v2881 = vld [vmem:[%s3 + $0x6bc] sm:$0xf]
        %v2882 = vld [vmem:[%s3 + $0x6c0] sm:$0xff]
        %v2883 = vld [vmem:[%s3 + $0x6c8] sm:$0xf]
        %v2884 = vld [vmem:[%s3 + $0x6cc] sm:$0xff]
        %v2885 = vld [vmem:[%s3 + $0x6d4] sm:$0xf]
        %v2886 = vld [vmem:[%s3 + $0x6d8] sm:$0xff]
        %v2887 = vld [vmem:[%s3 + $0x6e0] sm:$0xf]
        %v2888 = vld [vmem:[%s3 + $0x6e4] sm:$0xff]
        %v2889 = vld [vmem:[%s3 + $0x6ec] sm:$0xf]
        %v2890 = vld [vmem:[%s3 + $0x6f0] sm:$0xff]
        %v2891 = vld [vmem:[%s3 + $0x6f8] sm:$0xf]
        %v2892 = vld [vmem:[%s3 + $0x6fc] sm:$0xff]
        %v2893 = vld [vmem:[%s3 + $0x704] sm:$0xf]
        %v2894 = vld [vmem:[%s3 + $0x708] sm:$0xff]
        %v2895 = vld [vmem:[%s3 + $0x710] sm:$0xf]
        %v2896 = vld [vmem:[%s3 + $0x714] sm:$0xff]
        %v2897 = vld [vmem:[%s3 + $0x71c] sm:$0xf]
        %v2898 = vld [vmem:[%s3 + $0x720] sm:$0xff]
        %v2899 = vld [vmem:[%s3 + $0x728] sm:$0xf]
        %v2900 = vld [vmem:[%s3 + $0x72c] sm:$0xff]
        %v2901 = vld [vmem:[%s3 + $0x734] sm:$0xf]
        %v2902 = vld [vmem:[%s3 + $0x738] sm:$0xff]
        %v2903 = vld [vmem:[%s3 + $0x740] sm:$0xf]
        %v2904 = vld [vmem:[%s3 + $0x744] sm:$0xff]
        %v2905 = vld [vmem:[%s3 + $0x74c] sm:$0xf]
        %v2906 = vld [vmem:[%s3 + $0x750] sm:$0xff]
        %v2907 = vld [vmem:[%s3 + $0x758] sm:$0xf]
        %v2908 = vld [vmem:[%s3 + $0x75c] sm:$0xff]
        %v2909 = vld [vmem:[%s3 + $0x764] sm:$0xf]
        %v2910 = vld [vmem:[%s3 + $0x768] sm:$0xff]
        %v2911 = vld [vmem:[%s3 + $0x770] sm:$0xf]
        %v2912 = vld [vmem:[%s3 + $0x774] sm:$0xff]
        %v2913 = vld [vmem:[%s3 + $0x77c] sm:$0xf]
        %v2914 = vld [vmem:[%s3 + $0x780] sm:$0xff]
        %v2915 = vld [vmem:[%s3 + $0x788] sm:$0xf]
        %v2916 = vld [vmem:[%s3 + $0x78c] sm:$0xff]
        %v2917 = vld [vmem:[%s3 + $0x794] sm:$0xf]
        %v2918 = vld [vmem:[%s3 + $0x798] sm:$0xff]
        %v2919 = vld [vmem:[%s3 + $0x7a0] sm:$0xf]
        %v2920 = vld [vmem:[%s3 + $0x7a4] sm:$0xff]
        %v2921 = vld [vmem:[%s3 + $0x7ac] sm:$0xf]
        %v2922 = vld [vmem:[%s3 + $0x7b0] sm:$0xff]
        %v2923 = vld [vmem:[%s3 + $0x7b8] sm:$0xf]
        %v2924 = vld [vmem:[%s3 + $0x7bc] sm:$0xff]
        %v2925 = vld [vmem:[%s3 + $0x7c4] sm:$0xf]
        %v2926 = vld [vmem:[%s3 + $0x7c8] sm:$0xff]
        %v2927 = vld [vmem:[%s3 + $0x7d0] sm:$0xf]
        %v2928 = vld [vmem:[%s3 + $0x7d4] sm:$0xff]
        %v2929 = vld [vmem:[%s3 + $0x7dc] sm:$0xf]
        %v2930 = vld [vmem:[%s3 + $0x7e0] sm:$0xff]
        %v2931 = vld [vmem:[%s3 + $0x7e8] sm:$0xf]
        %v2932 = vld [vmem:[%s3 + $0x7ec] sm:$0xff]
        %v2933 = vld [vmem:[%s3 + $0x7f4] sm:$0xf]
        %v2934 = vld [vmem:[%s3 + $0x7f8] sm:$0xff]
        %v2935 = vld [vmem:[%s3 + $0x800] sm:$0xf]
        %v2936 = vld [vmem:[%s3 + $0x804] sm:$0xff]
        %v2937 = vld [vmem:[%s3 + $0x80c] sm:$0xf]
        %v2938 = vld [vmem:[%s3 + $0x810] sm:$0xff]
        %v2939 = vld [vmem:[%s3 + $0x818] sm:$0xf]
        %v2940 = vld [vmem:[%s3 + $0x81c] sm:$0xff]
        %v2941 = vld [vmem:[%s3 + $0x824] sm:$0xf]
        %v2942 = vld [vmem:[%s3 + $0x828] sm:$0xff]
        %v2943 = vld [vmem:[%s3 + $0x830] sm:$0xf]
        %v2944 = vld [vmem:[%s3 + $0x834] sm:$0xff]
        %v2945 = vld [vmem:[%s3 + $0x83c] sm:$0xf]
        %v2946 = vld [vmem:[%s3 + $0x840] sm:$0xff]
        %v2947 = vld [vmem:[%s3 + $0x848] sm:$0xf]
        %v2948 = vld [vmem:[%s3 + $0x84c] sm:$0xff]
        %v2949 = vld [vmem:[%s3 + $0x854] sm:$0xf]
        %v2950 = vld [vmem:[%s3 + $0x858] sm:$0xff]
        %v2951 = vld [vmem:[%s3 + $0x860] sm:$0xf]
        %v2952 = vld [vmem:[%s3 + $0x864] sm:$0xff]
        %v2953 = vld [vmem:[%s3 + $0x86c] sm:$0xf]
        %v2954 = vld [vmem:[%s3 + $0x870] sm:$0xff]
        %v2955 = vld [vmem:[%s3 + $0x878] sm:$0xf]
        %v2956 = vld [vmem:[%s3 + $0x87c] sm:$0xff]
        %v2957 = vld [vmem:[%s3 + $0x884] sm:$0xf]
        %v2958 = vld [vmem:[%s3 + $0x888] sm:$0xff]
        %v2959 = vld [vmem:[%s3 + $0x890] sm:$0xf]
        %v2960 = vld [vmem:[%s3 + $0x894] sm:$0xff]
        %v2961 = vld [vmem:[%s3 + $0x89c] sm:$0xf]
        %v2962 = vld [vmem:[%s3 + $0x8a0] sm:$0xff]
        %v2963 = vld [vmem:[%s3 + $0x8a8] sm:$0xf]
        %v2964 = vld [vmem:[%s3 + $0x8ac] sm:$0xff]
        %v2965 = vld [vmem:[%s3 + $0x8b4] sm:$0xf]
        %v2966 = vld [vmem:[%s3 + $0x8b8] sm:$0xff]
        %v2967 = vld [vmem:[%s3 + $0x8c0] sm:$0xf]
        %v2968 = vld [vmem:[%s3 + $0x8c4] sm:$0xff]
        %v2969 = vld [vmem:[%s3 + $0x8cc] sm:$0xf]
        %v2970 = vld [vmem:[%s3 + $0x8d0] sm:$0xff]
        %v2971 = vld [vmem:[%s3 + $0x8d8] sm:$0xf]
        %v2972 = vld [vmem:[%s3 + $0x8dc] sm:$0xff]
        %v2973 = vld [vmem:[%s3 + $0x8e4] sm:$0xf]
        %v2974 = vld [vmem:[%s3 + $0x8e8] sm:$0xff]
        %v2975 = vld [vmem:[%s3 + $0x8f0] sm:$0xf]
        %v2976 = vld [vmem:[%s3 + $0x8f4] sm:$0xff]
        %v2977 = vld [vmem:[%s3 + $0x8fc] sm:$0xf]
        %v2978 = vld [vmem:[%s4] sm:$0x7]
        %v2980 = vlaneseq
        %v2981 = vshrl.u32 %v2980, 7
        %v2982 = vsub.s32 0, %v2981
        %v2983 = vrot.slane %v2978, %v2982
        %v2984 = vlaneseq
        %v2985 = vshrl.u32 %v2984, 7
        %v2986 = vsub.s32 1, %v2985
        %v2987 = vrot.slane %v2978, %v2986
        %v2988 = vlaneseq
        %v2989 = vshrl.u32 %v2988, 7
        %v2990 = vsub.s32 2, %v2989
        %v2991 = vrot.slane %v2978, %v2990
        %v3379 = vunpack.c.l.b16 %v2594
        %v3380 = vunpack.c.h.b16 %v2594
        %v3381 = vunpack.c.l.b16 %v2595
        %v3382 = vunpack.c.l.b16 %v2596
        %v3383 = vunpack.c.h.b16 %v2596
        %v3384 = vunpack.c.l.b16 %v2597
        %v3385 = vunpack.c.l.b16 %v2598
        %v3386 = vunpack.c.h.b16 %v2598
        %v3387 = vunpack.c.l.b16 %v2599
        %v3388 = vunpack.c.l.b16 %v2600
        %v3389 = vunpack.c.h.b16 %v2600
        %v3390 = vunpack.c.l.b16 %v2601
        %v3391 = vunpack.c.l.b16 %v2602
        %v3392 = vunpack.c.h.b16 %v2602
        %v3393 = vunpack.c.l.b16 %v2603
        %v3394 = vunpack.c.l.b16 %v2604
        %v3395 = vunpack.c.h.b16 %v2604
        %v3396 = vunpack.c.l.b16 %v2605
        %v3397 = vunpack.c.l.b16 %v2606
        %v3398 = vunpack.c.h.b16 %v2606
        %v3399 = vunpack.c.l.b16 %v2607
        %v3400 = vunpack.c.l.b16 %v2608
        %v3401 = vunpack.c.h.b16 %v2608
        %v3402 = vunpack.c.l.b16 %v2609
        %v3403 = vunpack.c.l.b16 %v2610
        %v3404 = vunpack.c.h.b16 %v2610
        %v3405 = vunpack.c.l.b16 %v2611
        %v3406 = vunpack.c.l.b16 %v2612
        %v3407 = vunpack.c.h.b16 %v2612
        %v3408 = vunpack.c.l.b16 %v2613
        %v3409 = vunpack.c.l.b16 %v2614
        %v3410 = vunpack.c.h.b16 %v2614
        %v3411 = vunpack.c.l.b16 %v2615
        %v3412 = vunpack.c.l.b16 %v2616
        %v3413 = vunpack.c.h.b16 %v2616
        %v3414 = vunpack.c.l.b16 %v2617
        %v3415 = vunpack.c.l.b16 %v2618
        %v3416 = vunpack.c.h.b16 %v2618
        %v3417 = vunpack.c.l.b16 %v2619
        %v3418 = vunpack.c.l.b16 %v2620
        %v3419 = vunpack.c.h.b16 %v2620
        %v3420 = vunpack.c.l.b16 %v2621
        %v3421 = vunpack.c.l.b16 %v2622
        %v3422 = vunpack.c.h.b16 %v2622
        %v3423 = vunpack.c.l.b16 %v2623
        %v3424 = vunpack.c.l.b16 %v2624
        %v3425 = vunpack.c.h.b16 %v2624
        %v3426 = vunpack.c.l.b16 %v2625
        %v3427 = vunpack.c.l.b16 %v2626
        %v3428 = vunpack.c.h.b16 %v2626
        %v3429 = vunpack.c.l.b16 %v2627
        %v3430 = vunpack.c.l.b16 %v2628
        %v3431 = vunpack.c.h.b16 %v2628
        %v3432 = vunpack.c.l.b16 %v2629
        %v3433 = vunpack.c.l.b16 %v2630
        %v3434 = vunpack.c.h.b16 %v2630
        %v3435 = vunpack.c.l.b16 %v2631
        %v3436 = vunpack.c.l.b16 %v2632
        %v3437 = vunpack.c.h.b16 %v2632
        %v3438 = vunpack.c.l.b16 %v2633
        %v3439 = vunpack.c.l.b16 %v2634
        %v3440 = vunpack.c.h.b16 %v2634
        %v3441 = vunpack.c.l.b16 %v2635
        %v3442 = vunpack.c.l.b16 %v2636
        %v3443 = vunpack.c.h.b16 %v2636
        %v3444 = vunpack.c.l.b16 %v2637
        %v3445 = vunpack.c.l.b16 %v2638
        %v3446 = vunpack.c.h.b16 %v2638
        %v3447 = vunpack.c.l.b16 %v2639
        %v3448 = vunpack.c.l.b16 %v2640
        %v3449 = vunpack.c.h.b16 %v2640
        %v3450 = vunpack.c.l.b16 %v2641
        %v3451 = vunpack.c.l.b16 %v2642
        %v3452 = vunpack.c.h.b16 %v2642
        %v3453 = vunpack.c.l.b16 %v2643
        %v3454 = vunpack.c.l.b16 %v2644
        %v3455 = vunpack.c.h.b16 %v2644
        %v3456 = vunpack.c.l.b16 %v2645
        %v3457 = vunpack.c.l.b16 %v2646
        %v3458 = vunpack.c.h.b16 %v2646
        %v3459 = vunpack.c.l.b16 %v2647
        %v3460 = vunpack.c.l.b16 %v2648
        %v3461 = vunpack.c.h.b16 %v2648
        %v3462 = vunpack.c.l.b16 %v2649
        %v3463 = vunpack.c.l.b16 %v2650
        %v3464 = vunpack.c.h.b16 %v2650
        %v3465 = vunpack.c.l.b16 %v2651
        %v3466 = vunpack.c.l.b16 %v2652
        %v3467 = vunpack.c.h.b16 %v2652
        %v3468 = vunpack.c.l.b16 %v2653
        %v3469 = vunpack.c.l.b16 %v2654
        %v3470 = vunpack.c.h.b16 %v2654
        %v3471 = vunpack.c.l.b16 %v2655
        %v3472 = vunpack.c.l.b16 %v2656
        %v3473 = vunpack.c.h.b16 %v2656
        %v3474 = vunpack.c.l.b16 %v2657
        %v3475 = vunpack.c.l.b16 %v2658
        %v3476 = vunpack.c.h.b16 %v2658
        %v3477 = vunpack.c.l.b16 %v2659
        %v3478 = vunpack.c.l.b16 %v2660
        %v3479 = vunpack.c.h.b16 %v2660
        %v3480 = vunpack.c.l.b16 %v2661
        %v3481 = vunpack.c.l.b16 %v2662
        %v3482 = vunpack.c.h.b16 %v2662
        %v3483 = vunpack.c.l.b16 %v2663
        %v3484 = vunpack.c.l.b16 %v2664
        %v3485 = vunpack.c.h.b16 %v2664
        %v3486 = vunpack.c.l.b16 %v2665
        %v3487 = vunpack.c.l.b16 %v2666
        %v3488 = vunpack.c.h.b16 %v2666
        %v3489 = vunpack.c.l.b16 %v2667
        %v3490 = vunpack.c.l.b16 %v2668
        %v3491 = vunpack.c.h.b16 %v2668
        %v3492 = vunpack.c.l.b16 %v2669
        %v3493 = vunpack.c.l.b16 %v2670
        %v3494 = vunpack.c.h.b16 %v2670
        %v3495 = vunpack.c.l.b16 %v2671
        %v3496 = vunpack.c.l.b16 %v2672
        %v3497 = vunpack.c.h.b16 %v2672
        %v3498 = vunpack.c.l.b16 %v2673
        %v3499 = vunpack.c.l.b16 %v2674
        %v3500 = vunpack.c.h.b16 %v2674
        %v3501 = vunpack.c.l.b16 %v2675
        %v3502 = vunpack.c.l.b16 %v2676
        %v3503 = vunpack.c.h.b16 %v2676
        %v3504 = vunpack.c.l.b16 %v2677
        %v3505 = vunpack.c.l.b16 %v2678
        %v3506 = vunpack.c.h.b16 %v2678
        %v3507 = vunpack.c.l.b16 %v2679
        %v3508 = vunpack.c.l.b16 %v2680
        %v3509 = vunpack.c.h.b16 %v2680
        %v3510 = vunpack.c.l.b16 %v2681
        %v3511 = vunpack.c.l.b16 %v2682
        %v3512 = vunpack.c.h.b16 %v2682
        %v3513 = vunpack.c.l.b16 %v2683
        %v3514 = vunpack.c.l.b16 %v2684
        %v3515 = vunpack.c.h.b16 %v2684
        %v3516 = vunpack.c.l.b16 %v2685
        %v3517 = vunpack.c.l.b16 %v2686
        %v3518 = vunpack.c.h.b16 %v2686
        %v3519 = vunpack.c.l.b16 %v2687
        %v3520 = vunpack.c.l.b16 %v2688
        %v3521 = vunpack.c.h.b16 %v2688
        %v3522 = vunpack.c.l.b16 %v2689
        %v3523 = vunpack.c.l.b16 %v2690
        %v3524 = vunpack.c.h.b16 %v2690
        %v3525 = vunpack.c.l.b16 %v2691
        %v3526 = vunpack.c.l.b16 %v2692
        %v3527 = vunpack.c.h.b16 %v2692
        %v3528 = vunpack.c.l.b16 %v2693
        %v3529 = vunpack.c.l.b16 %v2694
        %v3530 = vunpack.c.h.b16 %v2694
        %v3531 = vunpack.c.l.b16 %v2695
        %v3532 = vunpack.c.l.b16 %v2696
        %v3533 = vunpack.c.h.b16 %v2696
        %v3534 = vunpack.c.l.b16 %v2697
        %v3535 = vunpack.c.l.b16 %v2698
        %v3536 = vunpack.c.h.b16 %v2698
        %v3537 = vunpack.c.l.b16 %v2699
        %v3538 = vunpack.c.l.b16 %v2700
        %v3539 = vunpack.c.h.b16 %v2700
        %v3540 = vunpack.c.l.b16 %v2701
        %v3541 = vunpack.c.l.b16 %v2702
        %v3542 = vunpack.c.h.b16 %v2702
        %v3543 = vunpack.c.l.b16 %v2703
        %v3544 = vunpack.c.l.b16 %v2704
        %v3545 = vunpack.c.h.b16 %v2704
        %v3546 = vunpack.c.l.b16 %v2705
        %v3547 = vunpack.c.l.b16 %v2706
        %v3548 = vunpack.c.h.b16 %v2706
        %v3549 = vunpack.c.l.b16 %v2707
        %v3550 = vunpack.c.l.b16 %v2708
        %v3551 = vunpack.c.h.b16 %v2708
        %v3552 = vunpack.c.l.b16 %v2709
        %v3553 = vunpack.c.l.b16 %v2710
        %v3554 = vunpack.c.h.b16 %v2710
        %v3555 = vunpack.c.l.b16 %v2711
        %v3556 = vunpack.c.l.b16 %v2712
        %v3557 = vunpack.c.h.b16 %v2712
        %v3558 = vunpack.c.l.b16 %v2713
        %v3559 = vunpack.c.l.b16 %v2714
        %v3560 = vunpack.c.h.b16 %v2714
        %v3561 = vunpack.c.l.b16 %v2715
        %v3562 = vunpack.c.l.b16 %v2716
        %v3563 = vunpack.c.h.b16 %v2716
        %v3564 = vunpack.c.l.b16 %v2717
        %v3565 = vunpack.c.l.b16 %v2718
        %v3566 = vunpack.c.h.b16 %v2718
        %v3567 = vunpack.c.l.b16 %v2719
        %v3568 = vunpack.c.l.b16 %v2720
        %v3569 = vunpack.c.h.b16 %v2720
        %v3570 = vunpack.c.l.b16 %v2721
        %v3571 = vunpack.c.l.b16 %v2722
        %v3572 = vunpack.c.h.b16 %v2722
        %v3573 = vunpack.c.l.b16 %v2723
        %v3574 = vunpack.c.l.b16 %v2724
        %v3575 = vunpack.c.h.b16 %v2724
        %v3576 = vunpack.c.l.b16 %v2725
        %v3577 = vunpack.c.l.b16 %v2726
        %v3578 = vunpack.c.h.b16 %v2726
        %v3579 = vunpack.c.l.b16 %v2727
        %v3580 = vunpack.c.l.b16 %v2728
        %v3581 = vunpack.c.h.b16 %v2728
        %v3582 = vunpack.c.l.b16 %v2729
        %v3583 = vunpack.c.l.b16 %v2730
        %v3584 = vunpack.c.h.b16 %v2730
        %v3585 = vunpack.c.l.b16 %v2731
        %v3586 = vunpack.c.l.b16 %v2732
        %v3587 = vunpack.c.h.b16 %v2732
        %v3588 = vunpack.c.l.b16 %v2733
        %v3589 = vunpack.c.l.b16 %v2734
        %v3590 = vunpack.c.h.b16 %v2734
        %v3591 = vunpack.c.l.b16 %v2735
        %v3592 = vunpack.c.l.b16 %v2736
        %v3593 = vunpack.c.h.b16 %v2736
        %v3594 = vunpack.c.l.b16 %v2737
        %v3595 = vunpack.c.l.b16 %v2738
        %v3596 = vunpack.c.h.b16 %v2738
        %v3597 = vunpack.c.l.b16 %v2739
        %v3598 = vunpack.c.l.b16 %v2740
        %v3599 = vunpack.c.h.b16 %v2740
        %v3600 = vunpack.c.l.b16 %v2741
        %v3601 = vunpack.c.l.b16 %v2742
        %v3602 = vunpack.c.h.b16 %v2742
        %v3603 = vunpack.c.l.b16 %v2743
        %v3604 = vunpack.c.l.b16 %v2744
        %v3605 = vunpack.c.h.b16 %v2744
        %v3606 = vunpack.c.l.b16 %v2745
        %v3607 = vunpack.c.l.b16 %v2746
        %v3608 = vunpack.c.h.b16 %v2746
        %v3609 = vunpack.c.l.b16 %v2747
        %v3610 = vunpack.c.l.b16 %v2748
        %v3611 = vunpack.c.h.b16 %v2748
        %v3612 = vunpack.c.l.b16 %v2749
        %v3613 = vunpack.c.l.b16 %v2750
        %v3614 = vunpack.c.h.b16 %v2750
        %v3615 = vunpack.c.l.b16 %v2751
        %v3616 = vunpack.c.l.b16 %v2752
        %v3617 = vunpack.c.h.b16 %v2752
        %v3618 = vunpack.c.l.b16 %v2753
        %v3619 = vunpack.c.l.b16 %v2754
        %v3620 = vunpack.c.h.b16 %v2754
        %v3621 = vunpack.c.l.b16 %v2755
        %v3622 = vunpack.c.l.b16 %v2756
        %v3623 = vunpack.c.h.b16 %v2756
        %v3624 = vunpack.c.l.b16 %v2757
        %v3625 = vunpack.c.l.b16 %v2758
        %v3626 = vunpack.c.h.b16 %v2758
        %v3627 = vunpack.c.l.b16 %v2759
        %v3628 = vunpack.c.l.b16 %v2760
        %v3629 = vunpack.c.h.b16 %v2760
        %v3630 = vunpack.c.l.b16 %v2761
        %v3631 = vunpack.c.l.b16 %v2762
        %v3632 = vunpack.c.h.b16 %v2762
        %v3633 = vunpack.c.l.b16 %v2763
        %v3634 = vunpack.c.l.b16 %v2764
        %v3635 = vunpack.c.h.b16 %v2764
        %v3636 = vunpack.c.l.b16 %v2765
        %v3637 = vunpack.c.l.b16 %v2766
        %v3638 = vunpack.c.h.b16 %v2766
        %v3639 = vunpack.c.l.b16 %v2767
        %v3640 = vunpack.c.l.b16 %v2768
        %v3641 = vunpack.c.h.b16 %v2768
        %v3642 = vunpack.c.l.b16 %v2769
        %v3643 = vunpack.c.l.b16 %v2770
        %v3644 = vunpack.c.h.b16 %v2770
        %v3645 = vunpack.c.l.b16 %v2771
        %v3646 = vunpack.c.l.b16 %v2772
        %v3647 = vunpack.c.h.b16 %v2772
        %v3648 = vunpack.c.l.b16 %v2773
        %v3649 = vunpack.c.l.b16 %v2774
        %v3650 = vunpack.c.h.b16 %v2774
        %v3651 = vunpack.c.l.b16 %v2775
        %v3652 = vunpack.c.l.b16 %v2776
        %v3653 = vunpack.c.h.b16 %v2776
        %v3654 = vunpack.c.l.b16 %v2777
        %v3655 = vunpack.c.l.b16 %v2778
        %v3656 = vunpack.c.h.b16 %v2778
        %v3657 = vunpack.c.l.b16 %v2779
        %v3658 = vunpack.c.l.b16 %v2780
        %v3659 = vunpack.c.h.b16 %v2780
        %v3660 = vunpack.c.l.b16 %v2781
        %v3661 = vunpack.c.l.b16 %v2782
        %v3662 = vunpack.c.h.b16 %v2782
        %v3663 = vunpack.c.l.b16 %v2783
        %v3664 = vunpack.c.l.b16 %v2784
        %v3665 = vunpack.c.h.b16 %v2784
        %v3666 = vunpack.c.l.b16 %v2785
        %v3667 = vunpack.c.l.b16 %v2786
        %v3668 = vunpack.c.h.b16 %v2786
        %v3669 = vunpack.c.l.b16 %v2787
        %v3670 = vunpack.c.l.b16 %v2788
        %v3671 = vunpack.c.h.b16 %v2788
        %v3672 = vunpack.c.l.b16 %v2789
        %v3673 = vunpack.c.l.b16 %v2790
        %v3674 = vunpack.c.h.b16 %v2790
        %v3675 = vunpack.c.l.b16 %v2791
        %v3676 = vunpack.c.l.b16 %v2792
        %v3677 = vunpack.c.h.b16 %v2792
        %v3678 = vunpack.c.l.b16 %v2793
        %v3679 = vunpack.c.l.b16 %v2794
        %v3680 = vunpack.c.h.b16 %v2794
        %v3681 = vunpack.c.l.b16 %v2795
        %v3682 = vunpack.c.l.b16 %v2796
        %v3683 = vunpack.c.h.b16 %v2796
        %v3684 = vunpack.c.l.b16 %v2797
        %v3685 = vunpack.c.l.b16 %v2798
        %v3686 = vunpack.c.h.b16 %v2798
        %v3687 = vunpack.c.l.b16 %v2799
        %v3688 = vunpack.c.l.b16 %v2800
        %v3689 = vunpack.c.h.b16 %v2800
        %v3690 = vunpack.c.l.b16 %v2801
        %v3691 = vunpack.c.l.b16 %v2802
        %v3692 = vunpack.c.h.b16 %v2802
        %v3693 = vunpack.c.l.b16 %v2803
        %v3694 = vunpack.c.l.b16 %v2804
        %v3695 = vunpack.c.h.b16 %v2804
        %v3696 = vunpack.c.l.b16 %v2805
        %v3697 = vunpack.c.l.b16 %v2806
        %v3698 = vunpack.c.h.b16 %v2806
        %v3699 = vunpack.c.l.b16 %v2807
        %v3700 = vunpack.c.l.b16 %v2808
        %v3701 = vunpack.c.h.b16 %v2808
        %v3702 = vunpack.c.l.b16 %v2809
        %v3703 = vunpack.c.l.b16 %v2810
        %v3704 = vunpack.c.h.b16 %v2810
        %v3705 = vunpack.c.l.b16 %v2811
        %v3706 = vunpack.c.l.b16 %v2812
        %v3707 = vunpack.c.h.b16 %v2812
        %v3708 = vunpack.c.l.b16 %v2813
        %v3709 = vunpack.c.l.b16 %v2814
        %v3710 = vunpack.c.h.b16 %v2814
        %v3711 = vunpack.c.l.b16 %v2815
        %v3712 = vunpack.c.l.b16 %v2816
        %v3713 = vunpack.c.h.b16 %v2816
        %v3714 = vunpack.c.l.b16 %v2817
        %v3715 = vunpack.c.l.b16 %v2818
        %v3716 = vunpack.c.h.b16 %v2818
        %v3717 = vunpack.c.l.b16 %v2819
        %v3718 = vunpack.c.l.b16 %v2820
        %v3719 = vunpack.c.h.b16 %v2820
        %v3720 = vunpack.c.l.b16 %v2821
        %v3721 = vunpack.c.l.b16 %v2822
        %v3722 = vunpack.c.h.b16 %v2822
        %v3723 = vunpack.c.l.b16 %v2823
        %v3724 = vunpack.c.l.b16 %v2824
        %v3725 = vunpack.c.h.b16 %v2824
        %v3726 = vunpack.c.l.b16 %v2825
        %v3727 = vunpack.c.l.b16 %v2826
        %v3728 = vunpack.c.h.b16 %v2826
        %v3729 = vunpack.c.l.b16 %v2827
        %v3730 = vunpack.c.l.b16 %v2828
        %v3731 = vunpack.c.h.b16 %v2828
        %v3732 = vunpack.c.l.b16 %v2829
        %v3733 = vunpack.c.l.b16 %v2830
        %v3734 = vunpack.c.h.b16 %v2830
        %v3735 = vunpack.c.l.b16 %v2831
        %v3736 = vunpack.c.l.b16 %v2832
        %v3737 = vunpack.c.h.b16 %v2832
        %v3738 = vunpack.c.l.b16 %v2833
        %v3739 = vunpack.c.l.b16 %v2834
        %v3740 = vunpack.c.h.b16 %v2834
        %v3741 = vunpack.c.l.b16 %v2835
        %v3742 = vunpack.c.l.b16 %v2836
        %v3743 = vunpack.c.h.b16 %v2836
        %v3744 = vunpack.c.l.b16 %v2837
        %v3745 = vunpack.c.l.b16 %v2838
        %v3746 = vunpack.c.h.b16 %v2838
        %v3747 = vunpack.c.l.b16 %v2839
        %v3748 = vunpack.c.l.b16 %v2840
        %v3749 = vunpack.c.h.b16 %v2840
        %v3750 = vunpack.c.l.b16 %v2841
        %v3751 = vunpack.c.l.b16 %v2842
        %v3752 = vunpack.c.h.b16 %v2842
        %v3753 = vunpack.c.l.b16 %v2843
        %v3754 = vunpack.c.l.b16 %v2844
        %v3755 = vunpack.c.h.b16 %v2844
        %v3756 = vunpack.c.l.b16 %v2845
        %v3757 = vunpack.c.l.b16 %v2846
        %v3758 = vunpack.c.h.b16 %v2846
        %v3759 = vunpack.c.l.b16 %v2847
        %v3760 = vunpack.c.l.b16 %v2848
        %v3761 = vunpack.c.h.b16 %v2848
        %v3762 = vunpack.c.l.b16 %v2849
        %v3763 = vunpack.c.l.b16 %v2850
        %v3764 = vunpack.c.h.b16 %v2850
        %v3765 = vunpack.c.l.b16 %v2851
        %v3766 = vunpack.c.l.b16 %v2852
        %v3767 = vunpack.c.h.b16 %v2852
        %v3768 = vunpack.c.l.b16 %v2853
        %v3769 = vunpack.c.l.b16 %v2854
        %v3770 = vunpack.c.h.b16 %v2854
        %v3771 = vunpack.c.l.b16 %v2855
        %v3772 = vunpack.c.l.b16 %v2856
        %v3773 = vunpack.c.h.b16 %v2856
        %v3774 = vunpack.c.l.b16 %v2857
        %v3775 = vunpack.c.l.b16 %v2858
        %v3776 = vunpack.c.h.b16 %v2858
        %v3777 = vunpack.c.l.b16 %v2859
        %v3778 = vunpack.c.l.b16 %v2860
        %v3779 = vunpack.c.h.b16 %v2860
        %v3780 = vunpack.c.l.b16 %v2861
        %v3781 = vunpack.c.l.b16 %v2862
        %v3782 = vunpack.c.h.b16 %v2862
        %v3783 = vunpack.c.l.b16 %v2863
        %v3784 = vunpack.c.l.b16 %v2864
        %v3785 = vunpack.c.h.b16 %v2864
        %v3786 = vunpack.c.l.b16 %v2865
        %v3787 = vunpack.c.l.b16 %v2866
        %v3788 = vunpack.c.h.b16 %v2866
        %v3789 = vunpack.c.l.b16 %v2867
        %v3790 = vunpack.c.l.b16 %v2868
        %v3791 = vunpack.c.h.b16 %v2868
        %v3792 = vunpack.c.l.b16 %v2869
        %v3793 = vunpack.c.l.b16 %v2870
        %v3794 = vunpack.c.h.b16 %v2870
        %v3795 = vunpack.c.l.b16 %v2871
        %v3796 = vunpack.c.l.b16 %v2872
        %v3797 = vunpack.c.h.b16 %v2872
        %v3798 = vunpack.c.l.b16 %v2873
        %v3799 = vunpack.c.l.b16 %v2874
        %v3800 = vunpack.c.h.b16 %v2874
        %v3801 = vunpack.c.l.b16 %v2875
        %v3802 = vunpack.c.l.b16 %v2876
        %v3803 = vunpack.c.h.b16 %v2876
        %v3804 = vunpack.c.l.b16 %v2877
        %v3805 = vunpack.c.l.b16 %v2878
        %v3806 = vunpack.c.h.b16 %v2878
        %v3807 = vunpack.c.l.b16 %v2879
        %v3808 = vunpack.c.l.b16 %v2880
        %v3809 = vunpack.c.h.b16 %v2880
        %v3810 = vunpack.c.l.b16 %v2881
        %v3811 = vunpack.c.l.b16 %v2882
        %v3812 = vunpack.c.h.b16 %v2882
        %v3813 = vunpack.c.l.b16 %v2883
        %v3814 = vunpack.c.l.b16 %v2884
        %v3815 = vunpack.c.h.b16 %v2884
        %v3816 = vunpack.c.l.b16 %v2885
        %v3817 = vunpack.c.l.b16 %v2886
        %v3818 = vunpack.c.h.b16 %v2886
        %v3819 = vunpack.c.l.b16 %v2887
        %v3820 = vunpack.c.l.b16 %v2888
        %v3821 = vunpack.c.h.b16 %v2888
        %v3822 = vunpack.c.l.b16 %v2889
        %v3823 = vunpack.c.l.b16 %v2890
        %v3824 = vunpack.c.h.b16 %v2890
        %v3825 = vunpack.c.l.b16 %v2891
        %v3826 = vunpack.c.l.b16 %v2892
        %v3827 = vunpack.c.h.b16 %v2892
        %v3828 = vunpack.c.l.b16 %v2893
        %v3829 = vunpack.c.l.b16 %v2894
        %v3830 = vunpack.c.h.b16 %v2894
        %v3831 = vunpack.c.l.b16 %v2895
        %v3832 = vunpack.c.l.b16 %v2896
        %v3833 = vunpack.c.h.b16 %v2896
        %v3834 = vunpack.c.l.b16 %v2897
        %v3835 = vunpack.c.l.b16 %v2898
        %v3836 = vunpack.c.h.b16 %v2898
        %v3837 = vunpack.c.l.b16 %v2899
        %v3838 = vunpack.c.l.b16 %v2900
        %v3839 = vunpack.c.h.b16 %v2900
        %v3840 = vunpack.c.l.b16 %v2901
        %v3841 = vunpack.c.l.b16 %v2902
        %v3842 = vunpack.c.h.b16 %v2902
        %v3843 = vunpack.c.l.b16 %v2903
        %v3844 = vunpack.c.l.b16 %v2904
        %v3845 = vunpack.c.h.b16 %v2904
        %v3846 = vunpack.c.l.b16 %v2905
        %v3847 = vunpack.c.l.b16 %v2906
        %v3848 = vunpack.c.h.b16 %v2906
        %v3849 = vunpack.c.l.b16 %v2907
        %v3850 = vunpack.c.l.b16 %v2908
        %v3851 = vunpack.c.h.b16 %v2908
        %v3852 = vunpack.c.l.b16 %v2909
        %v3853 = vunpack.c.l.b16 %v2910
        %v3854 = vunpack.c.h.b16 %v2910
        %v3855 = vunpack.c.l.b16 %v2911
        %v3856 = vunpack.c.l.b16 %v2912
        %v3857 = vunpack.c.h.b16 %v2912
        %v3858 = vunpack.c.l.b16 %v2913
        %v3859 = vunpack.c.l.b16 %v2914
        %v3860 = vunpack.c.h.b16 %v2914
        %v3861 = vunpack.c.l.b16 %v2915
        %v3862 = vunpack.c.l.b16 %v2916
        %v3863 = vunpack.c.h.b16 %v2916
        %v3864 = vunpack.c.l.b16 %v2917
        %v3865 = vunpack.c.l.b16 %v2918
        %v3866 = vunpack.c.h.b16 %v2918
        %v3867 = vunpack.c.l.b16 %v2919
        %v3868 = vunpack.c.l.b16 %v2920
        %v3869 = vunpack.c.h.b16 %v2920
        %v3870 = vunpack.c.l.b16 %v2921
        %v3871 = vunpack.c.l.b16 %v2922
        %v3872 = vunpack.c.h.b16 %v2922
        %v3873 = vunpack.c.l.b16 %v2923
        %v3874 = vunpack.c.l.b16 %v2924
        %v3875 = vunpack.c.h.b16 %v2924
        %v3876 = vunpack.c.l.b16 %v2925
        %v3877 = vunpack.c.l.b16 %v2926
        %v3878 = vunpack.c.h.b16 %v2926
        %v3879 = vunpack.c.l.b16 %v2927
        %v3880 = vunpack.c.l.b16 %v2928
        %v3881 = vunpack.c.h.b16 %v2928
        %v3882 = vunpack.c.l.b16 %v2929
        %v3883 = vunpack.c.l.b16 %v2930
        %v3884 = vunpack.c.h.b16 %v2930
        %v3885 = vunpack.c.l.b16 %v2931
        %v3886 = vunpack.c.l.b16 %v2932
        %v3887 = vunpack.c.h.b16 %v2932
        %v3888 = vunpack.c.l.b16 %v2933
        %v3889 = vunpack.c.l.b16 %v2934
        %v3890 = vunpack.c.h.b16 %v2934
        %v3891 = vunpack.c.l.b16 %v2935
        %v3892 = vunpack.c.l.b16 %v2936
        %v3893 = vunpack.c.h.b16 %v2936
        %v3894 = vunpack.c.l.b16 %v2937
        %v3895 = vunpack.c.l.b16 %v2938
        %v3896 = vunpack.c.h.b16 %v2938
        %v3897 = vunpack.c.l.b16 %v2939
        %v3898 = vunpack.c.l.b16 %v2940
        %v3899 = vunpack.c.h.b16 %v2940
        %v3900 = vunpack.c.l.b16 %v2941
        %v3901 = vunpack.c.l.b16 %v2942
        %v3902 = vunpack.c.h.b16 %v2942
        %v3903 = vunpack.c.l.b16 %v2943
        %v3904 = vunpack.c.l.b16 %v2944
        %v3905 = vunpack.c.h.b16 %v2944
        %v3906 = vunpack.c.l.b16 %v2945
        %v3907 = vunpack.c.l.b16 %v2946
        %v3908 = vunpack.c.h.b16 %v2946
        %v3909 = vunpack.c.l.b16 %v2947
        %v3910 = vunpack.c.l.b16 %v2948
        %v3911 = vunpack.c.h.b16 %v2948
        %v3912 = vunpack.c.l.b16 %v2949
        %v3913 = vunpack.c.l.b16 %v2950
        %v3914 = vunpack.c.h.b16 %v2950
        %v3915 = vunpack.c.l.b16 %v2951
        %v3916 = vunpack.c.l.b16 %v2952
        %v3917 = vunpack.c.h.b16 %v2952
        %v3918 = vunpack.c.l.b16 %v2953
        %v3919 = vunpack.c.l.b16 %v2954
        %v3920 = vunpack.c.h.b16 %v2954
        %v3921 = vunpack.c.l.b16 %v2955
        %v3922 = vunpack.c.l.b16 %v2956
        %v3923 = vunpack.c.h.b16 %v2956
        %v3924 = vunpack.c.l.b16 %v2957
        %v3925 = vunpack.c.l.b16 %v2958
        %v3926 = vunpack.c.h.b16 %v2958
        %v3927 = vunpack.c.l.b16 %v2959
        %v3928 = vunpack.c.l.b16 %v2960
        %v3929 = vunpack.c.h.b16 %v2960
        %v3930 = vunpack.c.l.b16 %v2961
        %v3931 = vunpack.c.l.b16 %v2962
        %v3932 = vunpack.c.h.b16 %v2962
        %v3933 = vunpack.c.l.b16 %v2963
        %v3934 = vunpack.c.l.b16 %v2964
        %v3935 = vunpack.c.h.b16 %v2964
        %v3936 = vunpack.c.l.b16 %v2965
        %v3937 = vunpack.c.l.b16 %v2966
        %v3938 = vunpack.c.h.b16 %v2966
        %v3939 = vunpack.c.l.b16 %v2967
        %v3940 = vunpack.c.l.b16 %v2968
        %v3941 = vunpack.c.h.b16 %v2968
        %v3942 = vunpack.c.l.b16 %v2969
        %v3943 = vunpack.c.l.b16 %v2970
        %v3944 = vunpack.c.h.b16 %v2970
        %v3945 = vunpack.c.l.b16 %v2971
        %v3946 = vunpack.c.l.b16 %v2972
        %v3947 = vunpack.c.h.b16 %v2972
        %v3948 = vunpack.c.l.b16 %v2973
        %v3949 = vunpack.c.l.b16 %v2974
        %v3950 = vunpack.c.h.b16 %v2974
        %v3951 = vunpack.c.l.b16 %v2975
        %v3952 = vunpack.c.l.b16 %v2976
        %v3953 = vunpack.c.h.b16 %v2976
        %v3954 = vunpack.c.l.b16 %v2977
        %v3955 = vpack.c.b16 %v3382, %v3379
        %v3956 = vpack.c.b16 %v3383, %v3380
        %v3957 = vpack.c.b16 %v3384, %v3381
        %v3958 = vpack.c.b16 %v3388, %v3385
        %v3959 = vpack.c.b16 %v3389, %v3386
        %v3960 = vpack.c.b16 %v3390, %v3387
        %v3961 = vpack.c.b16 %v3394, %v3391
        %v3962 = vpack.c.b16 %v3395, %v3392
        %v3963 = vpack.c.b16 %v3396, %v3393
        %v3964 = vpack.c.b16 %v3400, %v3397
        %v3965 = vpack.c.b16 %v3401, %v3398
        %v3966 = vpack.c.b16 %v3402, %v3399
        %v3967 = vpack.c.b16 %v3406, %v3403
        %v3968 = vpack.c.b16 %v3407, %v3404
        %v3969 = vpack.c.b16 %v3408, %v3405
        %v3970 = vpack.c.b16 %v3412, %v3409
        %v3971 = vpack.c.b16 %v3413, %v3410
        %v3972 = vpack.c.b16 %v3414, %v3411
        %v3973 = vpack.c.b16 %v3418, %v3415
        %v3974 = vpack.c.b16 %v3419, %v3416
        %v3975 = vpack.c.b16 %v3420, %v3417
        %v3976 = vpack.c.b16 %v3424, %v3421
        %v3977 = vpack.c.b16 %v3425, %v3422
        %v3978 = vpack.c.b16 %v3426, %v3423
        %v3979 = vpack.c.b16 %v3430, %v3427
        %v3980 = vpack.c.b16 %v3431, %v3428
        %v3981 = vpack.c.b16 %v3432, %v3429
        %v3982 = vpack.c.b16 %v3436, %v3433
        %v3983 = vpack.c.b16 %v3437, %v3434
        %v3984 = vpack.c.b16 %v3438, %v3435
        %v3985 = vpack.c.b16 %v3442, %v3439
        %v3986 = vpack.c.b16 %v3443, %v3440
        %v3987 = vpack.c.b16 %v3444, %v3441
        %v3988 = vpack.c.b16 %v3448, %v3445
        %v3989 = vpack.c.b16 %v3449, %v3446
        %v3990 = vpack.c.b16 %v3450, %v3447
        %v3991 = vpack.c.b16 %v3454, %v3451
        %v3992 = vpack.c.b16 %v3455, %v3452
        %v3993 = vpack.c.b16 %v3456, %v3453
        %v3994 = vpack.c.b16 %v3460, %v3457
        %v3995 = vpack.c.b16 %v3461, %v3458
        %v3996 = vpack.c.b16 %v3462, %v3459
        %v3997 = vpack.c.b16 %v3466, %v3463
        %v3998 = vpack.c.b16 %v3467, %v3464
        %v3999 = vpack.c.b16 %v3468, %v3465
        %v4000 = vpack.c.b16 %v3472, %v3469
        %v4001 = vpack.c.b16 %v3473, %v3470
        %v4002 = vpack.c.b16 %v3474, %v3471
        %v4003 = vpack.c.b16 %v3478, %v3475
        %v4004 = vpack.c.b16 %v3479, %v3476
        %v4005 = vpack.c.b16 %v3480, %v3477
        %v4006 = vpack.c.b16 %v3484, %v3481
        %v4007 = vpack.c.b16 %v3485, %v3482
        %v4008 = vpack.c.b16 %v3486, %v3483
        %v4009 = vpack.c.b16 %v3490, %v3487
        %v4010 = vpack.c.b16 %v3491, %v3488
        %v4011 = vpack.c.b16 %v3492, %v3489
        %v4012 = vpack.c.b16 %v3496, %v3493
        %v4013 = vpack.c.b16 %v3497, %v3494
        %v4014 = vpack.c.b16 %v3498, %v3495
        %v4015 = vpack.c.b16 %v3502, %v3499
        %v4016 = vpack.c.b16 %v3503, %v3500
        %v4017 = vpack.c.b16 %v3504, %v3501
        %v4018 = vpack.c.b16 %v3508, %v3505
        %v4019 = vpack.c.b16 %v3509, %v3506
        %v4020 = vpack.c.b16 %v3510, %v3507
        %v4021 = vpack.c.b16 %v3514, %v3511
        %v4022 = vpack.c.b16 %v3515, %v3512
        %v4023 = vpack.c.b16 %v3516, %v3513
        %v4024 = vpack.c.b16 %v3520, %v3517
        %v4025 = vpack.c.b16 %v3521, %v3518
        %v4026 = vpack.c.b16 %v3522, %v3519
        %v4027 = vpack.c.b16 %v3526, %v3523
        %v4028 = vpack.c.b16 %v3527, %v3524
        %v4029 = vpack.c.b16 %v3528, %v3525
        %v4030 = vpack.c.b16 %v3532, %v3529
        %v4031 = vpack.c.b16 %v3533, %v3530
        %v4032 = vpack.c.b16 %v3534, %v3531
        %v4033 = vpack.c.b16 %v3538, %v3535
        %v4034 = vpack.c.b16 %v3539, %v3536
        %v4035 = vpack.c.b16 %v3540, %v3537
        %v4036 = vpack.c.b16 %v3544, %v3541
        %v4037 = vpack.c.b16 %v3545, %v3542
        %v4038 = vpack.c.b16 %v3546, %v3543
        %v4039 = vpack.c.b16 %v3550, %v3547
        %v4040 = vpack.c.b16 %v3551, %v3548
        %v4041 = vpack.c.b16 %v3552, %v3549
        %v4042 = vpack.c.b16 %v3556, %v3553
        %v4043 = vpack.c.b16 %v3557, %v3554
        %v4044 = vpack.c.b16 %v3558, %v3555
        %v4045 = vpack.c.b16 %v3562, %v3559
        %v4046 = vpack.c.b16 %v3563, %v3560
        %v4047 = vpack.c.b16 %v3564, %v3561
        %v4048 = vpack.c.b16 %v3568, %v3565
        %v4049 = vpack.c.b16 %v3569, %v3566
        %v4050 = vpack.c.b16 %v3570, %v3567
        %v4051 = vpack.c.b16 %v3574, %v3571
        %v4052 = vpack.c.b16 %v3575, %v3572
        %v4053 = vpack.c.b16 %v3576, %v3573
        %v4054 = vpack.c.b16 %v3580, %v3577
        %v4055 = vpack.c.b16 %v3581, %v3578
        %v4056 = vpack.c.b16 %v3582, %v3579
        %v4057 = vpack.c.b16 %v3586, %v3583
        %v4058 = vpack.c.b16 %v3587, %v3584
        %v4059 = vpack.c.b16 %v3588, %v3585
        %v4060 = vpack.c.b16 %v3592, %v3589
        %v4061 = vpack.c.b16 %v3593, %v3590
        %v4062 = vpack.c.b16 %v3594, %v3591
        %v4063 = vpack.c.b16 %v3598, %v3595
        %v4064 = vpack.c.b16 %v3599, %v3596
        %v4065 = vpack.c.b16 %v3600, %v3597
        %v4066 = vpack.c.b16 %v3604, %v3601
        %v4067 = vpack.c.b16 %v3605, %v3602
        %v4068 = vpack.c.b16 %v3606, %v3603
        %v4069 = vpack.c.b16 %v3610, %v3607
        %v4070 = vpack.c.b16 %v3611, %v3608
        %v4071 = vpack.c.b16 %v3612, %v3609
        %v4072 = vpack.c.b16 %v3616, %v3613
        %v4073 = vpack.c.b16 %v3617, %v3614
        %v4074 = vpack.c.b16 %v3618, %v3615
        %v4075 = vpack.c.b16 %v3622, %v3619
        %v4076 = vpack.c.b16 %v3623, %v3620
        %v4077 = vpack.c.b16 %v3624, %v3621
        %v4078 = vpack.c.b16 %v3628, %v3625
        %v4079 = vpack.c.b16 %v3629, %v3626
        %v4080 = vpack.c.b16 %v3630, %v3627
        %v4081 = vpack.c.b16 %v3634, %v3631
        %v4082 = vpack.c.b16 %v3635, %v3632
        %v4083 = vpack.c.b16 %v3636, %v3633
        %v4084 = vpack.c.b16 %v3640, %v3637
        %v4085 = vpack.c.b16 %v3641, %v3638
        %v4086 = vpack.c.b16 %v3642, %v3639
        %v4087 = vpack.c.b16 %v3646, %v3643
        %v4088 = vpack.c.b16 %v3647, %v3644
        %v4089 = vpack.c.b16 %v3648, %v3645
        %v4090 = vpack.c.b16 %v3652, %v3649
        %v4091 = vpack.c.b16 %v3653, %v3650
        %v4092 = vpack.c.b16 %v3654, %v3651
        %v4093 = vpack.c.b16 %v3658, %v3655
        %v4094 = vpack.c.b16 %v3659, %v3656
        %v4095 = vpack.c.b16 %v3660, %v3657
        %v4096 = vpack.c.b16 %v3664, %v3661
        %v4097 = vpack.c.b16 %v3665, %v3662
        %v4098 = vpack.c.b16 %v3666, %v3663
        %v4099 = vpack.c.b16 %v3670, %v3667
        %v4100 = vpack.c.b16 %v3671, %v3668
        %v4101 = vpack.c.b16 %v3672, %v3669
        %v4102 = vpack.c.b16 %v3676, %v3673
        %v4103 = vpack.c.b16 %v3677, %v3674
        %v4104 = vpack.c.b16 %v3678, %v3675
        %v4105 = vpack.c.b16 %v3682, %v3679
        %v4106 = vpack.c.b16 %v3683, %v3680
        %v4107 = vpack.c.b16 %v3684, %v3681
        %v4108 = vpack.c.b16 %v3688, %v3685
        %v4109 = vpack.c.b16 %v3689, %v3686
        %v4110 = vpack.c.b16 %v3690, %v3687
        %v4111 = vpack.c.b16 %v3694, %v3691
        %v4112 = vpack.c.b16 %v3695, %v3692
        %v4113 = vpack.c.b16 %v3696, %v3693
        %v4114 = vpack.c.b16 %v3700, %v3697
        %v4115 = vpack.c.b16 %v3701, %v3698
        %v4116 = vpack.c.b16 %v3702, %v3699
        %v4117 = vpack.c.b16 %v3706, %v3703
        %v4118 = vpack.c.b16 %v3707, %v3704
        %v4119 = vpack.c.b16 %v3708, %v3705
        %v4120 = vpack.c.b16 %v3712, %v3709
        %v4121 = vpack.c.b16 %v3713, %v3710
        %v4122 = vpack.c.b16 %v3714, %v3711
        %v4123 = vpack.c.b16 %v3718, %v3715
        %v4124 = vpack.c.b16 %v3719, %v3716
        %v4125 = vpack.c.b16 %v3720, %v3717
        %v4126 = vpack.c.b16 %v3724, %v3721
        %v4127 = vpack.c.b16 %v3725, %v3722
        %v4128 = vpack.c.b16 %v3726, %v3723
        %v4129 = vpack.c.b16 %v3730, %v3727
        %v4130 = vpack.c.b16 %v3731, %v3728
        %v4131 = vpack.c.b16 %v3732, %v3729
        %v4132 = vpack.c.b16 %v3736, %v3733
        %v4133 = vpack.c.b16 %v3737, %v3734
        %v4134 = vpack.c.b16 %v3738, %v3735
        %v4135 = vpack.c.b16 %v3742, %v3739
        %v4136 = vpack.c.b16 %v3743, %v3740
        %v4137 = vpack.c.b16 %v3744, %v3741
        %v4138 = vpack.c.b16 %v3748, %v3745
        %v4139 = vpack.c.b16 %v3749, %v3746
        %v4140 = vpack.c.b16 %v3750, %v3747
        %v4141 = vpack.c.b16 %v3754, %v3751
        %v4142 = vpack.c.b16 %v3755, %v3752
        %v4143 = vpack.c.b16 %v3756, %v3753
        %v4144 = vpack.c.b16 %v3760, %v3757
        %v4145 = vpack.c.b16 %v3761, %v3758
        %v4146 = vpack.c.b16 %v3762, %v3759
        %v4147 = vpack.c.b16 %v3766, %v3763
        %v4148 = vpack.c.b16 %v3767, %v3764
        %v4149 = vpack.c.b16 %v3768, %v3765
        %v4150 = vpack.c.b16 %v3772, %v3769
        %v4151 = vpack.c.b16 %v3773, %v3770
        %v4152 = vpack.c.b16 %v3774, %v3771
        %v4153 = vpack.c.b16 %v3778, %v3775
        %v4154 = vpack.c.b16 %v3779, %v3776
        %v4155 = vpack.c.b16 %v3780, %v3777
        %v4156 = vpack.c.b16 %v3784, %v3781
        %v4157 = vpack.c.b16 %v3785, %v3782
        %v4158 = vpack.c.b16 %v3786, %v3783
        %v4159 = vpack.c.b16 %v3790, %v3787
        %v4160 = vpack.c.b16 %v3791, %v3788
        %v4161 = vpack.c.b16 %v3792, %v3789
        %v4162 = vpack.c.b16 %v3796, %v3793
        %v4163 = vpack.c.b16 %v3797, %v3794
        %v4164 = vpack.c.b16 %v3798, %v3795
        %v4165 = vpack.c.b16 %v3802, %v3799
        %v4166 = vpack.c.b16 %v3803, %v3800
        %v4167 = vpack.c.b16 %v3804, %v3801
        %v4168 = vpack.c.b16 %v3808, %v3805
        %v4169 = vpack.c.b16 %v3809, %v3806
        %v4170 = vpack.c.b16 %v3810, %v3807
        %v4171 = vpack.c.b16 %v3814, %v3811
        %v4172 = vpack.c.b16 %v3815, %v3812
        %v4173 = vpack.c.b16 %v3816, %v3813
        %v4174 = vpack.c.b16 %v3820, %v3817
        %v4175 = vpack.c.b16 %v3821, %v3818
        %v4176 = vpack.c.b16 %v3822, %v3819
        %v4177 = vpack.c.b16 %v3826, %v3823
        %v4178 = vpack.c.b16 %v3827, %v3824
        %v4179 = vpack.c.b16 %v3828, %v3825
        %v4180 = vpack.c.b16 %v3832, %v3829
        %v4181 = vpack.c.b16 %v3833, %v3830
        %v4182 = vpack.c.b16 %v3834, %v3831
        %v4183 = vpack.c.b16 %v3838, %v3835
        %v4184 = vpack.c.b16 %v3839, %v3836
        %v4185 = vpack.c.b16 %v3840, %v3837
        %v4186 = vpack.c.b16 %v3844, %v3841
        %v4187 = vpack.c.b16 %v3845, %v3842
        %v4188 = vpack.c.b16 %v3846, %v3843
        %v4189 = vpack.c.b16 %v3850, %v3847
        %v4190 = vpack.c.b16 %v3851, %v3848
        %v4191 = vpack.c.b16 %v3852, %v3849
        %v4192 = vpack.c.b16 %v3856, %v3853
        %v4193 = vpack.c.b16 %v3857, %v3854
        %v4194 = vpack.c.b16 %v3858, %v3855
        %v4195 = vpack.c.b16 %v3862, %v3859
        %v4196 = vpack.c.b16 %v3863, %v3860
        %v4197 = vpack.c.b16 %v3864, %v3861
        %v4198 = vpack.c.b16 %v3868, %v3865
        %v4199 = vpack.c.b16 %v3869, %v3866
        %v4200 = vpack.c.b16 %v3870, %v3867
        %v4201 = vpack.c.b16 %v3874, %v3871
        %v4202 = vpack.c.b16 %v3875, %v3872
        %v4203 = vpack.c.b16 %v3876, %v3873
        %v4204 = vpack.c.b16 %v3880, %v3877
        %v4205 = vpack.c.b16 %v3881, %v3878
        %v4206 = vpack.c.b16 %v3882, %v3879
        %v4207 = vpack.c.b16 %v3886, %v3883
        %v4208 = vpack.c.b16 %v3887, %v3884
        %v4209 = vpack.c.b16 %v3888, %v3885
        %v4210 = vpack.c.b16 %v3892, %v3889
        %v4211 = vpack.c.b16 %v3893, %v3890
        %v4212 = vpack.c.b16 %v3894, %v3891
        %v4213 = vpack.c.b16 %v3898, %v3895
        %v4214 = vpack.c.b16 %v3899, %v3896
        %v4215 = vpack.c.b16 %v3900, %v3897
        %v4216 = vpack.c.b16 %v3904, %v3901
        %v4217 = vpack.c.b16 %v3905, %v3902
        %v4218 = vpack.c.b16 %v3906, %v3903
        %v4219 = vpack.c.b16 %v3910, %v3907
        %v4220 = vpack.c.b16 %v3911, %v3908
        %v4221 = vpack.c.b16 %v3912, %v3909
        %v4222 = vpack.c.b16 %v3916, %v3913
        %v4223 = vpack.c.b16 %v3917, %v3914
        %v4224 = vpack.c.b16 %v3918, %v3915
        %v4225 = vpack.c.b16 %v3922, %v3919
        %v4226 = vpack.c.b16 %v3923, %v3920
        %v4227 = vpack.c.b16 %v3924, %v3921
        %v4228 = vpack.c.b16 %v3928, %v3925
        %v4229 = vpack.c.b16 %v3929, %v3926
        %v4230 = vpack.c.b16 %v3930, %v3927
        %v4231 = vpack.c.b16 %v3934, %v3931
        %v4232 = vpack.c.b16 %v3935, %v3932
        %v4233 = vpack.c.b16 %v3936, %v3933
        %v4234 = vpack.c.b16 %v3940, %v3937
        %v4235 = vpack.c.b16 %v3941, %v3938
        %v4236 = vpack.c.b16 %v3942, %v3939
        %v4237 = vpack.c.b16 %v3946, %v3943
        %v4238 = vpack.c.b16 %v3947, %v3944
        %v4239 = vpack.c.b16 %v3948, %v3945
        %v4240 = vpack.c.b16 %v3952, %v3949
        %v4241 = vpack.c.b16 %v3953, %v3950
        %v4242 = vpack.c.b16 %v3954, %v3951
        %4531 = vmatprep.subr.bf16.mxu0 %v3956
        %4532 = vmatpush1.bf16.msra.mxu0 %v3955
        %4533 = vmatprep.subr.bf16.mxu0 %v3959
        %4534 = vmatpush1.bf16.msra.mxu0 %v3958
        %4535 = vmatprep.subr.bf16.mxu0 %v3962
        %4536 = vmatpush1.bf16.msra.mxu0 %v3961
        %4537 = vmatprep.subr.bf16.mxu0 %v3965
        %4538 = vmatpush1.bf16.msra.mxu0 %v3964
        %4539 = vmatprep.subr.bf16.mxu0 %v3968
        %4540 = vmatpush1.bf16.msra.mxu0 %v3967
        %4541 = vmatprep.subr.bf16.mxu0 %v3971
        %4542 = vmatpush1.bf16.msra.mxu0 %v3970
        %4543 = vmatprep.subr.bf16.mxu0 %v3974
        %4544 = vmatpush1.bf16.msra.mxu0 %v3973
        %4545 = vmatprep.subr.bf16.mxu0 %v3977
        %4546 = vmatpush1.bf16.msra.mxu0 %v3976
        %4547 = vmatprep.subr.bf16.mxu0 %v3980
        %4548 = vmatpush1.bf16.msra.mxu0 %v3979
        %4549 = vmatprep.subr.bf16.mxu0 %v3983
        %4550 = vmatpush1.bf16.msra.mxu0 %v3982
        %4551 = vmatprep.subr.bf16.mxu0 %v3986
        %4552 = vmatpush1.bf16.msra.mxu0 %v3985
        %4553 = vmatprep.subr.bf16.mxu0 %v3989
        %4554 = vmatpush1.bf16.msra.mxu0 %v3988
        %4555 = vmatprep.subr.bf16.mxu0 %v3992
        %4556 = vmatpush1.bf16.msra.mxu0 %v3991
        %4557 = vmatprep.subr.bf16.mxu0 %v3995
        %4558 = vmatpush1.bf16.msra.mxu0 %v3994
        %4559 = vmatprep.subr.bf16.mxu0 %v3998
        %4560 = vmatpush1.bf16.msra.mxu0 %v3997
        %4561 = vmatprep.subr.bf16.mxu0 %v4001
        %4562 = vmatpush1.bf16.msra.mxu0 %v4000
        %4563 = vmatprep.mubr.bf16.mxu0 %v2583
        %4564 = vmatmul.mubr.bf16.gmra.mrb[0].mxu0 %v2582
        %v4565 = vpop.f32.mrb[0].mxu0
        %v4566 = vadd.f32 %v2983, %v4565
        %v4567 = vpop.f32.mrb[0].mxu0
        %v4568 = vadd.f32 %v2987, %v4567
        %v4569 = vpop.f32.mrb[0].mxu0
        %v4570 = vadd.f32 %v2983, %v4569
        %v4571 = vpop.f32.mrb[0].mxu0
        %v4572 = vadd.f32 %v2987, %v4571
        %4573 = vdwg.mxu0
        %4574 = vmatprep.subr.bf16.mxu0 %v4004
        %4575 = vmatpush1.bf16.msra.mxu0 %v4003
        %4576 = vmatprep.subr.bf16.mxu0 %v4007
        %4577 = vmatpush1.bf16.msra.mxu0 %v4006
        %4578 = vmatprep.subr.bf16.mxu0 %v4010
        %4579 = vmatpush1.bf16.msra.mxu0 %v4009
        %4580 = vmatprep.subr.bf16.mxu0 %v4013
        %4581 = vmatpush1.bf16.msra.mxu0 %v4012
        %4582 = vmatprep.subr.bf16.mxu0 %v4016
        %4583 = vmatpush1.bf16.msra.mxu0 %v4015
        %4584 = vmatprep.subr.bf16.mxu0 %v4019
        %4585 = vmatpush1.bf16.msra.mxu0 %v4018
        %4586 = vmatprep.subr.bf16.mxu0 %v4022
        %4587 = vmatpush1.bf16.msra.mxu0 %v4021
        %4588 = vmatprep.subr.bf16.mxu0 %v4025
        %4589 = vmatpush1.bf16.msra.mxu0 %v4024
        %4590 = vmatprep.subr.bf16.mxu0 %v4028
        %4591 = vmatpush1.bf16.msra.mxu0 %v4027
        %4592 = vmatprep.subr.bf16.mxu0 %v4031
        %4593 = vmatpush1.bf16.msra.mxu0 %v4030
        %4594 = vmatprep.subr.bf16.mxu0 %v4034
        %4595 = vmatpush1.bf16.msra.mxu0 %v4033
        %4596 = vmatprep.subr.bf16.mxu0 %v4037
        %4597 = vmatpush1.bf16.msra.mxu0 %v4036
        %4598 = vmatprep.subr.bf16.mxu0 %v4040
        %4599 = vmatpush1.bf16.msra.mxu0 %v4039
        %4600 = vmatprep.subr.bf16.mxu0 %v4043
        %4601 = vmatpush1.bf16.msra.mxu0 %v4042
        %4602 = vmatprep.subr.bf16.mxu0 %v4046
        %4603 = vmatpush1.bf16.msra.mxu0 %v4045
        %4604 = vmatprep.subr.bf16.mxu0 %v4049
        %4605 = vmatpush1.bf16.msra.mxu0 %v4048
        %4606 = vmatprep.mubr.bf16.mxu0 %v2585
        %4607 = vmatmul.mubr.bf16.gmra.mrb[0].mxu0 %v2584
        %v4608 = vpop.f32.mrb[0].mxu0
        %v4609 = vadd.f32 %v4566, %v4608
        %v4610 = vpop.f32.mrb[0].mxu0
        %v4611 = vadd.f32 %v4568, %v4610
        %v4612 = vpop.f32.mrb[0].mxu0
        %v4613 = vadd.f32 %v4570, %v4612
        %v4614 = vpop.f32.mrb[0].mxu0
        %v4615 = vadd.f32 %v4572, %v4614
        %4616 = vdwg.mxu0
        %4617 = vmatprep.subr.bf16.mxu0 %v4052
        %4618 = vmatpush1.bf16.msra.mxu0 %v4051
        %4619 = vmatprep.subr.bf16.mxu0 %v4055
        %4620 = vmatpush1.bf16.msra.mxu0 %v4054
        %4621 = vmatprep.subr.bf16.mxu0 %v4058
        %4622 = vmatpush1.bf16.msra.mxu0 %v4057
        %4623 = vmatprep.subr.bf16.mxu0 %v4061
        %4624 = vmatpush1.bf16.msra.mxu0 %v4060
        %4625 = vmatprep.subr.bf16.mxu0 %v4064
        %4626 = vmatpush1.bf16.msra.mxu0 %v4063
        %4627 = vmatprep.subr.bf16.mxu0 %v4067
        %4628 = vmatpush1.bf16.msra.mxu0 %v4066
        %4629 = vmatprep.subr.bf16.mxu0 %v4070
        %4630 = vmatpush1.bf16.msra.mxu0 %v4069
        %4631 = vmatprep.subr.bf16.mxu0 %v4073
        %4632 = vmatpush1.bf16.msra.mxu0 %v4072
        %4633 = vmatprep.subr.bf16.mxu0 %v4076
        %4634 = vmatpush1.bf16.msra.mxu0 %v4075
        %4635 = vmatprep.subr.bf16.mxu0 %v4079
        %4636 = vmatpush1.bf16.msra.mxu0 %v4078
        %4637 = vmatprep.subr.bf16.mxu0 %v4082
        %4638 = vmatpush1.bf16.msra.mxu0 %v4081
        %4639 = vmatprep.subr.bf16.mxu0 %v4085
        %4640 = vmatpush1.bf16.msra.mxu0 %v4084
        %4641 = vmatprep.subr.bf16.mxu0 %v4088
        %4642 = vmatpush1.bf16.msra.mxu0 %v4087
        %4643 = vmatprep.subr.bf16.mxu0 %v4091
        %4644 = vmatpush1.bf16.msra.mxu0 %v4090
        %4645 = vmatprep.subr.bf16.mxu0 %v4094
        %4646 = vmatpush1.bf16.msra.mxu0 %v4093
        %4647 = vmatprep.subr.bf16.mxu0 %v4097
        %4648 = vmatpush1.bf16.msra.mxu0 %v4096
        %4649 = vmatprep.mubr.bf16.mxu0 %v2587
        %4650 = vmatmul.mubr.bf16.gmra.mrb[0].mxu0 %v2586
        %v4651 = vpop.f32.mrb[0].mxu0
        %v4652 = vadd.f32 %v4609, %v4651
        %v4653 = vpop.f32.mrb[0].mxu0
        %v4654 = vadd.f32 %v4611, %v4653
        %v4655 = vpop.f32.mrb[0].mxu0
        %v4656 = vadd.f32 %v4613, %v4655
        %v4657 = vpop.f32.mrb[0].mxu0
        %v4658 = vadd.f32 %v4615, %v4657
        %4659 = vdwg.mxu0
        %4660 = vmatprep.subr.bf16.mxu0 %v4100
        %4661 = vmatpush1.bf16.msra.mxu0 %v4099
        %4662 = vmatprep.subr.bf16.mxu0 %v4103
        %4663 = vmatpush1.bf16.msra.mxu0 %v4102
        %4664 = vmatprep.subr.bf16.mxu0 %v4106
        %4665 = vmatpush1.bf16.msra.mxu0 %v4105
        %4666 = vmatprep.subr.bf16.mxu0 %v4109
        %4667 = vmatpush1.bf16.msra.mxu0 %v4108
        %4668 = vmatprep.subr.bf16.mxu0 %v4112
        %4669 = vmatpush1.bf16.msra.mxu0 %v4111
        %4670 = vmatprep.subr.bf16.mxu0 %v4115
        %4671 = vmatpush1.bf16.msra.mxu0 %v4114
        %4672 = vmatprep.subr.bf16.mxu0 %v4118
        %4673 = vmatpush1.bf16.msra.mxu0 %v4117
        %4674 = vmatprep.subr.bf16.mxu0 %v4121
        %4675 = vmatpush1.bf16.msra.mxu0 %v4120
        %4676 = vmatprep.subr.bf16.mxu0 %v4124
        %4677 = vmatpush1.bf16.msra.mxu0 %v4123
        %4678 = vmatprep.subr.bf16.mxu0 %v4127
        %4679 = vmatpush1.bf16.msra.mxu0 %v4126
        %4680 = vmatprep.subr.bf16.mxu0 %v4130
        %4681 = vmatpush1.bf16.msra.mxu0 %v4129
        %4682 = vmatprep.subr.bf16.mxu0 %v4133
        %4683 = vmatpush1.bf16.msra.mxu0 %v4132
        %4684 = vmatprep.subr.bf16.mxu0 %v4136
        %4685 = vmatpush1.bf16.msra.mxu0 %v4135
        %4686 = vmatprep.subr.bf16.mxu0 %v4139
        %4687 = vmatpush1.bf16.msra.mxu0 %v4138
        %4688 = vmatprep.subr.bf16.mxu0 %v4142
        %4689 = vmatpush1.bf16.msra.mxu0 %v4141
        %4690 = vmatprep.subr.bf16.mxu0 %v4145
        %4691 = vmatpush1.bf16.msra.mxu0 %v4144
        %4692 = vmatprep.mubr.bf16.mxu0 %v2589
        %4693 = vmatmul.mubr.bf16.gmra.mrb[0].mxu0 %v2588
        %v4694 = vpop.f32.mrb[0].mxu0
        %v4695 = vadd.f32 %v4652, %v4694
        %v4696 = vpop.f32.mrb[0].mxu0
        %v4697 = vadd.f32 %v4654, %v4696
        %v4698 = vpop.f32.mrb[0].mxu0
        %v4699 = vadd.f32 %v4656, %v4698
        %v4700 = vpop.f32.mrb[0].mxu0
        %v4701 = vadd.f32 %v4658, %v4700
        %4702 = vdwg.mxu0
        %4703 = vmatprep.subr.bf16.mxu0 %v4148
        %4704 = vmatpush1.bf16.msra.mxu0 %v4147
        %4705 = vmatprep.subr.bf16.mxu0 %v4151
        %4706 = vmatpush1.bf16.msra.mxu0 %v4150
        %4707 = vmatprep.subr.bf16.mxu0 %v4154
        %4708 = vmatpush1.bf16.msra.mxu0 %v4153
        %4709 = vmatprep.subr.bf16.mxu0 %v4157
        %4710 = vmatpush1.bf16.msra.mxu0 %v4156
        %4711 = vmatprep.subr.bf16.mxu0 %v4160
        %4712 = vmatpush1.bf16.msra.mxu0 %v4159
        %4713 = vmatprep.subr.bf16.mxu0 %v4163
        %4714 = vmatpush1.bf16.msra.mxu0 %v4162
        %4715 = vmatprep.subr.bf16.mxu0 %v4166
        %4716 = vmatpush1.bf16.msra.mxu0 %v4165
        %4717 = vmatprep.subr.bf16.mxu0 %v4169
        %4718 = vmatpush1.bf16.msra.mxu0 %v4168
        %4719 = vmatprep.subr.bf16.mxu0 %v4172
        %4720 = vmatpush1.bf16.msra.mxu0 %v4171
        %4721 = vmatprep.subr.bf16.mxu0 %v4175
        %4722 = vmatpush1.bf16.msra.mxu0 %v4174
        %4723 = vmatprep.subr.bf16.mxu0 %v4178
        %4724 = vmatpush1.bf16.msra.mxu0 %v4177
        %4725 = vmatprep.subr.bf16.mxu0 %v4181
        %4726 = vmatpush1.bf16.msra.mxu0 %v4180
        %4727 = vmatprep.subr.bf16.mxu0 %v4184
        %4728 = vmatpush1.bf16.msra.mxu0 %v4183
        %4729 = vmatprep.subr.bf16.mxu0 %v4187
        %4730 = vmatpush1.bf16.msra.mxu0 %v4186
        %4731 = vmatprep.subr.bf16.mxu0 %v4190
        %4732 = vmatpush1.bf16.msra.mxu0 %v4189
        %4733 = vmatprep.subr.bf16.mxu0 %v4193
        %4734 = vmatpush1.bf16.msra.mxu0 %v4192
        %4735 = vmatprep.mubr.bf16.mxu0 %v2591
        %4736 = vmatmul.mubr.bf16.gmra.mrb[0].mxu0 %v2590
        %v4737 = vpop.f32.mrb[0].mxu0
        %v4738 = vadd.f32 %v4695, %v4737
        %v4739 = vpop.f32.mrb[0].mxu0
        %v4740 = vadd.f32 %v4697, %v4739
        %v4741 = vpop.f32.mrb[0].mxu0
        %v4742 = vadd.f32 %v4699, %v4741
        %v4743 = vpop.f32.mrb[0].mxu0
        %v4744 = vadd.f32 %v4701, %v4743
        %4745 = vdwg.mxu0
        %4746 = vmatprep.subr.bf16.mxu0 %v4196
        %4747 = vmatpush1.bf16.msra.mxu0 %v4195
        %4748 = vmatprep.subr.bf16.mxu0 %v4199
        %4749 = vmatpush1.bf16.msra.mxu0 %v4198
        %4750 = vmatprep.subr.bf16.mxu0 %v4202
        %4751 = vmatpush1.bf16.msra.mxu0 %v4201
        %4752 = vmatprep.subr.bf16.mxu0 %v4205
        %4753 = vmatpush1.bf16.msra.mxu0 %v4204
        %4754 = vmatprep.subr.bf16.mxu0 %v4208
        %4755 = vmatpush1.bf16.msra.mxu0 %v4207
        %4756 = vmatprep.subr.bf16.mxu0 %v4211
        %4757 = vmatpush1.bf16.msra.mxu0 %v4210
        %4758 = vmatprep.subr.bf16.mxu0 %v4214
        %4759 = vmatpush1.bf16.msra.mxu0 %v4213
        %4760 = vmatprep.subr.bf16.mxu0 %v4217
        %4761 = vmatpush1.bf16.msra.mxu0 %v4216
        %4762 = vmatprep.subr.bf16.mxu0 %v4220
        %4763 = vmatpush1.bf16.msra.mxu0 %v4219
        %4764 = vmatprep.subr.bf16.mxu0 %v4223
        %4765 = vmatpush1.bf16.msra.mxu0 %v4222
        %4766 = vmatprep.subr.bf16.mxu0 %v4226
        %4767 = vmatpush1.bf16.msra.mxu0 %v4225
        %4768 = vmatprep.subr.bf16.mxu0 %v4229
        %4769 = vmatpush1.bf16.msra.mxu0 %v4228
        %4770 = vmatprep.subr.bf16.mxu0 %v4232
        %4771 = vmatpush1.bf16.msra.mxu0 %v4231
        %4772 = vmatprep.subr.bf16.mxu0 %v4235
        %4773 = vmatpush1.bf16.msra.mxu0 %v4234
        %4774 = vmatprep.subr.bf16.mxu0 %v4238
        %4775 = vmatpush1.bf16.msra.mxu0 %v4237
        %4776 = vmatprep.subr.bf16.mxu0 %v4241
        %4777 = vmatpush1.bf16.msra.mxu0 %v4240
        %4778 = vmatprep.mubr.bf16.mxu0 %v2593
        %4779 = vmatmul.mubr.bf16.gmra.mrb[0].mxu0 %v2592
        %v4780 = vpop.f32.mrb[0].mxu0
        %v4781 = vadd.f32 %v4738, %v4780
        %v4782 = vpop.f32.mrb[0].mxu0
        %v4783 = vadd.f32 %v4740, %v4782
        %v4784 = vpop.f32.mrb[0].mxu0
        %v4785 = vadd.f32 %v4742, %v4784
        %v4786 = vpop.f32.mrb[0].mxu0
        %v4787 = vadd.f32 %v4744, %v4786
        %4788 = vdwg.mxu0
        %4789 = vmatprep.subr.bf16.mxu0 0
        %4790 = vmatpush1.bf16.msra.mxu0 %v3957
        %4791 = vmatprep.subr.bf16.mxu0 0
        %4792 = vmatpush1.bf16.msra.mxu0 %v3960
        %4793 = vmatprep.subr.bf16.mxu0 0
        %4794 = vmatpush1.bf16.msra.mxu0 %v3963
        %4795 = vmatprep.subr.bf16.mxu0 0
        %4796 = vmatpush1.bf16.msra.mxu0 %v3966
        %4797 = vmatprep.subr.bf16.mxu0 0
        %4798 = vmatpush1.bf16.msra.mxu0 %v3969
        %4799 = vmatprep.subr.bf16.mxu0 0
        %4800 = vmatpush1.bf16.msra.mxu0 %v3972
        %4801 = vmatprep.subr.bf16.mxu0 0
        %4802 = vmatpush1.bf16.msra.mxu0 %v3975
        %4803 = vmatprep.subr.bf16.mxu0 0
        %4804 = vmatpush1.bf16.msra.mxu0 %v3978
        %4805 = vmatprep.subr.bf16.mxu0 0
        %4806 = vmatpush1.bf16.msra.mxu0 %v3981
        %4807 = vmatprep.subr.bf16.mxu0 0
        %4808 = vmatpush1.bf16.msra.mxu0 %v3984
        %4809 = vmatprep.subr.bf16.mxu0 0
        %4810 = vmatpush1.bf16.msra.mxu0 %v3987
        %4811 = vmatprep.subr.bf16.mxu0 0
        %4812 = vmatpush1.bf16.msra.mxu0 %v3990
        %4813 = vmatprep.subr.bf16.mxu0 0
        %4814 = vmatpush1.bf16.msra.mxu0 %v3993
        %4815 = vmatprep.subr.bf16.mxu0 0
        %4816 = vmatpush1.bf16.msra.mxu0 %v3996
        %4817 = vmatprep.subr.bf16.mxu0 0
        %4818 = vmatpush1.bf16.msra.mxu0 %v3999
        %4819 = vmatprep.subr.bf16.mxu0 0
        %4820 = vmatpush1.bf16.msra.mxu0 %v4002
        %4821 = vmatprep.mubr.bf16.mxu0 %v2583
        %4822 = vmatmul.mubr.bf16.gmra.mrb[0].mxu0 %v2582
        %v4823 = vpop.f32.mrb[0].mxu0
        %v4824 = vadd.f32 %v2991, %v4823
        %v4825 = vpop.f32.mrb[0].mxu0
        %v4826 = vpop.f32.mrb[0].mxu0
        %v4827 = vadd.f32 %v2991, %v4826
        %v4828 = vpop.f32.mrb[0].mxu0
        %4829 = vdwg.mxu0
        %4830 = vmatprep.subr.bf16.mxu0 0
        %4831 = vmatpush1.bf16.msra.mxu0 %v4005
        %4832 = vmatprep.subr.bf16.mxu0 0
        %4833 = vmatpush1.bf16.msra.mxu0 %v4008
        %4834 = vmatprep.subr.bf16.mxu0 0
        %4835 = vmatpush1.bf16.msra.mxu0 %v4011
        %4836 = vmatprep.subr.bf16.mxu0 0
        %4837 = vmatpush1.bf16.msra.mxu0 %v4014
        %4838 = vmatprep.subr.bf16.mxu0 0
        %4839 = vmatpush1.bf16.msra.mxu0 %v4017
        %4840 = vmatprep.subr.bf16.mxu0 0
        %4841 = vmatpush1.bf16.msra.mxu0 %v4020
        %4842 = vmatprep.subr.bf16.mxu0 0
        %4843 = vmatpush1.bf16.msra.mxu0 %v4023
        %4844 = vmatprep.subr.bf16.mxu0 0
        %4845 = vmatpush1.bf16.msra.mxu0 %v4026
        %4846 = vmatprep.subr.bf16.mxu0 0
        %4847 = vmatpush1.bf16.msra.mxu0 %v4029
        %4848 = vmatprep.subr.bf16.mxu0 0
        %4849 = vmatpush1.bf16.msra.mxu0 %v4032
        %4850 = vmatprep.subr.bf16.mxu0 0
        %4851 = vmatpush1.bf16.msra.mxu0 %v4035
        %4852 = vmatprep.subr.bf16.mxu0 0
        %4853 = vmatpush1.bf16.msra.mxu0 %v4038
        %4854 = vmatprep.subr.bf16.mxu0 0
        %4855 = vmatpush1.bf16.msra.mxu0 %v4041
        %4856 = vmatprep.subr.bf16.mxu0 0
        %4857 = vmatpush1.bf16.msra.mxu0 %v4044
        %4858 = vmatprep.subr.bf16.mxu0 0
        %4859 = vmatpush1.bf16.msra.mxu0 %v4047
        %4860 = vmatprep.subr.bf16.mxu0 0
        %4861 = vmatpush1.bf16.msra.mxu0 %v4050
        %4862 = vmatprep.mubr.bf16.mxu0 %v2585
        %4863 = vmatmul.mubr.bf16.gmra.mrb[0].mxu0 %v2584
        %v4864 = vpop.f32.mrb[0].mxu0
        %v4865 = vadd.f32 %v4824, %v4864
        %v4866 = vpop.f32.mrb[0].mxu0
        %v4867 = vpop.f32.mrb[0].mxu0
        %v4868 = vadd.f32 %v4827, %v4867
        %v4869 = vpop.f32.mrb[0].mxu0
        %4870 = vdwg.mxu0
        %4871 = vmatprep.subr.bf16.mxu0 0
        %4872 = vmatpush1.bf16.msra.mxu0 %v4053
        %4873 = vmatprep.subr.bf16.mxu0 0
        %4874 = vmatpush1.bf16.msra.mxu0 %v4056
        %4875 = vmatprep.subr.bf16.mxu0 0
        %4876 = vmatpush1.bf16.msra.mxu0 %v4059
        %4877 = vmatprep.subr.bf16.mxu0 0
        %4878 = vmatpush1.bf16.msra.mxu0 %v4062
        %4879 = vmatprep.subr.bf16.mxu0 0
        %4880 = vmatpush1.bf16.msra.mxu0 %v4065
        %4881 = vmatprep.subr.bf16.mxu0 0
        %4882 = vmatpush1.bf16.msra.mxu0 %v4068
        %4883 = vmatprep.subr.bf16.mxu0 0
        %4884 = vmatpush1.bf16.msra.mxu0 %v4071
        %4885 = vmatprep.subr.bf16.mxu0 0
        %4886 = vmatpush1.bf16.msra.mxu0 %v4074
        %4887 = vmatprep.subr.bf16.mxu0 0
        %4888 = vmatpush1.bf16.msra.mxu0 %v4077
        %4889 = vmatprep.subr.bf16.mxu0 0
        %4890 = vmatpush1.bf16.msra.mxu0 %v4080
        %4891 = vmatprep.subr.bf16.mxu0 0
        %4892 = vmatpush1.bf16.msra.mxu0 %v4083
        %4893 = vmatprep.subr.bf16.mxu0 0
        %4894 = vmatpush1.bf16.msra.mxu0 %v4086
        %4895 = vmatprep.subr.bf16.mxu0 0
        %4896 = vmatpush1.bf16.msra.mxu0 %v4089
        %4897 = vmatprep.subr.bf16.mxu0 0
        %4898 = vmatpush1.bf16.msra.mxu0 %v4092
        %4899 = vmatprep.subr.bf16.mxu0 0
        %4900 = vmatpush1.bf16.msra.mxu0 %v4095
        %4901 = vmatprep.subr.bf16.mxu0 0
        %4902 = vmatpush1.bf16.msra.mxu0 %v4098
        %4903 = vmatprep.mubr.bf16.mxu0 %v2587
        %4904 = vmatmul.mubr.bf16.gmra.mrb[0].mxu0 %v2586
        %v4905 = vpop.f32.mrb[0].mxu0
        %v4906 = vadd.f32 %v4865, %v4905
        %v4907 = vpop.f32.mrb[0].mxu0
        %v4908 = vpop.f32.mrb[0].mxu0
        %v4909 = vadd.f32 %v4868, %v4908
        %v4910 = vpop.f32.mrb[0].mxu0
        %4911 = vdwg.mxu0
        %4912 = vmatprep.subr.bf16.mxu0 0
        %4913 = vmatpush1.bf16.msra.mxu0 %v4101
        %4914 = vmatprep.subr.bf16.mxu0 0
        %4915 = vmatpush1.bf16.msra.mxu0 %v4104
        %4916 = vmatprep.subr.bf16.mxu0 0
        %4917 = vmatpush1.bf16.msra.mxu0 %v4107
        %4918 = vmatprep.subr.bf16.mxu0 0
        %4919 = vmatpush1.bf16.msra.mxu0 %v4110
        %4920 = vmatprep.subr.bf16.mxu0 0
        %4921 = vmatpush1.bf16.msra.mxu0 %v4113
        %4922 = vmatprep.subr.bf16.mxu0 0
        %4923 = vmatpush1.bf16.msra.mxu0 %v4116
        %4924 = vmatprep.subr.bf16.mxu0 0
        %4925 = vmatpush1.bf16.msra.mxu0 %v4119
        %4926 = vmatprep.subr.bf16.mxu0 0
        %4927 = vmatpush1.bf16.msra.mxu0 %v4122
        %4928 = vmatprep.subr.bf16.mxu0 0
        %4929 = vmatpush1.bf16.msra.mxu0 %v4125
        %4930 = vmatprep.subr.bf16.mxu0 0
        %4931 = vmatpush1.bf16.msra.mxu0 %v4128
        %4932 = vmatprep.subr.bf16.mxu0 0
        %4933 = vmatpush1.bf16.msra.mxu0 %v4131
        %4934 = vmatprep.subr.bf16.mxu0 0
        %4935 = vmatpush1.bf16.msra.mxu0 %v4134
        %4936 = vmatprep.subr.bf16.mxu0 0
        %4937 = vmatpush1.bf16.msra.mxu0 %v4137
        %4938 = vmatprep.subr.bf16.mxu0 0
        %4939 = vmatpush1.bf16.msra.mxu0 %v4140
        %4940 = vmatprep.subr.bf16.mxu0 0
        %4941 = vmatpush1.bf16.msra.mxu0 %v4143
        %4942 = vmatprep.subr.bf16.mxu0 0
        %4943 = vmatpush1.bf16.msra.mxu0 %v4146
        %4944 = vmatprep.mubr.bf16.mxu0 %v2589
        %4945 = vmatmul.mubr.bf16.gmra.mrb[0].mxu0 %v2588
        %v4946 = vpop.f32.mrb[0].mxu0
        %v4947 = vadd.f32 %v4906, %v4946
        %v4948 = vpop.f32.mrb[0].mxu0
        %v4949 = vpop.f32.mrb[0].mxu0
        %v4950 = vadd.f32 %v4909, %v4949
        %v4951 = vpop.f32.mrb[0].mxu0
        %4952 = vdwg.mxu0
        %4953 = vmatprep.subr.bf16.mxu0 0
        %4954 = vmatpush1.bf16.msra.mxu0 %v4149
        %4955 = vmatprep.subr.bf16.mxu0 0
        %4956 = vmatpush1.bf16.msra.mxu0 %v4152
        %4957 = vmatprep.subr.bf16.mxu0 0
        %4958 = vmatpush1.bf16.msra.mxu0 %v4155
        %4959 = vmatprep.subr.bf16.mxu0 0
        %4960 = vmatpush1.bf16.msra.mxu0 %v4158
        %4961 = vmatprep.subr.bf16.mxu0 0
        %4962 = vmatpush1.bf16.msra.mxu0 %v4161
        %4963 = vmatprep.subr.bf16.mxu0 0
        %4964 = vmatpush1.bf16.msra.mxu0 %v4164
        %4965 = vmatprep.subr.bf16.mxu0 0
        %4966 = vmatpush1.bf16.msra.mxu0 %v4167
        %4967 = vmatprep.subr.bf16.mxu0 0
        %4968 = vmatpush1.bf16.msra.mxu0 %v4170
        %4969 = vmatprep.subr.bf16.mxu0 0
        %4970 = vmatpush1.bf16.msra.mxu0 %v4173
        %4971 = vmatprep.subr.bf16.mxu0 0
        %4972 = vmatpush1.bf16.msra.mxu0 %v4176
        %4973 = vmatprep.subr.bf16.mxu0 0
        %4974 = vmatpush1.bf16.msra.mxu0 %v4179
        %4975 = vmatprep.subr.bf16.mxu0 0
        %4976 = vmatpush1.bf16.msra.mxu0 %v4182
        %4977 = vmatprep.subr.bf16.mxu0 0
        %4978 = vmatpush1.bf16.msra.mxu0 %v4185
        %4979 = vmatprep.subr.bf16.mxu0 0
        %4980 = vmatpush1.bf16.msra.mxu0 %v4188
        %4981 = vmatprep.subr.bf16.mxu0 0
        %4982 = vmatpush1.bf16.msra.mxu0 %v4191
        %4983 = vmatprep.subr.bf16.mxu0 0
        %4984 = vmatpush1.bf16.msra.mxu0 %v4194
        %4985 = vmatprep.mubr.bf16.mxu0 %v2591
        %4986 = vmatmul.mubr.bf16.gmra.mrb[0].mxu0 %v2590
        %v4987 = vpop.f32.mrb[0].mxu0
        %v4988 = vadd.f32 %v4947, %v4987
        %v4989 = vpop.f32.mrb[0].mxu0
        %v4990 = vpop.f32.mrb[0].mxu0
        %v4991 = vadd.f32 %v4950, %v4990
        %v4992 = vpop.f32.mrb[0].mxu0
        %4993 = vdwg.mxu0
        %4994 = vmatprep.subr.bf16.mxu0 0
        %4995 = vmatpush1.bf16.msra.mxu0 %v4197
        %4996 = vmatprep.subr.bf16.mxu0 0
        %4997 = vmatpush1.bf16.msra.mxu0 %v4200
        %4998 = vmatprep.subr.bf16.mxu0 0
        %4999 = vmatpush1.bf16.msra.mxu0 %v4203
        %5000 = vmatprep.subr.bf16.mxu0 0
        %5001 = vmatpush1.bf16.msra.mxu0 %v4206
        %5002 = vmatprep.subr.bf16.mxu0 0
        %5003 = vmatpush1.bf16.msra.mxu0 %v4209
        %5004 = vmatprep.subr.bf16.mxu0 0
        %5005 = vmatpush1.bf16.msra.mxu0 %v4212
        %5006 = vmatprep.subr.bf16.mxu0 0
        %5007 = vmatpush1.bf16.msra.mxu0 %v4215
        %5008 = vmatprep.subr.bf16.mxu0 0
        %5009 = vmatpush1.bf16.msra.mxu0 %v4218
        %5010 = vmatprep.subr.bf16.mxu0 0
        %5011 = vmatpush1.bf16.msra.mxu0 %v4221
        %5012 = vmatprep.subr.bf16.mxu0 0
        %5013 = vmatpush1.bf16.msra.mxu0 %v4224
        %5014 = vmatprep.subr.bf16.mxu0 0
        %5015 = vmatpush1.bf16.msra.mxu0 %v4227
        %5016 = vmatprep.subr.bf16.mxu0 0
        %5017 = vmatpush1.bf16.msra.mxu0 %v4230
        %5018 = vmatprep.subr.bf16.mxu0 0
        %5019 = vmatpush1.bf16.msra.mxu0 %v4233
        %5020 = vmatprep.subr.bf16.mxu0 0
        %5021 = vmatpush1.bf16.msra.mxu0 %v4236
        %5022 = vmatprep.subr.bf16.mxu0 0
        %5023 = vmatpush1.bf16.msra.mxu0 %v4239
        %5024 = vmatprep.subr.bf16.mxu0 0
        %5025 = vmatpush1.bf16.msra.mxu0 %v4242
        %5026 = vmatprep.mubr.bf16.mxu0 %v2593
        %5027 = vmatmul.mubr.bf16.gmra.mrb[0].mxu0 %v2592
        %v5028 = vpop.f32.mrb[0].mxu0
        %v5029 = vadd.f32 %v4988, %v5028
        %v5030 = vpop.f32.mrb[0].mxu0
        %v5031 = vpop.f32.mrb[0].mxu0
        %v5032 = vadd.f32 %v4991, %v5031
        %v5033 = vpop.f32.mrb[0].mxu0
        %5034 = vdwg.mxu0
        %5035 = vst [vmem:[%s220] sm:$0xff] %v4781
        %5036 = vst [vmem:[%s220 + $0x8] sm:$0xff] %v4783
        %5037 = vst [vmem:[%s220 + $0x10] sm:$0xff] %v5029
        %5038 = vst [vmem:[%s220 + $0x18] sm:$0xff] %v4785
        %5039 = vst [vmem:[%s220 + $0x20] sm:$0xff] %v4787
        %5040 = vst [vmem:[%s220 + $0x28] sm:$0xff] %v5032
        %s5041 = sand.u32 %s137, 1
        %s5042 = scalar_lea.sflag [#allocation3], %s5041
        %s5043 = sand.u32 %s137, 1
        %s5044 = smul.addr %s5043, 48
        %s5045 = scalar_lea.vmem [#allocation2], %s5044
        // Predicated region
        $region41: #{feed_forward.1} parent=39 // pred_check
          %p5046 = pneg %p147
        $region42: #{feed_forward.1} parent=39 // pred_check_branch
          %5048 = sbr.rel (%p5046) target = $region44
        $region43: #{feed_forward.1} parent=39 // pred_region
          %s5049 = smul.u32 2, %s19
          %s5051 = ssub.s32 768, 768
          %5052 = vsyncadd %s5042, %s5051
          %s5053 = smul.addr %s5049, 3
          %s5054 = smul.addr %s5053, 128
          %s5055 = scalar_lea.hbm %s5, %s5054
          %s5056 = sshll.u32 %s5045, 4
          %s5057 = int_to_ptr.vmem [resolvable:$true] %s5056
          %5062 = dma.vmem_to_hbm [thread:$0]  %s5057, 768, %s5055, %s5042, 384, 384, 24
        $region44: #{feed_forward.1} parent=39 // pred_fallthru
          _
      $region40: #{feed_forward.1} parent=5 // pred_fallthru
        _
      %p5063 = scmp.le.s32.totalorder 2, %s14
      // Predicated region
      $region45: #{feed_forward.1} parent=5 // pred_check
        %p5064 = pneg %p5063
      $region46: #{feed_forward.1} parent=5 // pred_check_branch
        %5066 = sbr.rel (%p5064) target = $region48
      $region47: #{feed_forward.1} parent=5 // pred_region
        %s5067 = ssub.s32 %s14, 2
        // Predicated region
        $region49: #{feed_forward.1} parent=47 // pred_check
          %p5068 = pneg %p153
        $region50: #{feed_forward.1} parent=47 // pred_check_branch
          %5070 = sbr.rel (%p5068) target = $region52
        $region51: #{feed_forward.1} parent=47 // pred_region
          %s5071 = sand.u32 %s138, 1
          %s5072 = scalar_lea.sflag [#allocation3], %s5071
          %s5073 = sand.u32 %s138, 1
          %s5074 = smul.addr %s5073, 48
          %s5075 = scalar_lea.vmem [#allocation2], %s5074
          %5076 = dma.done %s5072, 768
        $region52: #{feed_forward.1} parent=47 // pred_fallthru
          _
      $region48: #{feed_forward.1} parent=5 // pred_fallthru
        _
    $region6: #{feed_forward.1} parent=1 // loop_footer
      %s18 = sadd.s32 1, %s14
    $region7: #{feed_forward.1} parent=1 // loop_footer_branch
      %13 = sbr.rel target = $region3
    $region8: #{feed_forward.1} parent=1 // loop_exit
      _
    %5077 = vsyncpa [#allocation3], 1
    %s5078 = scalar_lea.sflag [#allocation3], 1
    %5079 = vsyncpa %s5078, 1

</llo_original>
